<compile_context>
chip_gen: v5e
topology: v5e:2x2
jax: 0.10.0
libtpu: 0.0.40
codegen_flags: <defaults>
</compile_context>

<pallas_src>
import functools
import math

import jax
import jax.numpy as jnp
from jax.experimental import pallas as pl
from jax.experimental.pallas import tpu as pltpu

BN_EPS = 1e-5


# ----------------------------------------------------------------------------
# Pallas kernel: KxK conv (k*k shifted taps) + folded-BN bias
#                (+ optional fused residual add) (+ optional ReLU)
# ----------------------------------------------------------------------------
def _conv_bn_act_kernel(x_ref, w_ref, b_ref, *rest, taps, rows, relu, has_res):
    # x_ref: (s*s, PH*PW, Cin) bf16  space-to-phase input, one batch image
    # w_ref: (k*k, Cin, TN)    bf16  BN-scale-folded weights, one Cout tile
    # b_ref: (1, TN)           f32   folded BN bias
    # r_ref: (rows, TN)        bf16  optional residual (PW-padded, flattened)
    # o_ref: (rows, TN)        bf16
    if has_res:
        r_ref, o_ref = rest
    else:
        (o_ref,) = rest

    acc = None
    for t, (phase, off) in enumerate(taps):
        xs = x_ref[phase, pl.ds(off, rows), :]            # (rows, Cin) contiguous
        part = jnp.dot(xs, w_ref[t], preferred_element_type=jnp.float32)
        acc = part if acc is None else acc + part

    y = acc + b_ref[...]                                   # f32 epilogue
    if has_res:
        y = y + r_ref[...].astype(jnp.float32)
    if relu:
        y = jnp.maximum(y, 0.0)
    o_ref[...] = y.astype(o_ref.dtype)


# ----------------------------------------------------------------------------
# Wrapper: ConvNormLayer (+ optional fused residual / ReLU)
# ----------------------------------------------------------------------------
def conv_bn_act(x, w, b, *, k, stride, pad, relu, residual=None):
    """x: (N,H,W,Cin) bf16; w: (k*k,Cin,Cout) bf16 (BN folded); b: (1,Cout) f32."""
    N, H, W, Cin = x.shape
    Cout = w.shape[-1]
    s = stride
    OH = (H + 2 * pad - k) // s + 1
    OW = (W + 2 * pad - k) // s + 1

    # Per-phase plane size: +1 spare row so flat tap shifts never run off the end.
    PH = -(-(H + 2 * pad) // s) + 1
    PW = -(-(W + 2 * pad) // s)
    L = PH * PW
    rows = OH * PW                      # flat output rows (cols >= OW are sliced off)

    # conv zero-padding + round up so every stride-phase has exactly (PH, PW) elems
    xp = jnp.pad(x, ((0, 0),
                     (pad, s * PH - H - pad),
                     (pad, s * PW - W - pad),
                     (0, 0)))
    xp = xp.reshape(N, PH, s, PW, s, Cin)
    if s > 1:
        xp = jnp.transpose(xp, (0, 2, 4, 1, 3, 5))        # (N, s, s, PH, PW, Cin)
    xp = xp.reshape(N, s * s, L, Cin)

    # tap -> (phase index, flat offset inside the phase plane); order matches w.
    taps = tuple(((i % s) * s + (j % s), (i // s) * PW + (j // s))
                 for i in range(k) for j in range(k))

    TN = 128 if (Cout > 128 and Cout % 128 == 0) else Cout
    grid = (N, Cout // TN)

    in_specs = [
        pl.BlockSpec((None, s * s, L, Cin), lambda n, c: (n, 0, 0, 0)),
        pl.BlockSpec((k * k, Cin, TN), lambda n, c: (0, 0, c)),
        pl.BlockSpec((1, TN), lambda n, c: (0, c)),
    ]
    args = [xp, w, b]
    if residual is not None:
        # pad width OW -> PW so residual rows align with the flat conv output
        rp = jnp.pad(residual, ((0, 0), (0, 0), (0, PW - OW), (0, 0)))
        rp = rp.reshape(N, rows, Cout)
        in_specs.append(pl.BlockSpec((None, rows, TN), lambda n, c: (n, 0, c)))
        args.append(rp)

    kernel = functools.partial(_conv_bn_act_kernel, taps=taps, rows=rows,
                               relu=relu, has_res=residual is not None)

    flops = 2 * N * rows * k * k * Cin * Cout
    bytes_accessed = (xp.size * 2 + w.size * 2 + b.size * 4
                      + N * rows * Cout * 2 * (2 if residual is not None else 1))

    out = pl.pallas_call(
        kernel,
        out_shape=jax.ShapeDtypeStruct((N, rows, Cout), jnp.bfloat16),
        grid=grid,
        in_specs=in_specs,
        out_specs=pl.BlockSpec((None, rows, TN), lambda n, c: (n, 0, c)),
        compiler_params=pltpu.CompilerParams(
            dimension_semantics=("parallel", "parallel")),
        cost_estimate=pl.CostEstimate(flops=flops, transcendentals=0,
                                      bytes_accessed=bytes_accessed),
    )(*args)

    return out.reshape(N, OH, PW, Cout)[:, :, :OW, :]


# ----------------------------------------------------------------------------
# BasicBlock forward (Pallas path)
# ----------------------------------------------------------------------------
def basic_block_forward(prep, x, *, stride, shortcut, variant="b"):
    out = conv_bn_act(x, prep["branch2a"]["w"], prep["branch2a"]["b"],
                      k=3, stride=stride, pad=1, relu=True)
    if shortcut:
        short = x
    elif variant == "d" and stride == 2:
        # AvgPool2d(2,2,ceil) + 1x1 ConvNorm fused as one 2x2/stride-2 conv.
        short = conv_bn_act(x, prep["short"]["w"], prep["short"]["b"],
                            k=2, stride=2, pad=0, relu=False)
    else:
        short = conv_bn_act(x, prep["short"]["w"], prep["short"]["b"],
                            k=1, stride=stride, pad=0, relu=False)
    # branch2b (no act) + residual add + final ReLU fused in one kernel.
    return conv_bn_act(out, prep["branch2b"]["w"], prep["branch2b"]["b"],
                       k=3, stride=1, pad=1, relu=True, residual=short)


# ----------------------------------------------------------------------------
# Parameters: raw (PyTorch-equivalent) + folded/bf16 prepared form
# ----------------------------------------------------------------------------
def init_conv_norm_raw(key, cin, cout, k):
    k1, k2, k3, k4, k5 = jax.random.split(key, 5)
    w = jax.random.normal(k1, (k, k, cin, cout), jnp.float32) / math.sqrt(k * k * cin)
    return {
        "k": k,
        "w": w,  # HWIO
        "gamma": 1.0 + 0.1 * jax.random.normal(k2, (cout,), jnp.float32),
        "beta": 0.1 * jax.random.normal(k3, (cout,), jnp.float32),
        "mean": 0.1 * jax.random.normal(k4, (cout,), jnp.float32),
        "var": jax.random.uniform(k5, (cout,), jnp.float32, minval=0.5, maxval=1.5),
    }


def fold_conv_norm(p):
    k = p["k"]
    cin, cout = p["w"].shape[2], p["w"].shape[3]
    scale = p["gamma"] * jax.lax.rsqrt(p["var"] + BN_EPS)
    bias = p["beta"] - p["mean"] * scale
    w = (p["w"] * scale).reshape(k * k, cin, cout).astype(jnp.bfloat16)
    return {"w": w, "b": bias.reshape(1, cout).astype(jnp.float32)}


def fold_pool_conv_norm(p):
    """AvgPool2d(2,2,ceil) + 1x1 ConvNorm == one 2x2/stride-2 conv with w/4."""
    assert p["k"] == 1
    cin, cout = p["w"].shape[2], p["w"].shape[3]
    scale = p["gamma"] * jax.lax.rsqrt(p["var"] + BN_EPS)
    bias = p["beta"] - p["mean"] * scale
    w11 = (p["w"] * scale).reshape(1, cin, cout) * 0.25
    w = jnp.tile(w11, (4, 1, 1)).astype(jnp.bfloat16)
    return {"w": w, "b": bias.reshape(1, cout).astype(jnp.float32)}


def init_basic_block_raw(key, cin, cout, *, shortcut):
    keys = jax.random.split(key, 3)
    p = {"branch2a": init_conv_norm_raw(keys[0], cin, cout, 3),
         "branch2b": init_conv_norm_raw(keys[1], cout, cout, 3)}
    if not shortcut:
        p["short"] = init_conv_norm_raw(keys[2], cin, cout, 1)
    return p


def prepare_basic_block(raw, *, stride, shortcut, variant):
    p = {"branch2a": fold_conv_norm(raw["branch2a"]),
         "branch2b": fold_conv_norm(raw["branch2b"])}
    if not shortcut:
        if variant == "d" and stride == 2:
            p["short"] = fold_pool_conv_norm(raw["short"])
        else:
            p["short"] = fold_conv_norm(raw["short"])
    return p


# ----------------------------------------------------------------------------
# Plain-JAX f32 reference (matches the PyTorch module semantics)
# ----------------------------------------------------------------------------
def conv_norm_ref(p, x, stride, relu):
    pad = (p["k"] - 1) // 2
    y = jax.lax.conv_general_dilated(
        x, p["w"], window_strides=(stride, stride),
        padding=[(pad, pad), (pad, pad)],
        dimension_numbers=("NHWC", "HWIO", "NHWC"))
    scale = p["gamma"] / jnp.sqrt(p["var"] + BN_EPS)
    y = y * scale + (p["beta"] - p["mean"] * scale)
    return jnp.maximum(y, 0.0) if relu else y


def avgpool2x2_ref(x):
    N, H, W, C = x.shape
    return x.reshape(N, H // 2, 2, W // 2, 2, C).mean(axis=(2, 4))


def basic_block_ref(raw, x, *, stride, shortcut, variant="b"):
    out = conv_norm_ref(raw["branch2a"], x, stride, relu=True)
    out = conv_norm_ref(raw["branch2b"], out, 1, relu=False)
    if shortcut:
        short = x
    elif variant == "d" and stride == 2:
        short = conv_norm_ref(raw["short"], avgpool2x2_ref(x), 1, relu=False)
    else:
        short = conv_norm_ref(raw["short"], x, stride, relu=False)
    return jnp.maximum(out + short, 0.0)


# ----------------------------------------------------------------------------
if __name__ == "__main__":
    root = jax.random.PRNGKey(0)
    kx, kb1, kb2, kb3 = jax.random.split(root, 4)

    N, CIN, H, W = 2, 32, 16, 16
    COUT = 64
    x_nchw = jax.random.normal(kx, (N, CIN, H, W), jnp.float32)
    x_nhwc = jnp.transpose(x_nchw, (0, 2, 3, 1))

    cfg1 = dict(stride=2, shortcut=False, variant="d")  # pool+1x1 projection shortcut
    cfg2 = dict(stride=1, shortcut=True, variant="d")   # identity shortcut
    cfg3 = dict(stride=2, shortcut=False, variant="b")  # strided 1x1 projection shortcut

    raw1 = init_basic_block_raw(kb1, CIN, COUT, shortcut=False)
    raw2 = init_basic_block_raw(kb2, COUT, COUT, shortcut=True)
    raw3 = init_basic_block_raw(kb3, CIN, COUT, shortcut=False)

    p1 = prepare_basic_block(raw1, **cfg1)
    p2 = prepare_basic_block(raw2, **cfg2)
    p3 = prepare_basic_block(raw3, **cfg3)

    @jax.jit
    def forward(x_in_nchw):
        xb = jnp.transpose(x_in_nchw, (0, 2, 3, 1)).astype(jnp.bfloat16)
        y1 = basic_block_forward(p1, xb, **cfg1)
        y2 = basic_block_forward(p2, y1, **cfg2)   # chained, identity shortcut
        y3 = basic_block_forward(p3, xb, **cfg3)
        return tuple(jnp.transpose(y.astype(jnp.float32), (0, 3, 1, 2))
                     for y in (y1, y2, y3))

    outs = jax.block_until_ready(forward(x_nchw))

    # f32 reference
    r1 = basic_block_ref(raw1, x_nhwc, **cfg1)
    r2 = basic_block_ref(raw2, r1, **cfg2)
    r3 = basic_block_ref(raw3, x_nhwc, **cfg3)
    refs = [jnp.transpose(r, (0, 3, 1, 2)) for r in (r1, r2, r3)]

    for o, r in zip(outs, refs):
        assert tuple(o.shape) == (N, COUT, 8, 8), tuple(o.shape)
        assert bool(jnp.all(jnp.isfinite(o)))
        assert bool(jnp.allclose(o, r, atol=1e-1, rtol=1e-1)), \
            float(jnp.max(jnp.abs(o - r)))

    print("KERNEL_OK")
</pallas_src>

<mosaic_0001>
module attributes {stable_mosaic.version = 11 : i64} {
  func.func @_conv_bn_act_kernel(%arg0: i32, %arg1: i32, %arg2: memref<1x4x72x32xbf16, #tpu.memory_space<vmem>>, %arg3: memref<4x32x64xbf16, #tpu.memory_space<vmem>>, %arg4: memref<1x64xf32, #tpu.memory_space<vmem>>, %arg5: memref<1x64x64xbf16, #tpu.memory_space<vmem>>) attributes {dimension_semantics = [#tpu.dimension_semantics<parallel>, #tpu.dimension_semantics<parallel>], iteration_bounds = array<i64: 2, 1>, scalar_prefetch = 0 : i64, scratch_operands = 0 : i64, tpu.core_type = #tpu.core_type<tc>, window_params = [{transform_indices = @transform_0, window_bounds = array<i64: 1, 4, 72, 32>}, {transform_indices = @transform_1, window_bounds = array<i64: 4, 32, 64>}, {transform_indices = @transform_2, window_bounds = array<i64: 1, 64>}, {transform_indices = @transform_3, window_bounds = array<i64: 1, 64, 64>}]} {
    %c0 = arith.constant 0 : index
    %c0_0 = arith.constant 0 : index
    %c0_1 = arith.constant 0 : index
    %c0_2 = arith.constant 0 : index
    %0 = vector.load %arg2[%c0, %c0_0, %c0_1, %c0_2] : memref<1x4x72x32xbf16, #tpu.memory_space<vmem>>, vector<1x1x64x32xbf16>
    %1 = vector.shape_cast %0 : vector<1x1x64x32xbf16> to vector<64x32xbf16>
    %c0_3 = arith.constant 0 : index
    %c0_4 = arith.constant 0 : index
    %c0_5 = arith.constant 0 : index
    %2 = vector.load %arg3[%c0_3, %c0_4, %c0_5] : memref<4x32x64xbf16, #tpu.memory_space<vmem>>, vector<1x32x64xbf16>
    %3 = vector.shape_cast %2 : vector<1x32x64xbf16> to vector<32x64xbf16>
    %cst = arith.constant dense<0.000000e+00> : vector<64x64xf32>
    %4 = tpu.matmul %1, %3, %cst {dimension_numbers = #tpu.dot_dimension_numbers<[1], [0], [0], [1], [0, 0, 1, 1], [], []>} : vector<64x32xbf16>, vector<32x64xbf16>, vector<64x64xf32> -> vector<64x64xf32>
    %c0_6 = arith.constant 0 : index
    %c1 = arith.constant 1 : index
    %c0_7 = arith.constant 0 : index
    %c0_8 = arith.constant 0 : index
    %5 = vector.load %arg2[%c0_6, %c1, %c0_7, %c0_8] : memref<1x4x72x32xbf16, #tpu.memory_space<vmem>>, vector<1x1x64x32xbf16>
    %6 = vector.shape_cast %5 : vector<1x1x64x32xbf16> to vector<64x32xbf16>
    %c1_9 = arith.constant 1 : index
    %c0_10 = arith.constant 0 : index
    %c0_11 = arith.constant 0 : index
    %7 = vector.load %arg3[%c1_9, %c0_10, %c0_11] : memref<4x32x64xbf16, #tpu.memory_space<vmem>>, vector<1x32x64xbf16>
    %8 = vector.shape_cast %7 : vector<1x32x64xbf16> to vector<32x64xbf16>
    %cst_12 = arith.constant dense<0.000000e+00> : vector<64x64xf32>
    %9 = tpu.matmul %6, %8, %cst_12 {dimension_numbers = #tpu.dot_dimension_numbers<[1], [0], [0], [1], [0, 0, 1, 1], [], []>} : vector<64x32xbf16>, vector<32x64xbf16>, vector<64x64xf32> -> vector<64x64xf32>
    %10 = arith.addf %4, %9 : vector<64x64xf32>
    %c0_13 = arith.constant 0 : index
    %c2 = arith.constant 2 : index
    %c0_14 = arith.constant 0 : index
    %c0_15 = arith.constant 0 : index
    %11 = vector.load %arg2[%c0_13, %c2, %c0_14, %c0_15] : memref<1x4x72x32xbf16, #tpu.memory_space<vmem>>, vector<1x1x64x32xbf16>
    %12 = vector.shape_cast %11 : vector<1x1x64x32xbf16> to vector<64x32xbf16>
    %c2_16 = arith.constant 2 : index
    %c0_17 = arith.constant 0 : index
    %c0_18 = arith.constant 0 : index
    %13 = vector.load %arg3[%c2_16, %c0_17, %c0_18] : memref<4x32x64xbf16, #tpu.memory_space<vmem>>, vector<1x32x64xbf16>
    %14 = vector.shape_cast %13 : vector<1x32x64xbf16> to vector<32x64xbf16>
    %cst_19 = arith.constant dense<0.000000e+00> : vector<64x64xf32>
    %15 = tpu.matmul %12, %14, %cst_19 {dimension_numbers = #tpu.dot_dimension_numbers<[1], [0], [0], [1], [0, 0, 1, 1], [], []>} : vector<64x32xbf16>, vector<32x64xbf16>, vector<64x64xf32> -> vector<64x64xf32>
    %16 = arith.addf %10, %15 : vector<64x64xf32>
    %c0_20 = arith.constant 0 : index
    %c3 = arith.constant 3 : index
    %c0_21 = arith.constant 0 : index
    %c0_22 = arith.constant 0 : index
    %17 = vector.load %arg2[%c0_20, %c3, %c0_21, %c0_22] : memref<1x4x72x32xbf16, #tpu.memory_space<vmem>>, vector<1x1x64x32xbf16>
    %18 = vector.shape_cast %17 : vector<1x1x64x32xbf16> to vector<64x32xbf16>
    %c3_23 = arith.constant 3 : index
    %c0_24 = arith.constant 0 : index
    %c0_25 = arith.constant 0 : index
    %19 = vector.load %arg3[%c3_23, %c0_24, %c0_25] : memref<4x32x64xbf16, #tpu.memory_space<vmem>>, vector<1x32x64xbf16>
    %20 = vector.shape_cast %19 : vector<1x32x64xbf16> to vector<32x64xbf16>
    %cst_26 = arith.constant dense<0.000000e+00> : vector<64x64xf32>
    %21 = tpu.matmul %18, %20, %cst_26 {dimension_numbers = #tpu.dot_dimension_numbers<[1], [0], [0], [1], [0, 0, 1, 1], [], []>} : vector<64x32xbf16>, vector<32x64xbf16>, vector<64x64xf32> -> vector<64x64xf32>
    %22 = arith.addf %16, %21 : vector<64x64xf32>
    %c0_27 = arith.constant 0 : index
    %c0_28 = arith.constant 0 : index
    %23 = vector.load %arg4[%c0_27, %c0_28] : memref<1x64xf32, #tpu.memory_space<vmem>>, vector<1x64xf32>
    %24 = vector.broadcast %23 : vector<1x64xf32> to vector<64x64xf32>
    %25 = arith.addf %22, %24 : vector<64x64xf32>
    %26 = arith.truncf %25 : vector<64x64xf32> to vector<64x64xbf16>
    %c0_29 = arith.constant 0 : index
    %c0_30 = arith.constant 0 : index
    %c0_31 = arith.constant 0 : index
    %27 = vector.load %arg5[%c0_29, %c0_30, %c0_31] : memref<1x64x64xbf16, #tpu.memory_space<vmem>>, vector<1x64x64xbf16>
    %28 = vector.shape_cast %27 : vector<1x64x64xbf16> to vector<64x64xbf16>
    %29 = vector.shape_cast %26 : vector<64x64xbf16> to vector<1x64x64xbf16>
    tpu.vector_store %arg5[%c0_29, %c0_30, %c0_31], %29 {strides = array<i32>} : memref<1x64x64xbf16, #tpu.memory_space<vmem>>, vector<1x64x64xbf16>,
    return
  }
  func.func @transform_0(%arg0: i32, %arg1: i32) -> (i32, i32, i32, i32) {
    %c0_i32 = arith.constant 0 : i32
    %c0_i32_0 = arith.constant 0 : i32
    %c0_i32_1 = arith.constant 0 : i32
    %c0_i32_2 = arith.constant 0 : i32
    return %arg0, %c0_i32, %c0_i32_0, %c0_i32_1 : i32, i32, i32, i32
  }
  func.func @transform_1(%arg0: i32, %arg1: i32) -> (i32, i32, i32) {
    %c0_i32 = arith.constant 0 : i32
    %c0_i32_0 = arith.constant 0 : i32
    %c0_i32_1 = arith.constant 0 : i32
    return %c0_i32, %c0_i32_0, %arg1 : i32, i32, i32
  }
  func.func @transform_2(%arg0: i32, %arg1: i32) -> (i32, i32) {
    %c0_i32 = arith.constant 0 : i32
    %c0_i32_0 = arith.constant 0 : i32
    return %c0_i32, %arg1 : i32, i32
  }
  func.func @transform_3(%arg0: i32, %arg1: i32) -> (i32, i32, i32) {
    %c0_i32 = arith.constant 0 : i32
    %c0_i32_0 = arith.constant 0 : i32
    return %arg0, %c0_i32, %arg1 : i32, i32, i32
  }
}

module attributes {stable_mosaic.version = 11 : i64} {
  func.func @_conv_bn_act_kernel(%arg0: i32, %arg1: i32, %arg2: memref<1x4x72x32xbf16, #tpu.memory_space<vmem>>, %arg3: memref<1x32x64xbf16, #tpu.memory_space<vmem>>, %arg4: memref<1x64xf32, #tpu.memory_space<vmem>>, %arg5: memref<1x64x64xbf16, #tpu.memory_space<vmem>>) attributes {dimension_semantics = [#tpu.dimension_semantics<parallel>, #tpu.dimension_semantics<parallel>], iteration_bounds = array<i64: 2, 1>, scalar_prefetch = 0 : i64, scratch_operands = 0 : i64, tpu.core_type = #tpu.core_type<tc>, window_params = [{transform_indices = @transform_0, window_bounds = array<i64: 1, 4, 72, 32>}, {transform_indices = @transform_1, window_bounds = array<i64: 1, 32, 64>}, {transform_indices = @transform_2, window_bounds = array<i64: 1, 64>}, {transform_indices = @transform_3, window_bounds = array<i64: 1, 64, 64>}]} {
    %c0 = arith.constant 0 : index
    %c0_0 = arith.constant 0 : index
    %c0_1 = arith.constant 0 : index
    %c0_2 = arith.constant 0 : index
    %0 = vector.load %arg2[%c0, %c0_0, %c0_1, %c0_2] : memref<1x4x72x32xbf16, #tpu.memory_space<vmem>>, vector<1x1x64x32xbf16>
    %1 = vector.shape_cast %0 : vector<1x1x64x32xbf16> to vector<64x32xbf16>
    %c0_3 = arith.constant 0 : index
    %c0_4 = arith.constant 0 : index
    %c0_5 = arith.constant 0 : index
    %2 = vector.load %arg3[%c0_3, %c0_4, %c0_5] : memref<1x32x64xbf16, #tpu.memory_space<vmem>>, vector<1x32x64xbf16>
    %3 = vector.shape_cast %2 : vector<1x32x64xbf16> to vector<32x64xbf16>
    %cst = arith.constant dense<0.000000e+00> : vector<64x64xf32>
    %4 = tpu.matmul %1, %3, %cst {dimension_numbers = #tpu.dot_dimension_numbers<[1], [0], [0], [1], [0, 0, 1, 1], [], []>} : vector<64x32xbf16>, vector<32x64xbf16>, vector<64x64xf32> -> vector<64x64xf32>
    %c0_6 = arith.constant 0 : index
    %c0_7 = arith.constant 0 : index
    %5 = vector.load %arg4[%c0_6, %c0_7] : memref<1x64xf32, #tpu.memory_space<vmem>>, vector<1x64xf32>
    %6 = vector.broadcast %5 : vector<1x64xf32> to vector<64x64xf32>
    %7 = arith.addf %4, %6 : vector<64x64xf32>
    %8 = arith.truncf %7 : vector<64x64xf32> to vector<64x64xbf16>
    %c0_8 = arith.constant 0 : index
    %c0_9 = arith.constant 0 : index
    %c0_10 = arith.constant 0 : index
    %9 = vector.load %arg5[%c0_8, %c0_9, %c0_10] : memref<1x64x64xbf16, #tpu.memory_space<vmem>>, vector<1x64x64xbf16>
    %10 = vector.shape_cast %9 : vector<1x64x64xbf16> to vector<64x64xbf16>
    %11 = vector.shape_cast %8 : vector<64x64xbf16> to vector<1x64x64xbf16>
    tpu.vector_store %arg5[%c0_8, %c0_9, %c0_10], %11 {strides = array<i32>} : memref<1x64x64xbf16, #tpu.memory_space<vmem>>, vector<1x64x64xbf16>,
    return
  }
  func.func @transform_0(%arg0: i32, %arg1: i32) -> (i32, i32, i32, i32) {
    %c0_i32 = arith.constant 0 : i32
    %c0_i32_0 = arith.constant 0 : i32
    %c0_i32_1 = arith.constant 0 : i32
    %c0_i32_2 = arith.constant 0 : i32
    return %arg0, %c0_i32, %c0_i32_0, %c0_i32_1 : i32, i32, i32, i32
  }
  func.func @transform_1(%arg0: i32, %arg1: i32) -> (i32, i32, i32) {
    %c0_i32 = arith.constant 0 : i32
    %c0_i32_0 = arith.constant 0 : i32
    %c0_i32_1 = arith.constant 0 : i32
    return %c0_i32, %c0_i32_0, %arg1 : i32, i32, i32
  }
  func.func @transform_2(%arg0: i32, %arg1: i32) -> (i32, i32) {
    %c0_i32 = arith.constant 0 : i32
    %c0_i32_0 = arith.constant 0 : i32
    return %c0_i32, %arg1 : i32, i32
  }
  func.func @transform_3(%arg0: i32, %arg1: i32) -> (i32, i32, i32) {
    %c0_i32 = arith.constant 0 : i32
    %c0_i32_0 = arith.constant 0 : i32
    return %arg0, %c0_i32, %arg1 : i32, i32, i32
  }
}

module attributes {stable_mosaic.version = 11 : i64} {
  func.func @_conv_bn_act_kernel(%arg0: i32, %arg1: i32, %arg2: memref<1x4x90x32xbf16, #tpu.memory_space<vmem>>, %arg3: memref<9x32x64xbf16, #tpu.memory_space<vmem>>, %arg4: memref<1x64xf32, #tpu.memory_space<vmem>>, %arg5: memref<1x72x64xbf16, #tpu.memory_space<vmem>>) attributes {dimension_semantics = [#tpu.dimension_semantics<parallel>, #tpu.dimension_semantics<parallel>], iteration_bounds = array<i64: 2, 1>, scalar_prefetch = 0 : i64, scratch_operands = 0 : i64, tpu.core_type = #tpu.core_type<tc>, window_params = [{transform_indices = @transform_0, window_bounds = array<i64: 1, 4, 90, 32>}, {transform_indices = @transform_1, window_bounds = array<i64: 9, 32, 64>}, {transform_indices = @transform_2, window_bounds = array<i64: 1, 64>}, {transform_indices = @transform_3, window_bounds = array<i64: 1, 72, 64>}]} {
    %c0 = arith.constant 0 : index
    %c0_0 = arith.constant 0 : index
    %c0_1 = arith.constant 0 : index
    %c0_2 = arith.constant 0 : index
    %0 = vector.load %arg2[%c0, %c0_0, %c0_1, %c0_2] : memref<1x4x90x32xbf16, #tpu.memory_space<vmem>>, vector<1x1x72x32xbf16>
    %1 = vector.shape_cast %0 : vector<1x1x72x32xbf16> to vector<72x32xbf16>
    %c0_3 = arith.constant 0 : index
    %c0_4 = arith.constant 0 : index
    %c0_5 = arith.constant 0 : index
    %2 = vector.load %arg3[%c0_3, %c0_4, %c0_5] : memref<9x32x64xbf16, #tpu.memory_space<vmem>>, vector<1x32x64xbf16>
    %3 = vector.shape_cast %2 : vector<1x32x64xbf16> to vector<32x64xbf16>
    %cst = arith.constant dense<0.000000e+00> : vector<72x64xf32>
    %4 = tpu.matmul %1, %3, %cst {dimension_numbers = #tpu.dot_dimension_numbers<[1], [0], [0], [1], [0, 0, 1, 1], [], []>} : vector<72x32xbf16>, vector<32x64xbf16>, vector<72x64xf32> -> vector<72x64xf32>
    %c0_6 = arith.constant 0 : index
    %c1 = arith.constant 1 : index
    %c0_7 = arith.constant 0 : index
    %c0_8 = arith.constant 0 : index
    %5 = vector.load %arg2[%c0_6, %c1, %c0_7, %c0_8] : memref<1x4x90x32xbf16, #tpu.memory_space<vmem>>, vector<1x1x72x32xbf16>
    %6 = vector.shape_cast %5 : vector<1x1x72x32xbf16> to vector<72x32xbf16>
    %c1_9 = arith.constant 1 : index
    %c0_10 = arith.constant 0 : index
    %c0_11 = arith.constant 0 : index
    %7 = vector.load %arg3[%c1_9, %c0_10, %c0_11] : memref<9x32x64xbf16, #tpu.memory_space<vmem>>, vector<1x32x64xbf16>
    %8 = vector.shape_cast %7 : vector<1x32x64xbf16> to vector<32x64xbf16>
    %cst_12 = arith.constant dense<0.000000e+00> : vector<72x64xf32>
    %9 = tpu.matmul %6, %8, %cst_12 {dimension_numbers = #tpu.dot_dimension_numbers<[1], [0], [0], [1], [0, 0, 1, 1], [], []>} : vector<72x32xbf16>, vector<32x64xbf16>, vector<72x64xf32> -> vector<72x64xf32>
    %10 = arith.addf %4, %9 : vector<72x64xf32>
    %c0_13 = arith.constant 0 : index
    %c0_14 = arith.constant 0 : index
    %c1_15 = arith.constant 1 : index
    %c0_16 = arith.constant 0 : index
    %11 = vector.load %arg2[%c0_13, %c0_14, %c1_15, %c0_16] : memref<1x4x90x32xbf16, #tpu.memory_space<vmem>>, vector<1x1x72x32xbf16>
    %12 = vector.shape_cast %11 : vector<1x1x72x32xbf16> to vector<72x32xbf16>
    %c2 = arith.constant 2 : index
    %c0_17 = arith.constant 0 : index
    %c0_18 = arith.constant 0 : index
    %13 = vector.load %arg3[%c2, %c0_17, %c0_18] : memref<9x32x64xbf16, #tpu.memory_space<vmem>>, vector<1x32x64xbf16>
    %14 = vector.shape_cast %13 : vector<1x32x64xbf16> to vector<32x64xbf16>
    %cst_19 = arith.constant dense<0.000000e+00> : vector<72x64xf32>
    %15 = tpu.matmul %12, %14, %cst_19 {dimension_numbers = #tpu.dot_dimension_numbers<[1], [0], [0], [1], [0, 0, 1, 1], [], []>} : vector<72x32xbf16>, vector<32x64xbf16>, vector<72x64xf32> -> vector<72x64xf32>
    %16 = arith.addf %10, %15 : vector<72x64xf32>
    %c0_20 = arith.constant 0 : index
    %c2_21 = arith.constant 2 : index
    %c0_22 = arith.constant 0 : index
    %c0_23 = arith.constant 0 : index
    %17 = vector.load %arg2[%c0_20, %c2_21, %c0_22, %c0_23] : memref<1x4x90x32xbf16, #tpu.memory_space<vmem>>, vector<1x1x72x32xbf16>
    %18 = vector.shape_cast %17 : vector<1x1x72x32xbf16> to vector<72x32xbf16>
    %c3 = arith.constant 3 : index
    %c0_24 = arith.constant 0 : index
    %c0_25 = arith.constant 0 : index
    %19 = vector.load %arg3[%c3, %c0_24, %c0_25] : memref<9x32x64xbf16, #tpu.memory_space<vmem>>, vector<1x32x64xbf16>
    %20 = vector.shape_cast %19 : vector<1x32x64xbf16> to vector<32x64xbf16>
    %cst_26 = arith.constant dense<0.000000e+00> : vector<72x64xf32>
    %21 = tpu.matmul %18, %20, %cst_26 {dimension_numbers = #tpu.dot_dimension_numbers<[1], [0], [0], [1], [0, 0, 1, 1], [], []>} : vector<72x32xbf16>, vector<32x64xbf16>, vector<72x64xf32> -> vector<72x64xf32>
    %22 = arith.addf %16, %21 : vector<72x64xf32>
    %c0_27 = arith.constant 0 : index
    %c3_28 = arith.constant 3 : index
    %c0_29 = arith.constant 0 : index
    %c0_30 = arith.constant 0 : index
    %23 = vector.load %arg2[%c0_27, %c3_28, %c0_29, %c0_30] : memref<1x4x90x32xbf16, #tpu.memory_space<vmem>>, vector<1x1x72x32xbf16>
    %24 = vector.shape_cast %23 : vector<1x1x72x32xbf16> to vector<72x32xbf16>
    %c4 = arith.constant 4 : index
    %c0_31 = arith.constant 0 : index
    %c0_32 = arith.constant 0 : index
    %25 = vector.load %arg3[%c4, %c0_31, %c0_32] : memref<9x32x64xbf16, #tpu.memory_space<vmem>>, vector<1x32x64xbf16>
    %26 = vector.shape_cast %25 : vector<1x32x64xbf16> to vector<32x64xbf16>
    %cst_33 = arith.constant dense<0.000000e+00> : vector<72x64xf32>
    %27 = tpu.matmul %24, %26, %cst_33 {dimension_numbers = #tpu.dot_dimension_numbers<[1], [0], [0], [1], [0, 0, 1, 1], [], []>} : vector<72x32xbf16>, vector<32x64xbf16>, vector<72x64xf32> -> vector<72x64xf32>
    %28 = arith.addf %22, %27 : vector<72x64xf32>
    %c0_34 = arith.constant 0 : index
    %c2_35 = arith.constant 2 : index
    %c1_36 = arith.constant 1 : index
    %c0_37 = arith.constant 0 : index
    %29 = vector.load %arg2[%c0_34, %c2_35, %c1_36, %c0_37] : memref<1x4x90x32xbf16, #tpu.memory_space<vmem>>, vector<1x1x72x32xbf16>
    %30 = vector.shape_cast %29 : vector<1x1x72x32xbf16> to vector<72x32xbf16>
    %c5 = arith.constant 5 : index
    %c0_38 = arith.constant 0 : index
    %c0_39 = arith.constant 0 : index
    %31 = vector.load %arg3[%c5, %c0_38, %c0_39] : memref<9x32x64xbf16, #tpu.memory_space<vmem>>, vector<1x32x64xbf16>
    %32 = vector.shape_cast %31 : vector<1x32x64xbf16> to vector<32x64xbf16>
    %cst_40 = arith.constant dense<0.000000e+00> : vector<72x64xf32>
    %33 = tpu.matmul %30, %32, %cst_40 {dimension_numbers = #tpu.dot_dimension_numbers<[1], [0], [0], [1], [0, 0, 1, 1], [], []>} : vector<72x32xbf16>, vector<32x64xbf16>, vector<72x64xf32> -> vector<72x64xf32>
    %34 = arith.addf %28, %33 : vector<72x64xf32>
    %c0_41 = arith.constant 0 : index
    %c0_42 = arith.constant 0 : index
    %c9 = arith.constant 9 : index
    %c0_43 = arith.constant 0 : index
    %35 = vector.load %arg2[%c0_41, %c0_42, %c9, %c0_43] : memref<1x4x90x32xbf16, #tpu.memory_space<vmem>>, vector<1x1x72x32xbf16>
    %36 = vector.shape_cast %35 : vector<1x1x72x32xbf16> to vector<72x32xbf16>
    %c6 = arith.constant 6 : index
    %c0_44 = arith.constant 0 : index
    %c0_45 = arith.constant 0 : index
    %37 = vector.load %arg3[%c6, %c0_44, %c0_45] : memref<9x32x64xbf16, #tpu.memory_space<vmem>>, vector<1x32x64xbf16>
    %38 = vector.shape_cast %37 : vector<1x32x64xbf16> to vector<32x64xbf16>
    %cst_46 = arith.constant dense<0.000000e+00> : vector<72x64xf32>
    %39 = tpu.matmul %36, %38, %cst_46 {dimension_numbers = #tpu.dot_dimension_numbers<[1], [0], [0], [1], [0, 0, 1, 1], [], []>} : vector<72x32xbf16>, vector<32x64xbf16>, vector<72x64xf32> -> vector<72x64xf32>
    %40 = arith.addf %34, %39 : vector<72x64xf32>
    %c0_47 = arith.constant 0 : index
    %c1_48 = arith.constant 1 : index
    %c9_49 = arith.constant 9 : index
    %c0_50 = arith.constant 0 : index
    %41 = vector.load %arg2[%c0_47, %c1_48, %c9_49, %c0_50] : memref<1x4x90x32xbf16, #tpu.memory_space<vmem>>, vector<1x1x72x32xbf16>
    %42 = vector.shape_cast %41 : vector<1x1x72x32xbf16> to vector<72x32xbf16>
    %c7 = arith.constant 7 : index
    %c0_51 = arith.constant 0 : index
    %c0_52 = arith.constant 0 : index
    %43 = vector.load %arg3[%c7, %c0_51, %c0_52] : memref<9x32x64xbf16, #tpu.memory_space<vmem>>, vector<1x32x64xbf16>
    %44 = vector.shape_cast %43 : vector<1x32x64xbf16> to vector<32x64xbf16>
    %cst_53 = arith.constant dense<0.000000e+00> : vector<72x64xf32>
    %45 = tpu.matmul %42, %44, %cst_53 {dimension_numbers = #tpu.dot_dimension_numbers<[1], [0], [0], [1], [0, 0, 1, 1], [], []>} : vector<72x32xbf16>, vector<32x64xbf16>, vector<72x64xf32> -> vector<72x64xf32>
    %46 = arith.addf %40, %45 : vector<72x64xf32>
    %c0_54 = arith.constant 0 : index
    %c0_55 = arith.constant 0 : index
    %c10 = arith.constant 10 : index
    %c0_56 = arith.constant 0 : index
    %47 = vector.load %arg2[%c0_54, %c0_55, %c10, %c0_56] : memref<1x4x90x32xbf16, #tpu.memory_space<vmem>>, vector<1x1x72x32xbf16>
    %48 = vector.shape_cast %47 : vector<1x1x72x32xbf16> to vector<72x32xbf16>
    %c8 = arith.constant 8 : index
    %c0_57 = arith.constant 0 : index
    %c0_58 = arith.constant 0 : index
    %49 = vector.load %arg3[%c8, %c0_57, %c0_58] : memref<9x32x64xbf16, #tpu.memory_space<vmem>>, vector<1x32x64xbf16>
    %50 = vector.shape_cast %49 : vector<1x32x64xbf16> to vector<32x64xbf16>
    %cst_59 = arith.constant dense<0.000000e+00> : vector<72x64xf32>
    %51 = tpu.matmul %48, %50, %cst_59 {dimension_numbers = #tpu.dot_dimension_numbers<[1], [0], [0], [1], [0, 0, 1, 1], [], []>} : vector<72x32xbf16>, vector<32x64xbf16>, vector<72x64xf32> -> vector<72x64xf32>
    %52 = arith.addf %46, %51 : vector<72x64xf32>
    %c0_60 = arith.constant 0 : index
    %c0_61 = arith.constant 0 : index
    %53 = vector.load %arg4[%c0_60, %c0_61] : memref<1x64xf32, #tpu.memory_space<vmem>>, vector<1x64xf32>
    %54 = vector.broadcast %53 : vector<1x64xf32> to vector<72x64xf32>
    %55 = arith.addf %52, %54 : vector<72x64xf32>
    %cst_62 = arith.constant 0.000000e+00 : f32
    %56 = vector.broadcast %cst_62 : f32 to vector<72x64xf32>
    %57 = arith.maximumf %55, %56 : vector<72x64xf32>
    %58 = arith.truncf %57 : vector<72x64xf32> to vector<72x64xbf16>
    %c0_63 = arith.constant 0 : index
    %c0_64 = arith.constant 0 : index
    %c0_65 = arith.constant 0 : index
    %59 = vector.load %arg5[%c0_63, %c0_64, %c0_65] : memref<1x72x64xbf16, #tpu.memory_space<vmem>>, vector<1x72x64xbf16>
    %60 = vector.shape_cast %59 : vector<1x72x64xbf16> to vector<72x64xbf16>
    %61 = vector.shape_cast %58 : vector<72x64xbf16> to vector<1x72x64xbf16>
    tpu.vector_store %arg5[%c0_63, %c0_64, %c0_65], %61 {strides = array<i32>} : memref<1x72x64xbf16, #tpu.memory_space<vmem>>, vector<1x72x64xbf16>,
    return
  }
  func.func @transform_0(%arg0: i32, %arg1: i32) -> (i32, i32, i32, i32) {
    %c0_i32 = arith.constant 0 : i32
    %c0_i32_0 = arith.constant 0 : i32
    %c0_i32_1 = arith.constant 0 : i32
    %c0_i32_2 = arith.constant 0 : i32
    return %arg0, %c0_i32, %c0_i32_0, %c0_i32_1 : i32, i32, i32, i32
  }
  func.func @transform_1(%arg0: i32, %arg1: i32) -> (i32, i32, i32) {
    %c0_i32 = arith.constant 0 : i32
    %c0_i32_0 = arith.constant 0 : i32
    %c0_i32_1 = arith.constant 0 : i32
    return %c0_i32, %c0_i32_0, %arg1 : i32, i32, i32
  }
  func.func @transform_2(%arg0: i32, %arg1: i32) -> (i32, i32) {
    %c0_i32 = arith.constant 0 : i32
    %c0_i32_0 = arith.constant 0 : i32
    return %c0_i32, %arg1 : i32, i32
  }
  func.func @transform_3(%arg0: i32, %arg1: i32) -> (i32, i32, i32) {
    %c0_i32 = arith.constant 0 : i32
    %c0_i32_0 = arith.constant 0 : i32
    return %arg0, %c0_i32, %arg1 : i32, i32, i32
  }
}

module attributes {stable_mosaic.version = 11 : i64} {
  func.func @_conv_bn_act_kernel(%arg0: i32, %arg1: i32, %arg2: memref<1x1x110x64xbf16, #tpu.memory_space<vmem>>, %arg3: memref<9x64x64xbf16, #tpu.memory_space<vmem>>, %arg4: memref<1x64xf32, #tpu.memory_space<vmem>>, %arg5: memref<1x80x64xbf16, #tpu.memory_space<vmem>>, %arg6: memref<1x80x64xbf16, #tpu.memory_space<vmem>>) attributes {dimension_semantics = [#tpu.dimension_semantics<parallel>, #tpu.dimension_semantics<parallel>], iteration_bounds = array<i64: 2, 1>, scalar_prefetch = 0 : i64, scratch_operands = 0 : i64, tpu.core_type = #tpu.core_type<tc>, window_params = [{transform_indices = @transform_0, window_bounds = array<i64: 1, 1, 110, 64>}, {transform_indices = @transform_1, window_bounds = array<i64: 9, 64, 64>}, {transform_indices = @transform_2, window_bounds = array<i64: 1, 64>}, {transform_indices = @transform_3, window_bounds = array<i64: 1, 80, 64>}, {transform_indices = @transform_4, window_bounds = array<i64: 1, 80, 64>}]} {
    %c0 = arith.constant 0 : index
    %c0_0 = arith.constant 0 : index
    %c0_1 = arith.constant 0 : index
    %c0_2 = arith.constant 0 : index
    %0 = vector.load %arg2[%c0, %c0_0, %c0_1, %c0_2] : memref<1x1x110x64xbf16, #tpu.memory_space<vmem>>, vector<1x1x80x64xbf16>
    %1 = vector.shape_cast %0 : vector<1x1x80x64xbf16> to vector<80x64xbf16>
    %c0_3 = arith.constant 0 : index
    %c0_4 = arith.constant 0 : index
    %c0_5 = arith.constant 0 : index
    %2 = vector.load %arg3[%c0_3, %c0_4, %c0_5] : memref<9x64x64xbf16, #tpu.memory_space<vmem>>, vector<1x64x64xbf16>
    %3 = vector.shape_cast %2 : vector<1x64x64xbf16> to vector<64x64xbf16>
    %cst = arith.constant dense<0.000000e+00> : vector<80x64xf32>
    %4 = tpu.matmul %1, %3, %cst {dimension_numbers = #tpu.dot_dimension_numbers<[1], [0], [0], [1], [0, 0, 1, 1], [], []>} : vector<80x64xbf16>, vector<64x64xbf16>, vector<80x64xf32> -> vector<80x64xf32>
    %c0_6 = arith.constant 0 : index
    %c0_7 = arith.constant 0 : index
    %c1 = arith.constant 1 : index
    %c0_8 = arith.constant 0 : index
    %5 = vector.load %arg2[%c0_6, %c0_7, %c1, %c0_8] : memref<1x1x110x64xbf16, #tpu.memory_space<vmem>>, vector<1x1x80x64xbf16>
    %6 = vector.shape_cast %5 : vector<1x1x80x64xbf16> to vector<80x64xbf16>
    %c1_9 = arith.constant 1 : index
    %c0_10 = arith.constant 0 : index
    %c0_11 = arith.constant 0 : index
    %7 = vector.load %arg3[%c1_9, %c0_10, %c0_11] : memref<9x64x64xbf16, #tpu.memory_space<vmem>>, vector<1x64x64xbf16>
    %8 = vector.shape_cast %7 : vector<1x64x64xbf16> to vector<64x64xbf16>
    %cst_12 = arith.constant dense<0.000000e+00> : vector<80x64xf32>
    %9 = tpu.matmul %6, %8, %cst_12 {dimension_numbers = #tpu.dot_dimension_numbers<[1], [0], [0], [1], [0, 0, 1, 1], [], []>} : vector<80x64xbf16>, vector<64x64xbf16>, vector<80x64xf32> -> vector<80x64xf32>
    %10 = arith.addf %4, %9 : vector<80x64xf32>
    %c0_13 = arith.constant 0 : index
    %c0_14 = arith.constant 0 : index
    %c2 = arith.constant 2 : index
    %c0_15 = arith.constant 0 : index
    %11 = vector.load %arg2[%c0_13, %c0_14, %c2, %c0_15] : memref<1x1x110x64xbf16, #tpu.memory_space<vmem>>, vector<1x1x80x64xbf16>
    %12 = vector.shape_cast %11 : vector<1x1x80x64xbf16> to vector<80x64xbf16>
    %c2_16 = arith.constant 2 : index
    %c0_17 = arith.constant 0 : index
    %c0_18 = arith.constant 0 : index
    %13 = vector.load %arg3[%c2_16, %c0_17, %c0_18] : memref<9x64x64xbf16, #tpu.memory_space<vmem>>, vector<1x64x64xbf16>
    %14 = vector.shape_cast %13 : vector<1x64x64xbf16> to vector<64x64xbf16>
    %cst_19 = arith.constant dense<0.000000e+00> : vector<80x64xf32>
    %15 = tpu.matmul %12, %14, %cst_19 {dimension_numbers = #tpu.dot_dimension_numbers<[1], [0], [0], [1], [0, 0, 1, 1], [], []>} : vector<80x64xbf16>, vector<64x64xbf16>, vector<80x64xf32> -> vector<80x64xf32>
    %16 = arith.addf %10, %15 : vector<80x64xf32>
    %c0_20 = arith.constant 0 : index
    %c0_21 = arith.constant 0 : index
    %c10 = arith.constant 10 : index
    %c0_22 = arith.constant 0 : index
    %17 = vector.load %arg2[%c0_20, %c0_21, %c10, %c0_22] : memref<1x1x110x64xbf16, #tpu.memory_space<vmem>>, vector<1x1x80x64xbf16>
    %18 = vector.shape_cast %17 : vector<1x1x80x64xbf16> to vector<80x64xbf16>
    %c3 = arith.constant 3 : index
    %c0_23 = arith.constant 0 : index
    %c0_24 = arith.constant 0 : index
    %19 = vector.load %arg3[%c3, %c0_23, %c0_24] : memref<9x64x64xbf16, #tpu.memory_space<vmem>>, vector<1x64x64xbf16>
    %20 = vector.shape_cast %19 : vector<1x64x64xbf16> to vector<64x64xbf16>
    %cst_25 = arith.constant dense<0.000000e+00> : vector<80x64xf32>
    %21 = tpu.matmul %18, %20, %cst_25 {dimension_numbers = #tpu.dot_dimension_numbers<[1], [0], [0], [1], [0, 0, 1, 1], [], []>} : vector<80x64xbf16>, vector<64x64xbf16>, vector<80x64xf32> -> vector<80x64xf32>
    %22 = arith.addf %16, %21 : vector<80x64xf32>
    %c0_26 = arith.constant 0 : index
    %c0_27 = arith.constant 0 : index
    %c11 = arith.constant 11 : index
    %c0_28 = arith.constant 0 : index
    %23 = vector.load %arg2[%c0_26, %c0_27, %c11, %c0_28] : memref<1x1x110x64xbf16, #tpu.memory_space<vmem>>, vector<1x1x80x64xbf16>
    %24 = vector.shape_cast %23 : vector<1x1x80x64xbf16> to vector<80x64xbf16>
    %c4 = arith.constant 4 : index
    %c0_29 = arith.constant 0 : index
    %c0_30 = arith.constant 0 : index
    %25 = vector.load %arg3[%c4, %c0_29, %c0_30] : memref<9x64x64xbf16, #tpu.memory_space<vmem>>, vector<1x64x64xbf16>
    %26 = vector.shape_cast %25 : vector<1x64x64xbf16> to vector<64x64xbf16>
    %cst_31 = arith.constant dense<0.000000e+00> : vector<80x64xf32>
    %27 = tpu.matmul %24, %26, %cst_31 {dimension_numbers = #tpu.dot_dimension_numbers<[1], [0], [0], [1], [0, 0, 1, 1], [], []>} : vector<80x64xbf16>, vector<64x64xbf16>, vector<80x64xf32> -> vector<80x64xf32>
    %28 = arith.addf %22, %27 : vector<80x64xf32>
    %c0_32 = arith.constant 0 : index
    %c0_33 = arith.constant 0 : index
    %c12 = arith.constant 12 : index
    %c0_34 = arith.constant 0 : index
    %29 = vector.load %arg2[%c0_32, %c0_33, %c12, %c0_34] : memref<1x1x110x64xbf16, #tpu.memory_space<vmem>>, vector<1x1x80x64xbf16>
    %30 = vector.shape_cast %29 : vector<1x1x80x64xbf16> to vector<80x64xbf16>
    %c5 = arith.constant 5 : index
    %c0_35 = arith.constant 0 : index
    %c0_36 = arith.constant 0 : index
    %31 = vector.load %arg3[%c5, %c0_35, %c0_36] : memref<9x64x64xbf16, #tpu.memory_space<vmem>>, vector<1x64x64xbf16>
    %32 = vector.shape_cast %31 : vector<1x64x64xbf16> to vector<64x64xbf16>
    %cst_37 = arith.constant dense<0.000000e+00> : vector<80x64xf32>
    %33 = tpu.matmul %30, %32, %cst_37 {dimension_numbers = #tpu.dot_dimension_numbers<[1], [0], [0], [1], [0, 0, 1, 1], [], []>} : vector<80x64xbf16>, vector<64x64xbf16>, vector<80x64xf32> -> vector<80x64xf32>
    %34 = arith.addf %28, %33 : vector<80x64xf32>
    %c0_38 = arith.constant 0 : index
    %c0_39 = arith.constant 0 : index
    %c20 = arith.constant 20 : index
    %c0_40 = arith.constant 0 : index
    %35 = vector.load %arg2[%c0_38, %c0_39, %c20, %c0_40] : memref<1x1x110x64xbf16, #tpu.memory_space<vmem>>, vector<1x1x80x64xbf16>
    %36 = vector.shape_cast %35 : vector<1x1x80x64xbf16> to vector<80x64xbf16>
    %c6 = arith.constant 6 : index
    %c0_41 = arith.constant 0 : index
    %c0_42 = arith.constant 0 : index
    %37 = vector.load %arg3[%c6, %c0_41, %c0_42] : memref<9x64x64xbf16, #tpu.memory_space<vmem>>, vector<1x64x64xbf16>
    %38 = vector.shape_cast %37 : vector<1x64x64xbf16> to vector<64x64xbf16>
    %cst_43 = arith.constant dense<0.000000e+00> : vector<80x64xf32>
    %39 = tpu.matmul %36, %38, %cst_43 {dimension_numbers = #tpu.dot_dimension_numbers<[1], [0], [0], [1], [0, 0, 1, 1], [], []>} : vector<80x64xbf16>, vector<64x64xbf16>, vector<80x64xf32> -> vector<80x64xf32>
    %40 = arith.addf %34, %39 : vector<80x64xf32>
    %c0_44 = arith.constant 0 : index
    %c0_45 = arith.constant 0 : index
    %c21 = arith.constant 21 : index
    %c0_46 = arith.constant 0 : index
    %41 = vector.load %arg2[%c0_44, %c0_45, %c21, %c0_46] : memref<1x1x110x64xbf16, #tpu.memory_space<vmem>>, vector<1x1x80x64xbf16>
    %42 = vector.shape_cast %41 : vector<1x1x80x64xbf16> to vector<80x64xbf16>
    %c7 = arith.constant 7 : index
    %c0_47 = arith.constant 0 : index
    %c0_48 = arith.constant 0 : index
    %43 = vector.load %arg3[%c7, %c0_47, %c0_48] : memref<9x64x64xbf16, #tpu.memory_space<vmem>>, vector<1x64x64xbf16>
    %44 = vector.shape_cast %43 : vector<1x64x64xbf16> to vector<64x64xbf16>
    %cst_49 = arith.constant dense<0.000000e+00> : vector<80x64xf32>
    %45 = tpu.matmul %42, %44, %cst_49 {dimension_numbers = #tpu.dot_dimension_numbers<[1], [0], [0], [1], [0, 0, 1, 1], [], []>} : vector<80x64xbf16>, vector<64x64xbf16>, vector<80x64xf32> -> vector<80x64xf32>
    %46 = arith.addf %40, %45 : vector<80x64xf32>
    %c0_50 = arith.constant 0 : index
    %c0_51 = arith.constant 0 : index
    %c22 = arith.constant 22 : index
    %c0_52 = arith.constant 0 : index
    %47 = vector.load %arg2[%c0_50, %c0_51, %c22, %c0_52] : memref<1x1x110x64xbf16, #tpu.memory_space<vmem>>, vector<1x1x80x64xbf16>
    %48 = vector.shape_cast %47 : vector<1x1x80x64xbf16> to vector<80x64xbf16>
    %c8 = arith.constant 8 : index
    %c0_53 = arith.constant 0 : index
    %c0_54 = arith.constant 0 : index
    %49 = vector.load %arg3[%c8, %c0_53, %c0_54] : memref<9x64x64xbf16, #tpu.memory_space<vmem>>, vector<1x64x64xbf16>
    %50 = vector.shape_cast %49 : vector<1x64x64xbf16> to vector<64x64xbf16>
    %cst_55 = arith.constant dense<0.000000e+00> : vector<80x64xf32>
    %51 = tpu.matmul %48, %50, %cst_55 {dimension_numbers = #tpu.dot_dimension_numbers<[1], [0], [0], [1], [0, 0, 1, 1], [], []>} : vector<80x64xbf16>, vector<64x64xbf16>, vector<80x64xf32> -> vector<80x64xf32>
    %52 = arith.addf %46, %51 : vector<80x64xf32>
    %c0_56 = arith.constant 0 : index
    %c0_57 = arith.constant 0 : index
    %53 = vector.load %arg4[%c0_56, %c0_57] : memref<1x64xf32, #tpu.memory_space<vmem>>, vector<1x64xf32>
    %54 = vector.broadcast %53 : vector<1x64xf32> to vector<80x64xf32>
    %55 = arith.addf %52, %54 : vector<80x64xf32>
    %c0_58 = arith.constant 0 : index
    %c0_59 = arith.constant 0 : index
    %c0_60 = arith.constant 0 : index
    %56 = vector.load %arg5[%c0_58, %c0_59, %c0_60] : memref<1x80x64xbf16, #tpu.memory_space<vmem>>, vector<1x80x64xbf16>
    %57 = vector.shape_cast %56 : vector<1x80x64xbf16> to vector<80x64xbf16>
    %58 = arith.extf %57 : vector<80x64xbf16> to vector<80x64xf32>
    %59 = arith.addf %55, %58 : vector<80x64xf32>
    %cst_61 = arith.constant 0.000000e+00 : f32
    %60 = vector.broadcast %cst_61 : f32 to vector<80x64xf32>
    %61 = arith.maximumf %59, %60 : vector<80x64xf32>
    %62 = arith.truncf %61 : vector<80x64xf32> to vector<80x64xbf16>
    %c0_62 = arith.constant 0 : index
    %c0_63 = arith.constant 0 : index
    %c0_64 = arith.constant 0 : index
    %63 = vector.load %arg6[%c0_62, %c0_63, %c0_64] : memref<1x80x64xbf16, #tpu.memory_space<vmem>>, vector<1x80x64xbf16>
    %64 = vector.shape_cast %63 : vector<1x80x64xbf16> to vector<80x64xbf16>
    %65 = vector.shape_cast %62 : vector<80x64xbf16> to vector<1x80x64xbf16>
    tpu.vector_store %arg6[%c0_62, %c0_63, %c0_64], %65 {strides = array<i32>} : memref<1x80x64xbf16, #tpu.memory_space<vmem>>, vector<1x80x64xbf16>,
    return
  }
  func.func @transform_0(%arg0: i32, %arg1: i32) -> (i32, i32, i32, i32) {
    %c0_i32 = arith.constant 0 : i32
    %c0_i32_0 = arith.constant 0 : i32
    %c0_i32_1 = arith.constant 0 : i32
    %c0_i32_2 = arith.constant 0 : i32
    return %arg0, %c0_i32, %c0_i32_0, %c0_i32_1 : i32, i32, i32, i32
  }
  func.func @transform_1(%arg0: i32, %arg1: i32) -> (i32, i32, i32) {
    %c0_i32 = arith.constant 0 : i32
    %c0_i32_0 = arith.constant 0 : i32
    %c0_i32_1 = arith.constant 0 : i32
    return %c0_i32, %c0_i32_0, %arg1 : i32, i32, i32
  }
  func.func @transform_2(%arg0: i32, %arg1: i32) -> (i32, i32) {
    %c0_i32 = arith.constant 0 : i32
    %c0_i32_0 = arith.constant 0 : i32
    return %c0_i32, %arg1 : i32, i32
  }
  func.func @transform_3(%arg0: i32, %arg1: i32) -> (i32, i32, i32) {
    %c0_i32 = arith.constant 0 : i32
    %c0_i32_0 = arith.constant 0 : i32
    return %arg0, %c0_i32, %arg1 : i32, i32, i32
  }
  func.func @transform_4(%arg0: i32, %arg1: i32) -> (i32, i32, i32) {
    %c0_i32 = arith.constant 0 : i32
    %c0_i32_0 = arith.constant 0 : i32
    return %arg0, %c0_i32, %arg1 : i32, i32, i32
  }
}

module attributes {stable_mosaic.version = 11 : i64} {
  func.func @_conv_bn_act_kernel(%arg0: i32, %arg1: i32, %arg2: memref<1x1x110x64xbf16, #tpu.memory_space<vmem>>, %arg3: memref<9x64x64xbf16, #tpu.memory_space<vmem>>, %arg4: memref<1x64xf32, #tpu.memory_space<vmem>>, %arg5: memref<1x80x64xbf16, #tpu.memory_space<vmem>>) attributes {dimension_semantics = [#tpu.dimension_semantics<parallel>, #tpu.dimension_semantics<parallel>], iteration_bounds = array<i64: 2, 1>, scalar_prefetch = 0 : i64, scratch_operands = 0 : i64, tpu.core_type = #tpu.core_type<tc>, window_params = [{transform_indices = @transform_0, window_bounds = array<i64: 1, 1, 110, 64>}, {transform_indices = @transform_1, window_bounds = array<i64: 9, 64, 64>}, {transform_indices = @transform_2, window_bounds = array<i64: 1, 64>}, {transform_indices = @transform_3, window_bounds = array<i64: 1, 80, 64>}]} {
    %c0 = arith.constant 0 : index
    %c0_0 = arith.constant 0 : index
    %c0_1 = arith.constant 0 : index
    %c0_2 = arith.constant 0 : index
    %0 = vector.load %arg2[%c0, %c0_0, %c0_1, %c0_2] : memref<1x1x110x64xbf16, #tpu.memory_space<vmem>>, vector<1x1x80x64xbf16>
    %1 = vector.shape_cast %0 : vector<1x1x80x64xbf16> to vector<80x64xbf16>
    %c0_3 = arith.constant 0 : index
    %c0_4 = arith.constant 0 : index
    %c0_5 = arith.constant 0 : index
    %2 = vector.load %arg3[%c0_3, %c0_4, %c0_5] : memref<9x64x64xbf16, #tpu.memory_space<vmem>>, vector<1x64x64xbf16>
    %3 = vector.shape_cast %2 : vector<1x64x64xbf16> to vector<64x64xbf16>
    %cst = arith.constant dense<0.000000e+00> : vector<80x64xf32>
    %4 = tpu.matmul %1, %3, %cst {dimension_numbers = #tpu.dot_dimension_numbers<[1], [0], [0], [1], [0, 0, 1, 1], [], []>} : vector<80x64xbf16>, vector<64x64xbf16>, vector<80x64xf32> -> vector<80x64xf32>
    %c0_6 = arith.constant 0 : index
    %c0_7 = arith.constant 0 : index
    %c1 = arith.constant 1 : index
    %c0_8 = arith.constant 0 : index
    %5 = vector.load %arg2[%c0_6, %c0_7, %c1, %c0_8] : memref<1x1x110x64xbf16, #tpu.memory_space<vmem>>, vector<1x1x80x64xbf16>
    %6 = vector.shape_cast %5 : vector<1x1x80x64xbf16> to vector<80x64xbf16>
    %c1_9 = arith.constant 1 : index
    %c0_10 = arith.constant 0 : index
    %c0_11 = arith.constant 0 : index
    %7 = vector.load %arg3[%c1_9, %c0_10, %c0_11] : memref<9x64x64xbf16, #tpu.memory_space<vmem>>, vector<1x64x64xbf16>
    %8 = vector.shape_cast %7 : vector<1x64x64xbf16> to vector<64x64xbf16>
    %cst_12 = arith.constant dense<0.000000e+00> : vector<80x64xf32>
    %9 = tpu.matmul %6, %8, %cst_12 {dimension_numbers = #tpu.dot_dimension_numbers<[1], [0], [0], [1], [0, 0, 1, 1], [], []>} : vector<80x64xbf16>, vector<64x64xbf16>, vector<80x64xf32> -> vector<80x64xf32>
    %10 = arith.addf %4, %9 : vector<80x64xf32>
    %c0_13 = arith.constant 0 : index
    %c0_14 = arith.constant 0 : index
    %c2 = arith.constant 2 : index
    %c0_15 = arith.constant 0 : index
    %11 = vector.load %arg2[%c0_13, %c0_14, %c2, %c0_15] : memref<1x1x110x64xbf16, #tpu.memory_space<vmem>>, vector<1x1x80x64xbf16>
    %12 = vector.shape_cast %11 : vector<1x1x80x64xbf16> to vector<80x64xbf16>
    %c2_16 = arith.constant 2 : index
    %c0_17 = arith.constant 0 : index
    %c0_18 = arith.constant 0 : index
    %13 = vector.load %arg3[%c2_16, %c0_17, %c0_18] : memref<9x64x64xbf16, #tpu.memory_space<vmem>>, vector<1x64x64xbf16>
    %14 = vector.shape_cast %13 : vector<1x64x64xbf16> to vector<64x64xbf16>
    %cst_19 = arith.constant dense<0.000000e+00> : vector<80x64xf32>
    %15 = tpu.matmul %12, %14, %cst_19 {dimension_numbers = #tpu.dot_dimension_numbers<[1], [0], [0], [1], [0, 0, 1, 1], [], []>} : vector<80x64xbf16>, vector<64x64xbf16>, vector<80x64xf32> -> vector<80x64xf32>
    %16 = arith.addf %10, %15 : vector<80x64xf32>
    %c0_20 = arith.constant 0 : index
    %c0_21 = arith.constant 0 : index
    %c10 = arith.constant 10 : index
    %c0_22 = arith.constant 0 : index
    %17 = vector.load %arg2[%c0_20, %c0_21, %c10, %c0_22] : memref<1x1x110x64xbf16, #tpu.memory_space<vmem>>, vector<1x1x80x64xbf16>
    %18 = vector.shape_cast %17 : vector<1x1x80x64xbf16> to vector<80x64xbf16>
    %c3 = arith.constant 3 : index
    %c0_23 = arith.constant 0 : index
    %c0_24 = arith.constant 0 : index
    %19 = vector.load %arg3[%c3, %c0_23, %c0_24] : memref<9x64x64xbf16, #tpu.memory_space<vmem>>, vector<1x64x64xbf16>
    %20 = vector.shape_cast %19 : vector<1x64x64xbf16> to vector<64x64xbf16>
    %cst_25 = arith.constant dense<0.000000e+00> : vector<80x64xf32>
    %21 = tpu.matmul %18, %20, %cst_25 {dimension_numbers = #tpu.dot_dimension_numbers<[1], [0], [0], [1], [0, 0, 1, 1], [], []>} : vector<80x64xbf16>, vector<64x64xbf16>, vector<80x64xf32> -> vector<80x64xf32>
    %22 = arith.addf %16, %21 : vector<80x64xf32>
    %c0_26 = arith.constant 0 : index
    %c0_27 = arith.constant 0 : index
    %c11 = arith.constant 11 : index
    %c0_28 = arith.constant 0 : index
    %23 = vector.load %arg2[%c0_26, %c0_27, %c11, %c0_28] : memref<1x1x110x64xbf16, #tpu.memory_space<vmem>>, vector<1x1x80x64xbf16>
    %24 = vector.shape_cast %23 : vector<1x1x80x64xbf16> to vector<80x64xbf16>
    %c4 = arith.constant 4 : index
    %c0_29 = arith.constant 0 : index
    %c0_30 = arith.constant 0 : index
    %25 = vector.load %arg3[%c4, %c0_29, %c0_30] : memref<9x64x64xbf16, #tpu.memory_space<vmem>>, vector<1x64x64xbf16>
    %26 = vector.shape_cast %25 : vector<1x64x64xbf16> to vector<64x64xbf16>
    %cst_31 = arith.constant dense<0.000000e+00> : vector<80x64xf32>
    %27 = tpu.matmul %24, %26, %cst_31 {dimension_numbers = #tpu.dot_dimension_numbers<[1], [0], [0], [1], [0, 0, 1, 1], [], []>} : vector<80x64xbf16>, vector<64x64xbf16>, vector<80x64xf32> -> vector<80x64xf32>
    %28 = arith.addf %22, %27 : vector<80x64xf32>
    %c0_32 = arith.constant 0 : index
    %c0_33 = arith.constant 0 : index
    %c12 = arith.constant 12 : index
    %c0_34 = arith.constant 0 : index
    %29 = vector.load %arg2[%c0_32, %c0_33, %c12, %c0_34] : memref<1x1x110x64xbf16, #tpu.memory_space<vmem>>, vector<1x1x80x64xbf16>
    %30 = vector.shape_cast %29 : vector<1x1x80x64xbf16> to vector<80x64xbf16>
    %c5 = arith.constant 5 : index
    %c0_35 = arith.constant 0 : index
    %c0_36 = arith.constant 0 : index
    %31 = vector.load %arg3[%c5, %c0_35, %c0_36] : memref<9x64x64xbf16, #tpu.memory_space<vmem>>, vector<1x64x64xbf16>
    %32 = vector.shape_cast %31 : vector<1x64x64xbf16> to vector<64x64xbf16>
    %cst_37 = arith.constant dense<0.000000e+00> : vector<80x64xf32>
    %33 = tpu.matmul %30, %32, %cst_37 {dimension_numbers = #tpu.dot_dimension_numbers<[1], [0], [0], [1], [0, 0, 1, 1], [], []>} : vector<80x64xbf16>, vector<64x64xbf16>, vector<80x64xf32> -> vector<80x64xf32>
    %34 = arith.addf %28, %33 : vector<80x64xf32>
    %c0_38 = arith.constant 0 : index
    %c0_39 = arith.constant 0 : index
    %c20 = arith.constant 20 : index
    %c0_40 = arith.constant 0 : index
    %35 = vector.load %arg2[%c0_38, %c0_39, %c20, %c0_40] : memref<1x1x110x64xbf16, #tpu.memory_space<vmem>>, vector<1x1x80x64xbf16>
    %36 = vector.shape_cast %35 : vector<1x1x80x64xbf16> to vector<80x64xbf16>
    %c6 = arith.constant 6 : index
    %c0_41 = arith.constant 0 : index
    %c0_42 = arith.constant 0 : index
    %37 = vector.load %arg3[%c6, %c0_41, %c0_42] : memref<9x64x64xbf16, #tpu.memory_space<vmem>>, vector<1x64x64xbf16>
    %38 = vector.shape_cast %37 : vector<1x64x64xbf16> to vector<64x64xbf16>
    %cst_43 = arith.constant dense<0.000000e+00> : vector<80x64xf32>
    %39 = tpu.matmul %36, %38, %cst_43 {dimension_numbers = #tpu.dot_dimension_numbers<[1], [0], [0], [1], [0, 0, 1, 1], [], []>} : vector<80x64xbf16>, vector<64x64xbf16>, vector<80x64xf32> -> vector<80x64xf32>
    %40 = arith.addf %34, %39 : vector<80x64xf32>
    %c0_44 = arith.constant 0 : index
    %c0_45 = arith.constant 0 : index
    %c21 = arith.constant 21 : index
    %c0_46 = arith.constant 0 : index
    %41 = vector.load %arg2[%c0_44, %c0_45, %c21, %c0_46] : memref<1x1x110x64xbf16, #tpu.memory_space<vmem>>, vector<1x1x80x64xbf16>
    %42 = vector.shape_cast %41 : vector<1x1x80x64xbf16> to vector<80x64xbf16>
    %c7 = arith.constant 7 : index
    %c0_47 = arith.constant 0 : index
    %c0_48 = arith.constant 0 : index
    %43 = vector.load %arg3[%c7, %c0_47, %c0_48] : memref<9x64x64xbf16, #tpu.memory_space<vmem>>, vector<1x64x64xbf16>
    %44 = vector.shape_cast %43 : vector<1x64x64xbf16> to vector<64x64xbf16>
    %cst_49 = arith.constant dense<0.000000e+00> : vector<80x64xf32>
    %45 = tpu.matmul %42, %44, %cst_49 {dimension_numbers = #tpu.dot_dimension_numbers<[1], [0], [0], [1], [0, 0, 1, 1], [], []>} : vector<80x64xbf16>, vector<64x64xbf16>, vector<80x64xf32> -> vector<80x64xf32>
    %46 = arith.addf %40, %45 : vector<80x64xf32>
    %c0_50 = arith.constant 0 : index
    %c0_51 = arith.constant 0 : index
    %c22 = arith.constant 22 : index
    %c0_52 = arith.constant 0 : index
    %47 = vector.load %arg2[%c0_50, %c0_51, %c22, %c0_52] : memref<1x1x110x64xbf16, #tpu.memory_space<vmem>>, vector<1x1x80x64xbf16>
    %48 = vector.shape_cast %47 : vector<1x1x80x64xbf16> to vector<80x64xbf16>
    %c8 = arith.constant 8 : index
    %c0_53 = arith.constant 0 : index
    %c0_54 = arith.constant 0 : index
    %49 = vector.load %arg3[%c8, %c0_53, %c0_54] : memref<9x64x64xbf16, #tpu.memory_space<vmem>>, vector<1x64x64xbf16>
    %50 = vector.shape_cast %49 : vector<1x64x64xbf16> to vector<64x64xbf16>
    %cst_55 = arith.constant dense<0.000000e+00> : vector<80x64xf32>
    %51 = tpu.matmul %48, %50, %cst_55 {dimension_numbers = #tpu.dot_dimension_numbers<[1], [0], [0], [1], [0, 0, 1, 1], [], []>} : vector<80x64xbf16>, vector<64x64xbf16>, vector<80x64xf32> -> vector<80x64xf32>
    %52 = arith.addf %46, %51 : vector<80x64xf32>
    %c0_56 = arith.constant 0 : index
    %c0_57 = arith.constant 0 : index
    %53 = vector.load %arg4[%c0_56, %c0_57] : memref<1x64xf32, #tpu.memory_space<vmem>>, vector<1x64xf32>
    %54 = vector.broadcast %53 : vector<1x64xf32> to vector<80x64xf32>
    %55 = arith.addf %52, %54 : vector<80x64xf32>
    %cst_58 = arith.constant 0.000000e+00 : f32
    %56 = vector.broadcast %cst_58 : f32 to vector<80x64xf32>
    %57 = arith.maximumf %55, %56 : vector<80x64xf32>
    %58 = arith.truncf %57 : vector<80x64xf32> to vector<80x64xbf16>
    %c0_59 = arith.constant 0 : index
    %c0_60 = arith.constant 0 : index
    %c0_61 = arith.constant 0 : index
    %59 = vector.load %arg5[%c0_59, %c0_60, %c0_61] : memref<1x80x64xbf16, #tpu.memory_space<vmem>>, vector<1x80x64xbf16>
    %60 = vector.shape_cast %59 : vector<1x80x64xbf16> to vector<80x64xbf16>
    %61 = vector.shape_cast %58 : vector<80x64xbf16> to vector<1x80x64xbf16>
    tpu.vector_store %arg5[%c0_59, %c0_60, %c0_61], %61 {strides = array<i32>} : memref<1x80x64xbf16, #tpu.memory_space<vmem>>, vector<1x80x64xbf16>,
    return
  }
  func.func @transform_0(%arg0: i32, %arg1: i32) -> (i32, i32, i32, i32) {
    %c0_i32 = arith.constant 0 : i32
    %c0_i32_0 = arith.constant 0 : i32
    %c0_i32_1 = arith.constant 0 : i32
    %c0_i32_2 = arith.constant 0 : i32
    return %arg0, %c0_i32, %c0_i32_0, %c0_i32_1 : i32, i32, i32, i32
  }
  func.func @transform_1(%arg0: i32, %arg1: i32) -> (i32, i32, i32) {
    %c0_i32 = arith.constant 0 : i32
    %c0_i32_0 = arith.constant 0 : i32
    %c0_i32_1 = arith.constant 0 : i32
    return %c0_i32, %c0_i32_0, %arg1 : i32, i32, i32
  }
  func.func @transform_2(%arg0: i32, %arg1: i32) -> (i32, i32) {
    %c0_i32 = arith.constant 0 : i32
    %c0_i32_0 = arith.constant 0 : i32
    return %c0_i32, %arg1 : i32, i32
  }
  func.func @transform_3(%arg0: i32, %arg1: i32) -> (i32, i32, i32) {
    %c0_i32 = arith.constant 0 : i32
    %c0_i32_0 = arith.constant 0 : i32
    return %arg0, %c0_i32, %arg1 : i32, i32, i32
  }
}

</mosaic_0001>

<llo_original>
// kernel: forward.14
$region0: #{forward.14}
  #allocation0 [shape = 'u32[]', space=smem, size = 0x4, offset = 0x4, fixed_abs, tag = 'smem constant byte address 0x4 - core index']
  #allocation1 [shape = 'u32[72,128]{1,0:T(1,128)}', space=vmem, size = 0x9000, scoped, tag = 'internal scratch']
  %s0 = inlined_call_operand.vmem [shape: bf16[2,4,72,32], index: 0, kind: input, shape index: {}]
  %s1 = inlined_call_operand.vmem [shape: bf16[1,32,64], index: 1, kind: input, shape index: {}]
  %s2 = inlined_call_operand.vmem [shape: f32[1,64], index: 2, kind: input, shape index: {}]
  %s3 = inlined_call_operand.vmem [shape: bf16[2,64,64], index: 3, kind: output, shape index: {}]
  %s4 = sld [smem:[#allocation0]]
  $region45: #{forward.14} parent=0
    _
  %s6 = ssub.s32 1, %s4
  %s7 = scalar_select 0, %s6, %s4
  loop: start=0, step=1, limit=4
  $region2: #{forward.14} parent=0 // loop_pre_header
    _
  $region3: #{forward.14} parent=0 // loop_header
    %s9 = sphi 0, %s13
    %p10 = scmp.ge.s32.totalorder %s9, 4
    %s16 = sphi 0, %s28
    %s17 = sphi 0, %s24
    %s18 = sphi 0, %s16
    %s19 = sphi 0, %s17
    %s20 = sphi 0, %s18
    %s21 = sphi 0, %s19
    %s31 = sphi 0, %s33
    %s34 = sphi 0, %s31
    %s35 = sphi 0, %s34
    %s51 = sphi 0, %s35
    %s57 = sphi 0, %s59
    %s60 = sphi 0, %s57
    %s61 = sphi 0, %s60
    %s77 = sphi 0, %s61
    %s83 = sphi 0, %s85
    %s86 = sphi 0, %s83
    %s87 = sphi 0, %s86
    %s103 = sphi 0, %s87
    %s111 = sphi 0, %s113
    %s114 = sphi 0, %s111
    %s115 = sphi 0, %s114
    %s131 = sphi 0, %s115
  $region4: #{forward.14} parent=0 // loop_header_branch
    %12 = sbr.rel (%p10) target = $region8
  $region5: #{forward.14} parent=0 // loop_body
    %s14 = ssub.s32 %s9, 1
    %s15 = ssub.s32 %s9, 2
    %s22 = sadd.s32 1, %s17
    %p23 = scmp.ge.s32.totalorder %s22, 1
    %s24 = scalar_select %p23, 0, %s22
    %s25 = sadd.s32 1, %s16
    %s26 = scalar_select %p23, %s25, %s16
    %p27 = scmp.ge.s32.totalorder %s26, 2
    %s28 = scalar_select %p27, 0, %s26
    %s29 = ssub.s32 %s16, %s28
    %p30 = scmp.eq.s32.totalorder %s29, 0
    %s32 = sadd.s32 %s31, 1
    %s33 = scalar_select %p30, %s31, %s32
    %p36 = pneg %p30
    %p37 = scmp.eq.s32.totalorder %s9, 1
    %p38 = por %p36, %p37
    %p39 = scmp.ne.s32.totalorder %s31, %s34
    %p40 = scmp.eq.s32.totalorder %s9, 0
    %p41 = por %p39, %p40
    %p42 = scmp.ne.s32.totalorder %s31, %s34
    %p43 = scmp.eq.s32.totalorder %s14, 1
    %p44 = por %p42, %p43
    %p45 = scmp.ne.s32.totalorder %s34, %s35
    %p46 = scmp.eq.s32.totalorder %s14, 0
    %p47 = por %p45, %p46
    %p48 = scmp.ne.s32.totalorder %s34, %s35
    %p49 = scmp.eq.s32.totalorder %s15, 1
    %p50 = por %p48, %p49
    %p52 = scmp.ne.s32.totalorder %s35, %s51
    %p53 = scmp.eq.s32.totalorder %s15, 0
    %p54 = por %p52, %p53
    %s55 = ssub.s32 %s17, %s24
    %p56 = scmp.eq.s32.totalorder %s55, 0
    %s58 = sadd.s32 %s57, 1
    %s59 = scalar_select %p56, %s57, %s58
    %p62 = pneg %p56
    %p63 = scmp.eq.s32.totalorder %s9, 1
    %p64 = por %p62, %p63
    %p65 = scmp.ne.s32.totalorder %s57, %s60
    %p66 = scmp.eq.s32.totalorder %s9, 0
    %p67 = por %p65, %p66
    %p68 = scmp.ne.s32.totalorder %s57, %s60
    %p69 = scmp.eq.s32.totalorder %s14, 1
    %p70 = por %p68, %p69
    %p71 = scmp.ne.s32.totalorder %s60, %s61
    %p72 = scmp.eq.s32.totalorder %s14, 0
    %p73 = por %p71, %p72
    %p74 = scmp.ne.s32.totalorder %s60, %s61
    %p75 = scmp.eq.s32.totalorder %s15, 1
    %p76 = por %p74, %p75
    %p78 = scmp.ne.s32.totalorder %s61, %s77
    %p79 = scmp.eq.s32.totalorder %s15, 0
    %p80 = por %p78, %p79
    %s81 = ssub.s32 %s17, %s24
    %p82 = scmp.eq.s32.totalorder %s81, 0
    %s84 = sadd.s32 %s83, 1
    %s85 = scalar_select %p82, %s83, %s84
    %p88 = pneg %p82
    %p89 = scmp.eq.s32.totalorder %s9, 1
    %p90 = por %p88, %p89
    %p91 = scmp.ne.s32.totalorder %s83, %s86
    %p92 = scmp.eq.s32.totalorder %s9, 0
    %p93 = por %p91, %p92
    %p94 = scmp.ne.s32.totalorder %s83, %s86
    %p95 = scmp.eq.s32.totalorder %s14, 1
    %p96 = por %p94, %p95
    %p97 = scmp.ne.s32.totalorder %s86, %s87
    %p98 = scmp.eq.s32.totalorder %s14, 0
    %p99 = por %p97, %p98
    %p100 = scmp.ne.s32.totalorder %s86, %s87
    %p101 = scmp.eq.s32.totalorder %s15, 1
    %p102 = por %p100, %p101
    %p104 = scmp.ne.s32.totalorder %s87, %s103
    %p105 = scmp.eq.s32.totalorder %s15, 0
    %p106 = por %p104, %p105
    %s107 = ssub.s32 %s16, %s28
    %s108 = ssub.s32 %s17, %s24
    %s109 = sor.u32 %s107, %s108
    %p110 = scmp.eq.s32.totalorder %s109, 0
    %s112 = sadd.s32 %s111, 1
    %s113 = scalar_select %p110, %s111, %s112
    %p116 = pneg %p110
    %p117 = scmp.eq.s32.totalorder %s9, 1
    %p118 = por %p116, %p117
    %p119 = scmp.ne.s32.totalorder %s111, %s114
    %p120 = scmp.eq.s32.totalorder %s9, 0
    %p121 = por %p119, %p120
    %p122 = scmp.ne.s32.totalorder %s111, %s114
    %p123 = scmp.eq.s32.totalorder %s14, 1
    %p124 = por %p122, %p123
    %p125 = scmp.ne.s32.totalorder %s114, %s115
    %p126 = scmp.eq.s32.totalorder %s14, 0
    %p127 = por %p125, %p126
    %p128 = scmp.ne.s32.totalorder %s114, %s115
    %p129 = scmp.eq.s32.totalorder %s15, 1
    %p130 = por %p128, %p129
    %p132 = scmp.ne.s32.totalorder %s115, %s131
    %p133 = scmp.eq.s32.totalorder %s15, 0
    %p134 = por %p132, %p133
    %p135 = scmp.le.s32.totalorder 1, %s9
    %p136 = scmp.lt.s32.totalorder %s9, 3
    %p137 = pnand %p135, %p136
    %p138 = pneg %p137
    // Predicated region
    $region9: #{forward.14} parent=5 // pred_check
      _
    $region10: #{forward.14} parent=5 // pred_check_branch
      %140 = sbr.rel (%p137) target = $region12
    $region11: #{forward.14} parent=5 // pred_region
      %s141 = ssub.s32 %s9, 1
      // Predicated region
      $region13: #{forward.14} parent=11 // pred_check
        %p142 = pneg %p73
      $region14: #{forward.14} parent=11 // pred_check_branch
        %144 = sbr.rel (%p142) target = $region16
      $region15: #{forward.14} parent=11 // pred_region
        %p145 = scmp.lt.s32.totalorder %s19, 0
        %s146 = scalar_select %p145, %s19, 0
        %s147 = smul.addr %s146, 4
        %s148 = scalar_lea.vmem %s1, %s147
      $region16: #{forward.14} parent=11 // pred_fallthru
        _
      // Predicated region
      $region17: #{forward.14} parent=11 // pred_check
        %p149 = pneg %p99
      $region18: #{forward.14} parent=11 // pred_check_branch
        %151 = sbr.rel (%p149) target = $region20
      $region19: #{forward.14} parent=11 // pred_region
        %p152 = scmp.lt.s32.totalorder %s19, 0
        %s153 = scalar_select %p152, %s19, 0
        %s154 = scalar_lea.vmem %s2, %s153
      $region20: #{forward.14} parent=11 // pred_fallthru
        _
    $region12: #{forward.14} parent=5 // pred_fallthru
      _
    %p155 = scmp.lt.s32.totalorder %s9, 2
    // Predicated region
    $region21: #{forward.14} parent=5 // pred_check
      %p156 = pneg %p155
    $region22: #{forward.14} parent=5 // pred_check_branch
      %158 = sbr.rel (%p156) target = $region24
    $region23: #{forward.14} parent=5 // pred_region
      // Predicated region
      $region25: #{forward.14} parent=23 // pred_check
        %p159 = pneg %p41
      $region26: #{forward.14} parent=23 // pred_check_branch
        %161 = sbr.rel (%p159) target = $region28
      $region27: #{forward.14} parent=23 // pred_region
        %p162 = scmp.lt.s32.totalorder %s16, 1
        %s163 = scalar_select %p162, %s16, 1
        %s164 = smul.addr %s163, 36
        %s165 = smul.addr %s164, 4
        %s166 = scalar_lea.vmem %s0, %s165
      $region28: #{forward.14} parent=23 // pred_fallthru
        _
    $region24: #{forward.14} parent=5 // pred_fallthru
      _
    %p167 = scmp.le.s32.totalorder 1, %s9
    %p168 = scmp.lt.s32.totalorder %s9, 3
    %p169 = pnand %p167, %p168
    %p170 = pneg %p169
    // Predicated region
    $region29: #{forward.14} parent=5 // pred_check
      _
    $region30: #{forward.14} parent=5 // pred_check_branch
      %172 = sbr.rel (%p169) target = $region32
    $region31: #{forward.14} parent=5 // pred_region
      %s173 = ssub.s32 %s9, 1
      %p174 = scmp.lt.s32.totalorder %s18, 1
      %s175 = scalar_select %p174, %s18, 1
      %s176 = smul.addr %s175, 36
      %s177 = smul.addr %s176, 4
      %s178 = scalar_lea.vmem %s0, %s177
      %p179 = pneg %p47
      %p180 = pneg %p44
      %p181 = scmp.lt.s32.totalorder %s19, 0
      %s182 = scalar_select %p181, %s19, 0
      %s183 = smul.addr %s182, 4
      %s184 = scalar_lea.vmem %s1, %s183
      %p185 = pneg %p73
      %p186 = pneg %p70
      %p187 = scmp.lt.s32.totalorder %s19, 0
      %s188 = scalar_select %p187, %s19, 0
      %s189 = scalar_lea.vmem %s2, %s188
      %p190 = pneg %p99
      %p191 = pneg %p96
      %p192 = pneg %p127
      %p193 = pneg %p124
      %p194 = scmp.lt.s32.totalorder %s18, 1
      %s195 = scalar_select %p194, %s18, 1
      %p196 = scmp.lt.s32.totalorder %s19, 0
      %s197 = scalar_select %p196, %s19, 0
      %s198 = smul.addr %s195, 8
      %s199 = sadd.s32 %s197, %s198
      %s200 = smul.addr %s199, 4
      %s201 = scalar_lea.vmem %s3, %s200
      %p202 = scmp.lt.s32.totalorder %s18, 1
      %s203 = scalar_select %p202, %s18, 1
      %s204 = smul.addr %s203, 36
      %s205 = smul.addr %s204, 4
      %s206 = scalar_lea.vmem %s0, %s205
      %p207 = scmp.lt.s32.totalorder %s19, 0
      %s208 = scalar_select %p207, %s19, 0
      %s209 = smul.addr %s208, 4
      %s210 = scalar_lea.vmem %s1, %s209
      %p211 = scmp.lt.s32.totalorder %s19, 0
      %s212 = scalar_select %p211, %s19, 0
      %s213 = scalar_lea.vmem %s2, %s212
      %p214 = scmp.lt.s32.totalorder %s18, 1
      %s215 = scalar_select %p214, %s18, 1
      %p216 = scmp.lt.s32.totalorder %s19, 0
      %s217 = scalar_select %p216, %s19, 0
      %s218 = smul.addr %s215, 8
      %s219 = sadd.s32 %s217, %s218
      %s220 = smul.addr %s219, 4
      %s221 = scalar_lea.vmem %s3, %s220
      %v223 = vld [vmem:[%s206] sm:$0xf]
      %v224 = vld [vmem:[%s206 + $0x4] sm:$0xf]
      %v225 = vld [vmem:[%s206 + $0x8] sm:$0xf]
      %v226 = vld [vmem:[%s206 + $0xc] sm:$0xf]
      %v227 = vld [vmem:[%s206 + $0x10] sm:$0xf]
      %v228 = vld [vmem:[%s206 + $0x14] sm:$0xf]
      %v229 = vld [vmem:[%s206 + $0x18] sm:$0xf]
      %v230 = vld [vmem:[%s206 + $0x1c] sm:$0xf]
      %v231 = vld [vmem:[%s210] sm:$0xf]
      %v232 = vld [vmem:[%s210 + $0x4] sm:$0xf]
      %v233 = vld [vmem:[%s210 + $0x8] sm:$0xf]
      %v234 = vld [vmem:[%s210 + $0xc] sm:$0xf]
      %v235 = vld [vmem:[%s213] sm:$0x1]
      %v237 = vperm.slane %v235, 0
      %v247 = vunpack.c.l.b16 %v223
      %v248 = vunpack.c.l.b16 %v224
      %v249 = vunpack.c.l.b16 %v225
      %v250 = vunpack.c.l.b16 %v226
      %v251 = vunpack.c.l.b16 %v227
      %v252 = vunpack.c.l.b16 %v228
      %v253 = vunpack.c.l.b16 %v229
      %v254 = vunpack.c.l.b16 %v230
      %v255 = vpack.c.b16 %v248, %v247
      %v256 = vpack.c.b16 %v250, %v249
      %v257 = vpack.c.b16 %v252, %v251
      %v258 = vpack.c.b16 %v254, %v253
      %v263 = vunpack.c.l.b16 %v231
      %v264 = vunpack.c.l.b16 %v232
      %v265 = vunpack.c.l.b16 %v233
      %v266 = vunpack.c.l.b16 %v234
      %v267 = vpack.c.b16 %v264, %v263
      %v268 = vpack.c.b16 %v266, %v265
      %vm271 = vcmask 261120
      %v273 = vsel %vm271, %v255, 0
      %v276 = vsel %vm271, %v256, 0
      %v279 = vsel %vm271, %v257, 0
      %v282 = vsel %vm271, %v258, 0
      %284 = vmatpush.bf16.msra.mxu0 0
      %285 = vmatpush.bf16.msra.mxu0 0
      %286 = vmatpush.bf16.msra.mxu0 0
      %287 = vmatpush.bf16.msra.mxu0 0
      %288 = vmatpush.bf16.msra.mxu0 0
      %289 = vmatpush.bf16.msra.mxu0 0
      %290 = vmatpush.bf16.msra.mxu0 %v268
      %291 = vmatpush.bf16.msra.mxu0 %v267
      %292 = vmatmul.bf16.gmra.mxu0 %v273
      %v293 = vpop.f32.mrf.mxu0
      %v294 = vadd.f32 %v237, %v293
      %v295 = vpop.f32.mrf.mxu0
      %v296 = vadd.f32 %v237, %v295
      %297 = vmatmul.bf16.gmra.mxu0 %v276
      %v298 = vpop.f32.mrf.mxu0
      %v299 = vadd.f32 %v237, %v298
      %v300 = vpop.f32.mrf.mxu0
      %v301 = vadd.f32 %v237, %v300
      %302 = vmatmul.bf16.gmra.mxu0 %v279
      %v303 = vpop.f32.mrf.mxu0
      %v304 = vadd.f32 %v237, %v303
      %v305 = vpop.f32.mrf.mxu0
      %v306 = vadd.f32 %v237, %v305
      %307 = vmatmul.bf16.gmra.mxu0 %v282
      %v308 = vpop.f32.mrf.mxu0
      %v309 = vadd.f32 %v237, %v308
      %v310 = vpop.f32.mrf.mxu0
      %v311 = vadd.f32 %v237, %v310
      %312 = vdwg.mxu0
      %v313 = vpack.c.bf16 %v294, %v294
      %v314 = vpack.c.bf16 %v296, %v296
      %v315 = vpack.c.bf16 %v299, %v299
      %v316 = vpack.c.bf16 %v301, %v301
      %v317 = vpack.c.bf16 %v304, %v304
      %v318 = vpack.c.bf16 %v306, %v306
      %v319 = vpack.c.bf16 %v309, %v309
      %v320 = vpack.c.bf16 %v311, %v311
      %vm321 = vcmask 519168
      %322 = vst.msk [vmem:[%s221] sm:$0xf] %vm321, %v313
      %323 = vst.msk [vmem:[%s221 + $0x4] sm:$0xf] %vm321, %v314
      %324 = vst.msk [vmem:[%s221 + $0x8] sm:$0xf] %vm321, %v315
      %325 = vst.msk [vmem:[%s221 + $0xc] sm:$0xf] %vm321, %v316
      %326 = vst.msk [vmem:[%s221 + $0x10] sm:$0xf] %vm321, %v317
      %327 = vst.msk [vmem:[%s221 + $0x14] sm:$0xf] %vm321, %v318
      %328 = vst.msk [vmem:[%s221 + $0x18] sm:$0xf] %vm321, %v319
      %329 = vst.msk [vmem:[%s221 + $0x1c] sm:$0xf] %vm321, %v320
      %p330 = scmp.lt.s32.totalorder %s18, 1
      %s331 = scalar_select %p330, %s18, 1
      %p332 = scmp.lt.s32.totalorder %s19, 0
      %s333 = scalar_select %p332, %s19, 0
      %s334 = smul.addr %s331, 8
      %s335 = sadd.s32 %s333, %s334
      %s336 = smul.addr %s335, 4
      %s337 = scalar_lea.vmem %s3, %s336
      // Predicated region
      $region33: #{forward.14} parent=31 // pred_check
        %p338 = pneg %p124
      $region34: #{forward.14} parent=31 // pred_check_branch
        %340 = sbr.rel (%p338) target = $region36
      $region35: #{forward.14} parent=31 // pred_region
        _
      $region36: #{forward.14} parent=31 // pred_fallthru
        _
    $region32: #{forward.14} parent=5 // pred_fallthru
      _
    %p341 = scmp.le.s32.totalorder 2, %s9
    // Predicated region
    $region37: #{forward.14} parent=5 // pred_check
      %p342 = pneg %p341
    $region38: #{forward.14} parent=5 // pred_check_branch
      %344 = sbr.rel (%p342) target = $region40
    $region39: #{forward.14} parent=5 // pred_region
      %s345 = ssub.s32 %s9, 2
      // Predicated region
      $region41: #{forward.14} parent=39 // pred_check
        %p346 = pneg %p130
      $region42: #{forward.14} parent=39 // pred_check_branch
        %348 = sbr.rel (%p346) target = $region44
      $region43: #{forward.14} parent=39 // pred_region
        %p349 = scmp.lt.s32.totalorder %s20, 1
        %s350 = scalar_select %p349, %s20, 1
        %p351 = scmp.lt.s32.totalorder %s21, 0
        %s352 = scalar_select %p351, %s21, 0
        %s353 = smul.addr %s350, 8
        %s354 = sadd.s32 %s352, %s353
        %s355 = smul.addr %s354, 4
        %s356 = scalar_lea.vmem %s3, %s355
      $region44: #{forward.14} parent=39 // pred_fallthru
        _
    $region40: #{forward.14} parent=5 // pred_fallthru
      _
  $region6: #{forward.14} parent=0 // loop_footer
    %s13 = sadd.s32 1, %s9
  $region7: #{forward.14} parent=0 // loop_footer_branch
    %8 = sbr.rel target = $region3
  $region8: #{forward.14} parent=0 // loop_exit
    _

// kernel: forward.9
$region0: #{forward.9}
  #allocation0 [shape = 'u32[]', space=smem, size = 0x4, offset = 0x4, fixed_abs, tag = 'smem constant byte address 0x4 - core index']
  #allocation1 [shape = 'u32[72,128]{1,0:T(1,128)}', space=vmem, size = 0x9000, scoped, tag = 'internal scratch']
  %s0 = inlined_call_operand.vmem [shape: bf16[2,4,72,32], index: 0, kind: input, shape index: {}]
  %s1 = inlined_call_operand.vmem [shape: bf16[4,32,64], index: 1, kind: input, shape index: {}]
  %s2 = inlined_call_operand.vmem [shape: f32[1,64], index: 2, kind: input, shape index: {}]
  %s3 = inlined_call_operand.vmem [shape: bf16[2,64,64], index: 3, kind: output, shape index: {}]
  %s4 = sld [smem:[#allocation0]]
  $region45: #{forward.9} parent=0
    _
  %s6 = ssub.s32 1, %s4
  %s7 = scalar_select 0, %s6, %s4
  loop: start=0, step=1, limit=4
  $region2: #{forward.9} parent=0 // loop_pre_header
    _
  $region3: #{forward.9} parent=0 // loop_header
    %s9 = sphi 0, %s13
    %p10 = scmp.ge.s32.totalorder %s9, 4
    %s16 = sphi 0, %s28
    %s17 = sphi 0, %s24
    %s18 = sphi 0, %s16
    %s19 = sphi 0, %s17
    %s20 = sphi 0, %s18
    %s21 = sphi 0, %s19
    %s31 = sphi 0, %s33
    %s34 = sphi 0, %s31
    %s35 = sphi 0, %s34
    %s51 = sphi 0, %s35
    %s57 = sphi 0, %s59
    %s60 = sphi 0, %s57
    %s61 = sphi 0, %s60
    %s77 = sphi 0, %s61
    %s83 = sphi 0, %s85
    %s86 = sphi 0, %s83
    %s87 = sphi 0, %s86
    %s103 = sphi 0, %s87
    %s111 = sphi 0, %s113
    %s114 = sphi 0, %s111
    %s115 = sphi 0, %s114
    %s131 = sphi 0, %s115
  $region4: #{forward.9} parent=0 // loop_header_branch
    %12 = sbr.rel (%p10) target = $region8
  $region5: #{forward.9} parent=0 // loop_body
    %s14 = ssub.s32 %s9, 1
    %s15 = ssub.s32 %s9, 2
    %s22 = sadd.s32 1, %s17
    %p23 = scmp.ge.s32.totalorder %s22, 1
    %s24 = scalar_select %p23, 0, %s22
    %s25 = sadd.s32 1, %s16
    %s26 = scalar_select %p23, %s25, %s16
    %p27 = scmp.ge.s32.totalorder %s26, 2
    %s28 = scalar_select %p27, 0, %s26
    %s29 = ssub.s32 %s16, %s28
    %p30 = scmp.eq.s32.totalorder %s29, 0
    %s32 = sadd.s32 %s31, 1
    %s33 = scalar_select %p30, %s31, %s32
    %p36 = pneg %p30
    %p37 = scmp.eq.s32.totalorder %s9, 1
    %p38 = por %p36, %p37
    %p39 = scmp.ne.s32.totalorder %s31, %s34
    %p40 = scmp.eq.s32.totalorder %s9, 0
    %p41 = por %p39, %p40
    %p42 = scmp.ne.s32.totalorder %s31, %s34
    %p43 = scmp.eq.s32.totalorder %s14, 1
    %p44 = por %p42, %p43
    %p45 = scmp.ne.s32.totalorder %s34, %s35
    %p46 = scmp.eq.s32.totalorder %s14, 0
    %p47 = por %p45, %p46
    %p48 = scmp.ne.s32.totalorder %s34, %s35
    %p49 = scmp.eq.s32.totalorder %s15, 1
    %p50 = por %p48, %p49
    %p52 = scmp.ne.s32.totalorder %s35, %s51
    %p53 = scmp.eq.s32.totalorder %s15, 0
    %p54 = por %p52, %p53
    %s55 = ssub.s32 %s17, %s24
    %p56 = scmp.eq.s32.totalorder %s55, 0
    %s58 = sadd.s32 %s57, 1
    %s59 = scalar_select %p56, %s57, %s58
    %p62 = pneg %p56
    %p63 = scmp.eq.s32.totalorder %s9, 1
    %p64 = por %p62, %p63
    %p65 = scmp.ne.s32.totalorder %s57, %s60
    %p66 = scmp.eq.s32.totalorder %s9, 0
    %p67 = por %p65, %p66
    %p68 = scmp.ne.s32.totalorder %s57, %s60
    %p69 = scmp.eq.s32.totalorder %s14, 1
    %p70 = por %p68, %p69
    %p71 = scmp.ne.s32.totalorder %s60, %s61
    %p72 = scmp.eq.s32.totalorder %s14, 0
    %p73 = por %p71, %p72
    %p74 = scmp.ne.s32.totalorder %s60, %s61
    %p75 = scmp.eq.s32.totalorder %s15, 1
    %p76 = por %p74, %p75
    %p78 = scmp.ne.s32.totalorder %s61, %s77
    %p79 = scmp.eq.s32.totalorder %s15, 0
    %p80 = por %p78, %p79
    %s81 = ssub.s32 %s17, %s24
    %p82 = scmp.eq.s32.totalorder %s81, 0
    %s84 = sadd.s32 %s83, 1
    %s85 = scalar_select %p82, %s83, %s84
    %p88 = pneg %p82
    %p89 = scmp.eq.s32.totalorder %s9, 1
    %p90 = por %p88, %p89
    %p91 = scmp.ne.s32.totalorder %s83, %s86
    %p92 = scmp.eq.s32.totalorder %s9, 0
    %p93 = por %p91, %p92
    %p94 = scmp.ne.s32.totalorder %s83, %s86
    %p95 = scmp.eq.s32.totalorder %s14, 1
    %p96 = por %p94, %p95
    %p97 = scmp.ne.s32.totalorder %s86, %s87
    %p98 = scmp.eq.s32.totalorder %s14, 0
    %p99 = por %p97, %p98
    %p100 = scmp.ne.s32.totalorder %s86, %s87
    %p101 = scmp.eq.s32.totalorder %s15, 1
    %p102 = por %p100, %p101
    %p104 = scmp.ne.s32.totalorder %s87, %s103
    %p105 = scmp.eq.s32.totalorder %s15, 0
    %p106 = por %p104, %p105
    %s107 = ssub.s32 %s16, %s28
    %s108 = ssub.s32 %s17, %s24
    %s109 = sor.u32 %s107, %s108
    %p110 = scmp.eq.s32.totalorder %s109, 0
    %s112 = sadd.s32 %s111, 1
    %s113 = scalar_select %p110, %s111, %s112
    %p116 = pneg %p110
    %p117 = scmp.eq.s32.totalorder %s9, 1
    %p118 = por %p116, %p117
    %p119 = scmp.ne.s32.totalorder %s111, %s114
    %p120 = scmp.eq.s32.totalorder %s9, 0
    %p121 = por %p119, %p120
    %p122 = scmp.ne.s32.totalorder %s111, %s114
    %p123 = scmp.eq.s32.totalorder %s14, 1
    %p124 = por %p122, %p123
    %p125 = scmp.ne.s32.totalorder %s114, %s115
    %p126 = scmp.eq.s32.totalorder %s14, 0
    %p127 = por %p125, %p126
    %p128 = scmp.ne.s32.totalorder %s114, %s115
    %p129 = scmp.eq.s32.totalorder %s15, 1
    %p130 = por %p128, %p129
    %p132 = scmp.ne.s32.totalorder %s115, %s131
    %p133 = scmp.eq.s32.totalorder %s15, 0
    %p134 = por %p132, %p133
    %p135 = scmp.le.s32.totalorder 1, %s9
    %p136 = scmp.lt.s32.totalorder %s9, 3
    %p137 = pnand %p135, %p136
    %p138 = pneg %p137
    // Predicated region
    $region9: #{forward.9} parent=5 // pred_check
      _
    $region10: #{forward.9} parent=5 // pred_check_branch
      %140 = sbr.rel (%p137) target = $region12
    $region11: #{forward.9} parent=5 // pred_region
      %s141 = ssub.s32 %s9, 1
      // Predicated region
      $region13: #{forward.9} parent=11 // pred_check
        %p142 = pneg %p73
      $region14: #{forward.9} parent=11 // pred_check_branch
        %144 = sbr.rel (%p142) target = $region16
      $region15: #{forward.9} parent=11 // pred_region
        %p145 = scmp.lt.s32.totalorder %s19, 0
        %s146 = scalar_select %p145, %s19, 0
        %s147 = smul.addr %s146, 4
        %s148 = scalar_lea.vmem %s1, %s147
      $region16: #{forward.9} parent=11 // pred_fallthru
        _
      // Predicated region
      $region17: #{forward.9} parent=11 // pred_check
        %p149 = pneg %p99
      $region18: #{forward.9} parent=11 // pred_check_branch
        %151 = sbr.rel (%p149) target = $region20
      $region19: #{forward.9} parent=11 // pred_region
        %p152 = scmp.lt.s32.totalorder %s19, 0
        %s153 = scalar_select %p152, %s19, 0
        %s154 = scalar_lea.vmem %s2, %s153
      $region20: #{forward.9} parent=11 // pred_fallthru
        _
    $region12: #{forward.9} parent=5 // pred_fallthru
      _
    %p155 = scmp.lt.s32.totalorder %s9, 2
    // Predicated region
    $region21: #{forward.9} parent=5 // pred_check
      %p156 = pneg %p155
    $region22: #{forward.9} parent=5 // pred_check_branch
      %158 = sbr.rel (%p156) target = $region24
    $region23: #{forward.9} parent=5 // pred_region
      // Predicated region
      $region25: #{forward.9} parent=23 // pred_check
        %p159 = pneg %p41
      $region26: #{forward.9} parent=23 // pred_check_branch
        %161 = sbr.rel (%p159) target = $region28
      $region27: #{forward.9} parent=23 // pred_region
        %p162 = scmp.lt.s32.totalorder %s16, 1
        %s163 = scalar_select %p162, %s16, 1
        %s164 = smul.addr %s163, 36
        %s165 = smul.addr %s164, 4
        %s166 = scalar_lea.vmem %s0, %s165
      $region28: #{forward.9} parent=23 // pred_fallthru
        _
    $region24: #{forward.9} parent=5 // pred_fallthru
      _
    %p167 = scmp.le.s32.totalorder 1, %s9
    %p168 = scmp.lt.s32.totalorder %s9, 3
    %p169 = pnand %p167, %p168
    %p170 = pneg %p169
    // Predicated region
    $region29: #{forward.9} parent=5 // pred_check
      _
    $region30: #{forward.9} parent=5 // pred_check_branch
      %172 = sbr.rel (%p169) target = $region32
    $region31: #{forward.9} parent=5 // pred_region
      %s173 = ssub.s32 %s9, 1
      %p174 = scmp.lt.s32.totalorder %s18, 1
      %s175 = scalar_select %p174, %s18, 1
      %s176 = smul.addr %s175, 36
      %s177 = smul.addr %s176, 4
      %s178 = scalar_lea.vmem %s0, %s177
      %p179 = pneg %p47
      %p180 = pneg %p44
      %p181 = scmp.lt.s32.totalorder %s19, 0
      %s182 = scalar_select %p181, %s19, 0
      %s183 = smul.addr %s182, 4
      %s184 = scalar_lea.vmem %s1, %s183
      %p185 = pneg %p73
      %p186 = pneg %p70
      %p187 = scmp.lt.s32.totalorder %s19, 0
      %s188 = scalar_select %p187, %s19, 0
      %s189 = scalar_lea.vmem %s2, %s188
      %p190 = pneg %p99
      %p191 = pneg %p96
      %p192 = pneg %p127
      %p193 = pneg %p124
      %p194 = scmp.lt.s32.totalorder %s18, 1
      %s195 = scalar_select %p194, %s18, 1
      %p196 = scmp.lt.s32.totalorder %s19, 0
      %s197 = scalar_select %p196, %s19, 0
      %s198 = smul.addr %s195, 8
      %s199 = sadd.s32 %s197, %s198
      %s200 = smul.addr %s199, 4
      %s201 = scalar_lea.vmem %s3, %s200
      %p202 = scmp.lt.s32.totalorder %s18, 1
      %s203 = scalar_select %p202, %s18, 1
      %s204 = smul.addr %s203, 36
      %s205 = smul.addr %s204, 4
      %s206 = scalar_lea.vmem %s0, %s205
      %p207 = scmp.lt.s32.totalorder %s19, 0
      %s208 = scalar_select %p207, %s19, 0
      %s209 = smul.addr %s208, 4
      %s210 = scalar_lea.vmem %s1, %s209
      %p211 = scmp.lt.s32.totalorder %s19, 0
      %s212 = scalar_select %p211, %s19, 0
      %s213 = scalar_lea.vmem %s2, %s212
      %p214 = scmp.lt.s32.totalorder %s18, 1
      %s215 = scalar_select %p214, %s18, 1
      %p216 = scmp.lt.s32.totalorder %s19, 0
      %s217 = scalar_select %p216, %s19, 0
      %s218 = smul.addr %s215, 8
      %s219 = sadd.s32 %s217, %s218
      %s220 = smul.addr %s219, 4
      %s221 = scalar_lea.vmem %s3, %s220
      %v223 = vld [vmem:[%s206] sm:$0xf]
      %v224 = vld [vmem:[%s206 + $0x4] sm:$0xf]
      %v225 = vld [vmem:[%s206 + $0x8] sm:$0xf]
      %v226 = vld [vmem:[%s206 + $0xc] sm:$0xf]
      %v227 = vld [vmem:[%s206 + $0x10] sm:$0xf]
      %v228 = vld [vmem:[%s206 + $0x14] sm:$0xf]
      %v229 = vld [vmem:[%s206 + $0x18] sm:$0xf]
      %v230 = vld [vmem:[%s206 + $0x1c] sm:$0xf]
      %v231 = vld [vmem:[%s210] sm:$0xf]
      %v232 = vld [vmem:[%s210 + $0x4] sm:$0xf]
      %v233 = vld [vmem:[%s210 + $0x8] sm:$0xf]
      %v234 = vld [vmem:[%s210 + $0xc] sm:$0xf]
      %s235 = scalar_lea.vmem %s206, 36
      %v236 = vld [vmem:[%s235] sm:$0xf]
      %v237 = vld [vmem:[%s235 + $0x4] sm:$0xf]
      %v238 = vld [vmem:[%s235 + $0x8] sm:$0xf]
      %v239 = vld [vmem:[%s235 + $0xc] sm:$0xf]
      %v240 = vld [vmem:[%s235 + $0x10] sm:$0xf]
      %v241 = vld [vmem:[%s235 + $0x14] sm:$0xf]
      %v242 = vld [vmem:[%s235 + $0x18] sm:$0xf]
      %v243 = vld [vmem:[%s235 + $0x1c] sm:$0xf]
      %s244 = scalar_lea.vmem %s210, 16
      %v245 = vld [vmem:[%s244] sm:$0xf]
      %v246 = vld [vmem:[%s244 + $0x4] sm:$0xf]
      %v247 = vld [vmem:[%s244 + $0x8] sm:$0xf]
      %v248 = vld [vmem:[%s244 + $0xc] sm:$0xf]
      %v257 = vunpack.c.l.b16 %v236
      %v258 = vunpack.c.l.b16 %v237
      %v259 = vunpack.c.l.b16 %v238
      %v260 = vunpack.c.l.b16 %v239
      %v261 = vunpack.c.l.b16 %v240
      %v262 = vunpack.c.l.b16 %v241
      %v263 = vunpack.c.l.b16 %v242
      %v264 = vunpack.c.l.b16 %v243
      %v265 = vpack.c.b16 %v258, %v257
      %v266 = vpack.c.b16 %v260, %v259
      %v267 = vpack.c.b16 %v262, %v261
      %v268 = vpack.c.b16 %v264, %v263
      %v273 = vunpack.c.l.b16 %v245
      %v274 = vunpack.c.l.b16 %v246
      %v275 = vunpack.c.l.b16 %v247
      %v276 = vunpack.c.l.b16 %v248
      %v277 = vpack.c.b16 %v274, %v273
      %v278 = vpack.c.b16 %v276, %v275
      %vm281 = vcmask 261120
      %v283 = vsel %vm281, %v265, 0
      %v286 = vsel %vm281, %v266, 0
      %v289 = vsel %vm281, %v267, 0
      %v292 = vsel %vm281, %v268, 0
      %294 = vmatpush.bf16.msra.mxu0 0
      %295 = vmatpush.bf16.msra.mxu0 0
      %296 = vmatpush.bf16.msra.mxu0 0
      %297 = vmatpush.bf16.msra.mxu0 0
      %298 = vmatpush.bf16.msra.mxu0 0
      %299 = vmatpush.bf16.msra.mxu0 0
      %300 = vmatpush.bf16.msra.mxu0 %v278
      %301 = vmatpush.bf16.msra.mxu0 %v277
      %302 = vmatmul.bf16.gmra.mxu0 %v283
      %v303 = vpop.f32.mrf.mxu0
      %v304 = vadd.f32 0.0, %v303
      %v305 = vpop.f32.mrf.mxu0
      %v306 = vadd.f32 0.0, %v305
      %307 = vmatmul.bf16.gmra.mxu0 %v286
      %v308 = vpop.f32.mrf.mxu0
      %v309 = vadd.f32 0.0, %v308
      %v310 = vpop.f32.mrf.mxu0
      %v311 = vadd.f32 0.0, %v310
      %312 = vmatmul.bf16.gmra.mxu0 %v289
      %v313 = vpop.f32.mrf.mxu0
      %v314 = vadd.f32 0.0, %v313
      %v315 = vpop.f32.mrf.mxu0
      %v316 = vadd.f32 0.0, %v315
      %317 = vmatmul.bf16.gmra.mxu0 %v292
      %v318 = vpop.f32.mrf.mxu0
      %v319 = vadd.f32 0.0, %v318
      %v320 = vpop.f32.mrf.mxu0
      %v321 = vadd.f32 0.0, %v320
      %322 = vdwg.mxu0
      %v331 = vunpack.c.l.b16 %v223
      %v332 = vunpack.c.l.b16 %v224
      %v333 = vunpack.c.l.b16 %v225
      %v334 = vunpack.c.l.b16 %v226
      %v335 = vunpack.c.l.b16 %v227
      %v336 = vunpack.c.l.b16 %v228
      %v337 = vunpack.c.l.b16 %v229
      %v338 = vunpack.c.l.b16 %v230
      %v339 = vpack.c.b16 %v332, %v331
      %v340 = vpack.c.b16 %v334, %v333
      %v341 = vpack.c.b16 %v336, %v335
      %v342 = vpack.c.b16 %v338, %v337
      %v347 = vunpack.c.l.b16 %v231
      %v348 = vunpack.c.l.b16 %v232
      %v349 = vunpack.c.l.b16 %v233
      %v350 = vunpack.c.l.b16 %v234
      %v351 = vpack.c.b16 %v348, %v347
      %v352 = vpack.c.b16 %v350, %v349
      %v356 = vsel %vm281, %v339, 0
      %v359 = vsel %vm281, %v340, 0
      %v362 = vsel %vm281, %v341, 0
      %v365 = vsel %vm281, %v342, 0
      %367 = vmatpush.bf16.msra.mxu0 0
      %368 = vmatpush.bf16.msra.mxu0 0
      %369 = vmatpush.bf16.msra.mxu0 0
      %370 = vmatpush.bf16.msra.mxu0 0
      %371 = vmatpush.bf16.msra.mxu0 0
      %372 = vmatpush.bf16.msra.mxu0 0
      %373 = vmatpush.bf16.msra.mxu0 %v352
      %374 = vmatpush.bf16.msra.mxu0 %v351
      %375 = vmatmul.bf16.gmra.mxu0 %v356
      %v376 = vpop.f32.mrf.mxu0
      %v377 = vadd.f32 %v304, %v376
      %v378 = vpop.f32.mrf.mxu0
      %v379 = vadd.f32 %v306, %v378
      %380 = vmatmul.bf16.gmra.mxu0 %v359
      %v381 = vpop.f32.mrf.mxu0
      %v382 = vadd.f32 %v309, %v381
      %v383 = vpop.f32.mrf.mxu0
      %v384 = vadd.f32 %v311, %v383
      %385 = vmatmul.bf16.gmra.mxu0 %v362
      %v386 = vpop.f32.mrf.mxu0
      %v387 = vadd.f32 %v314, %v386
      %v388 = vpop.f32.mrf.mxu0
      %v389 = vadd.f32 %v316, %v388
      %390 = vmatmul.bf16.gmra.mxu0 %v365
      %v391 = vpop.f32.mrf.mxu0
      %v392 = vadd.f32 %v319, %v391
      %v393 = vpop.f32.mrf.mxu0
      %v394 = vadd.f32 %v321, %v393
      %395 = vdwg.mxu0
      %s396 = scalar_lea.vmem %s206, 72
      %v397 = vld [vmem:[%s396] sm:$0xf]
      %v398 = vld [vmem:[%s396 + $0x4] sm:$0xf]
      %v399 = vld [vmem:[%s396 + $0x8] sm:$0xf]
      %v400 = vld [vmem:[%s396 + $0xc] sm:$0xf]
      %v401 = vld [vmem:[%s396 + $0x10] sm:$0xf]
      %v402 = vld [vmem:[%s396 + $0x14] sm:$0xf]
      %v403 = vld [vmem:[%s396 + $0x18] sm:$0xf]
      %v404 = vld [vmem:[%s396 + $0x1c] sm:$0xf]
      %s405 = scalar_lea.vmem %s210, 32
      %v406 = vld [vmem:[%s405] sm:$0xf]
      %v407 = vld [vmem:[%s405 + $0x4] sm:$0xf]
      %v408 = vld [vmem:[%s405 + $0x8] sm:$0xf]
      %v409 = vld [vmem:[%s405 + $0xc] sm:$0xf]
      %v418 = vunpack.c.l.b16 %v397
      %v419 = vunpack.c.l.b16 %v398
      %v420 = vunpack.c.l.b16 %v399
      %v421 = vunpack.c.l.b16 %v400
      %v422 = vunpack.c.l.b16 %v401
      %v423 = vunpack.c.l.b16 %v402
      %v424 = vunpack.c.l.b16 %v403
      %v425 = vunpack.c.l.b16 %v404
      %v426 = vpack.c.b16 %v419, %v418
      %v427 = vpack.c.b16 %v421, %v420
      %v428 = vpack.c.b16 %v423, %v422
      %v429 = vpack.c.b16 %v425, %v424
      %v434 = vunpack.c.l.b16 %v406
      %v435 = vunpack.c.l.b16 %v407
      %v436 = vunpack.c.l.b16 %v408
      %v437 = vunpack.c.l.b16 %v409
      %v438 = vpack.c.b16 %v435, %v434
      %v439 = vpack.c.b16 %v437, %v436
      %v443 = vsel %vm281, %v426, 0
      %v446 = vsel %vm281, %v427, 0
      %v449 = vsel %vm281, %v428, 0
      %v452 = vsel %vm281, %v429, 0
      %454 = vmatpush.bf16.msra.mxu0 0
      %455 = vmatpush.bf16.msra.mxu0 0
      %456 = vmatpush.bf16.msra.mxu0 0
      %457 = vmatpush.bf16.msra.mxu0 0
      %458 = vmatpush.bf16.msra.mxu0 0
      %459 = vmatpush.bf16.msra.mxu0 0
      %460 = vmatpush.bf16.msra.mxu0 %v439
      %461 = vmatpush.bf16.msra.mxu0 %v438
      %462 = vmatmul.bf16.gmra.mxu0 %v443
      %v463 = vpop.f32.mrf.mxu0
      %v464 = vadd.f32 0.0, %v463
      %v465 = vpop.f32.mrf.mxu0
      %v466 = vadd.f32 0.0, %v465
      %467 = vmatmul.bf16.gmra.mxu0 %v446
      %v468 = vpop.f32.mrf.mxu0
      %v469 = vadd.f32 0.0, %v468
      %v470 = vpop.f32.mrf.mxu0
      %v471 = vadd.f32 0.0, %v470
      %472 = vmatmul.bf16.gmra.mxu0 %v449
      %v473 = vpop.f32.mrf.mxu0
      %v474 = vadd.f32 0.0, %v473
      %v475 = vpop.f32.mrf.mxu0
      %v476 = vadd.f32 0.0, %v475
      %477 = vmatmul.bf16.gmra.mxu0 %v452
      %v478 = vpop.f32.mrf.mxu0
      %v479 = vadd.f32 0.0, %v478
      %v480 = vpop.f32.mrf.mxu0
      %v481 = vadd.f32 0.0, %v480
      %482 = vdwg.mxu0
      %v483 = vadd.f32 %v377, %v464
      %v484 = vadd.f32 %v379, %v466
      %v485 = vadd.f32 %v382, %v469
      %v486 = vadd.f32 %v384, %v471
      %v487 = vadd.f32 %v387, %v474
      %v488 = vadd.f32 %v389, %v476
      %v489 = vadd.f32 %v392, %v479
      %v490 = vadd.f32 %v394, %v481
      %s491 = scalar_lea.vmem %s206, 108
      %v492 = vld [vmem:[%s491] sm:$0xf]
      %v493 = vld [vmem:[%s491 + $0x4] sm:$0xf]
      %v494 = vld [vmem:[%s491 + $0x8] sm:$0xf]
      %v495 = vld [vmem:[%s491 + $0xc] sm:$0xf]
      %v496 = vld [vmem:[%s491 + $0x10] sm:$0xf]
      %v497 = vld [vmem:[%s491 + $0x14] sm:$0xf]
      %v498 = vld [vmem:[%s491 + $0x18] sm:$0xf]
      %v499 = vld [vmem:[%s491 + $0x1c] sm:$0xf]
      %s500 = scalar_lea.vmem %s210, 48
      %v501 = vld [vmem:[%s500] sm:$0xf]
      %v502 = vld [vmem:[%s500 + $0x4] sm:$0xf]
      %v503 = vld [vmem:[%s500 + $0x8] sm:$0xf]
      %v504 = vld [vmem:[%s500 + $0xc] sm:$0xf]
      %v513 = vunpack.c.l.b16 %v492
      %v514 = vunpack.c.l.b16 %v493
      %v515 = vunpack.c.l.b16 %v494
      %v516 = vunpack.c.l.b16 %v495
      %v517 = vunpack.c.l.b16 %v496
      %v518 = vunpack.c.l.b16 %v497
      %v519 = vunpack.c.l.b16 %v498
      %v520 = vunpack.c.l.b16 %v499
      %v521 = vpack.c.b16 %v514, %v513
      %v522 = vpack.c.b16 %v516, %v515
      %v523 = vpack.c.b16 %v518, %v517
      %v524 = vpack.c.b16 %v520, %v519
      %v529 = vunpack.c.l.b16 %v501
      %v530 = vunpack.c.l.b16 %v502
      %v531 = vunpack.c.l.b16 %v503
      %v532 = vunpack.c.l.b16 %v504
      %v533 = vpack.c.b16 %v530, %v529
      %v534 = vpack.c.b16 %v532, %v531
      %v538 = vsel %vm281, %v521, 0
      %v541 = vsel %vm281, %v522, 0
      %v544 = vsel %vm281, %v523, 0
      %v547 = vsel %vm281, %v524, 0
      %549 = vmatpush.bf16.msra.mxu0 0
      %550 = vmatpush.bf16.msra.mxu0 0
      %551 = vmatpush.bf16.msra.mxu0 0
      %552 = vmatpush.bf16.msra.mxu0 0
      %553 = vmatpush.bf16.msra.mxu0 0
      %554 = vmatpush.bf16.msra.mxu0 0
      %555 = vmatpush.bf16.msra.mxu0 %v534
      %556 = vmatpush.bf16.msra.mxu0 %v533
      %557 = vmatmul.bf16.gmra.mxu0 %v538
      %v558 = vpop.f32.mrf.mxu0
      %v559 = vadd.f32 0.0, %v558
      %v560 = vpop.f32.mrf.mxu0
      %v561 = vadd.f32 0.0, %v560
      %562 = vmatmul.bf16.gmra.mxu0 %v541
      %v563 = vpop.f32.mrf.mxu0
      %v564 = vadd.f32 0.0, %v563
      %v565 = vpop.f32.mrf.mxu0
      %v566 = vadd.f32 0.0, %v565
      %567 = vmatmul.bf16.gmra.mxu0 %v544
      %v568 = vpop.f32.mrf.mxu0
      %v569 = vadd.f32 0.0, %v568
      %v570 = vpop.f32.mrf.mxu0
      %v571 = vadd.f32 0.0, %v570
      %572 = vmatmul.bf16.gmra.mxu0 %v547
      %v573 = vpop.f32.mrf.mxu0
      %v574 = vadd.f32 0.0, %v573
      %v575 = vpop.f32.mrf.mxu0
      %v576 = vadd.f32 0.0, %v575
      %577 = vdwg.mxu0
      %v578 = vadd.f32 %v483, %v559
      %v579 = vadd.f32 %v484, %v561
      %v580 = vadd.f32 %v485, %v564
      %v581 = vadd.f32 %v486, %v566
      %v582 = vadd.f32 %v487, %v569
      %v583 = vadd.f32 %v488, %v571
      %v584 = vadd.f32 %v489, %v574
      %v585 = vadd.f32 %v490, %v576
      %v586 = vld [vmem:[%s213] sm:$0x1]
      %v588 = vperm.slane %v586, 0
      %v590 = vadd.f32 %v578, %v588
      %v591 = vadd.f32 %v579, %v588
      %v592 = vadd.f32 %v580, %v588
      %v593 = vadd.f32 %v581, %v588
      %v594 = vadd.f32 %v582, %v588
      %v595 = vadd.f32 %v583, %v588
      %v596 = vadd.f32 %v584, %v588
      %v597 = vadd.f32 %v585, %v588
      %v598 = vpack.c.bf16 %v590, %v590
      %v599 = vpack.c.bf16 %v591, %v591
      %v600 = vpack.c.bf16 %v592, %v592
      %v601 = vpack.c.bf16 %v593, %v593
      %v602 = vpack.c.bf16 %v594, %v594
      %v603 = vpack.c.bf16 %v595, %v595
      %v604 = vpack.c.bf16 %v596, %v596
      %v605 = vpack.c.bf16 %v597, %v597
      %vm606 = vcmask 519168
      %607 = vst.msk [vmem:[%s221] sm:$0xf] %vm606, %v598
      %608 = vst.msk [vmem:[%s221 + $0x4] sm:$0xf] %vm606, %v599
      %609 = vst.msk [vmem:[%s221 + $0x8] sm:$0xf] %vm606, %v600
      %610 = vst.msk [vmem:[%s221 + $0xc] sm:$0xf] %vm606, %v601
      %611 = vst.msk [vmem:[%s221 + $0x10] sm:$0xf] %vm606, %v602
      %612 = vst.msk [vmem:[%s221 + $0x14] sm:$0xf] %vm606, %v603
      %613 = vst.msk [vmem:[%s221 + $0x18] sm:$0xf] %vm606, %v604
      %614 = vst.msk [vmem:[%s221 + $0x1c] sm:$0xf] %vm606, %v605
      %p615 = scmp.lt.s32.totalorder %s18, 1
      %s616 = scalar_select %p615, %s18, 1
      %p617 = scmp.lt.s32.totalorder %s19, 0
      %s618 = scalar_select %p617, %s19, 0
      %s619 = smul.addr %s616, 8
      %s620 = sadd.s32 %s618, %s619
      %s621 = smul.addr %s620, 4
      %s622 = scalar_lea.vmem %s3, %s621
      // Predicated region
      $region33: #{forward.9} parent=31 // pred_check
        %p623 = pneg %p124
      $region34: #{forward.9} parent=31 // pred_check_branch
        %625 = sbr.rel (%p623) target = $region36
      $region35: #{forward.9} parent=31 // pred_region
        _
      $region36: #{forward.9} parent=31 // pred_fallthru
        _
    $region32: #{forward.9} parent=5 // pred_fallthru
      _
    %p626 = scmp.le.s32.totalorder 2, %s9
    // Predicated region
    $region37: #{forward.9} parent=5 // pred_check
      %p627 = pneg %p626
    $region38: #{forward.9} parent=5 // pred_check_branch
      %629 = sbr.rel (%p627) target = $region40
    $region39: #{forward.9} parent=5 // pred_region
      %s630 = ssub.s32 %s9, 2
      // Predicated region
      $region41: #{forward.9} parent=39 // pred_check
        %p631 = pneg %p130
      $region42: #{forward.9} parent=39 // pred_check_branch
        %633 = sbr.rel (%p631) target = $region44
      $region43: #{forward.9} parent=39 // pred_region
        %p634 = scmp.lt.s32.totalorder %s20, 1
        %s635 = scalar_select %p634, %s20, 1
        %p636 = scmp.lt.s32.totalorder %s21, 0
        %s637 = scalar_select %p636, %s21, 0
        %s638 = smul.addr %s635, 8
        %s639 = sadd.s32 %s637, %s638
        %s640 = smul.addr %s639, 4
        %s641 = scalar_lea.vmem %s3, %s640
      $region44: #{forward.9} parent=39 // pred_fallthru
        _
    $region40: #{forward.9} parent=5 // pred_fallthru
      _
  $region6: #{forward.9} parent=0 // loop_footer
    %s13 = sadd.s32 1, %s9
  $region7: #{forward.9} parent=0 // loop_footer_branch
    %8 = sbr.rel target = $region3
  $region8: #{forward.9} parent=0 // loop_exit
    _

// kernel: forward.13
$region0: #{forward.13}
  #allocation0 [shape = 'u32[]', space=smem, size = 0x4, offset = 0x4, fixed_abs, tag = 'smem constant byte address 0x4 - core index']
  #allocation1 [shape = 'u32[72,128]{1,0:T(1,128)}', space=vmem, size = 0x9000, scoped, tag = 'internal scratch']
  %s0 = inlined_call_operand.vmem [shape: bf16[2,4,90,32], index: 0, kind: input, shape index: {}]
  %s1 = inlined_call_operand.vmem [shape: bf16[9,32,64], index: 1, kind: input, shape index: {}]
  %s2 = inlined_call_operand.vmem [shape: f32[1,64], index: 2, kind: input, shape index: {}]
  %s3 = inlined_call_operand.vmem [shape: bf16[2,72,64], index: 3, kind: output, shape index: {}]
  %s4 = sld [smem:[#allocation0]]
  $region45: #{forward.13} parent=0
    _
  %s6 = ssub.s32 1, %s4
  %s7 = scalar_select 0, %s6, %s4
  loop: start=0, step=1, limit=4
  $region2: #{forward.13} parent=0 // loop_pre_header
    _
  $region3: #{forward.13} parent=0 // loop_header
    %s9 = sphi 0, %s13
    %p10 = scmp.ge.s32.totalorder %s9, 4
    %s16 = sphi 0, %s28
    %s17 = sphi 0, %s24
    %s18 = sphi 0, %s16
    %s19 = sphi 0, %s17
    %s20 = sphi 0, %s18
    %s21 = sphi 0, %s19
    %s31 = sphi 0, %s33
    %s34 = sphi 0, %s31
    %s35 = sphi 0, %s34
    %s51 = sphi 0, %s35
    %s57 = sphi 0, %s59
    %s60 = sphi 0, %s57
    %s61 = sphi 0, %s60
    %s77 = sphi 0, %s61
    %s83 = sphi 0, %s85
    %s86 = sphi 0, %s83
    %s87 = sphi 0, %s86
    %s103 = sphi 0, %s87
    %s111 = sphi 0, %s113
    %s114 = sphi 0, %s111
    %s115 = sphi 0, %s114
    %s131 = sphi 0, %s115
  $region4: #{forward.13} parent=0 // loop_header_branch
    %12 = sbr.rel (%p10) target = $region8
  $region5: #{forward.13} parent=0 // loop_body
    %s14 = ssub.s32 %s9, 1
    %s15 = ssub.s32 %s9, 2
    %s22 = sadd.s32 1, %s17
    %p23 = scmp.ge.s32.totalorder %s22, 1
    %s24 = scalar_select %p23, 0, %s22
    %s25 = sadd.s32 1, %s16
    %s26 = scalar_select %p23, %s25, %s16
    %p27 = scmp.ge.s32.totalorder %s26, 2
    %s28 = scalar_select %p27, 0, %s26
    %s29 = ssub.s32 %s16, %s28
    %p30 = scmp.eq.s32.totalorder %s29, 0
    %s32 = sadd.s32 %s31, 1
    %s33 = scalar_select %p30, %s31, %s32
    %p36 = pneg %p30
    %p37 = scmp.eq.s32.totalorder %s9, 1
    %p38 = por %p36, %p37
    %p39 = scmp.ne.s32.totalorder %s31, %s34
    %p40 = scmp.eq.s32.totalorder %s9, 0
    %p41 = por %p39, %p40
    %p42 = scmp.ne.s32.totalorder %s31, %s34
    %p43 = scmp.eq.s32.totalorder %s14, 1
    %p44 = por %p42, %p43
    %p45 = scmp.ne.s32.totalorder %s34, %s35
    %p46 = scmp.eq.s32.totalorder %s14, 0
    %p47 = por %p45, %p46
    %p48 = scmp.ne.s32.totalorder %s34, %s35
    %p49 = scmp.eq.s32.totalorder %s15, 1
    %p50 = por %p48, %p49
    %p52 = scmp.ne.s32.totalorder %s35, %s51
    %p53 = scmp.eq.s32.totalorder %s15, 0
    %p54 = por %p52, %p53
    %s55 = ssub.s32 %s17, %s24
    %p56 = scmp.eq.s32.totalorder %s55, 0
    %s58 = sadd.s32 %s57, 1
    %s59 = scalar_select %p56, %s57, %s58
    %p62 = pneg %p56
    %p63 = scmp.eq.s32.totalorder %s9, 1
    %p64 = por %p62, %p63
    %p65 = scmp.ne.s32.totalorder %s57, %s60
    %p66 = scmp.eq.s32.totalorder %s9, 0
    %p67 = por %p65, %p66
    %p68 = scmp.ne.s32.totalorder %s57, %s60
    %p69 = scmp.eq.s32.totalorder %s14, 1
    %p70 = por %p68, %p69
    %p71 = scmp.ne.s32.totalorder %s60, %s61
    %p72 = scmp.eq.s32.totalorder %s14, 0
    %p73 = por %p71, %p72
    %p74 = scmp.ne.s32.totalorder %s60, %s61
    %p75 = scmp.eq.s32.totalorder %s15, 1
    %p76 = por %p74, %p75
    %p78 = scmp.ne.s32.totalorder %s61, %s77
    %p79 = scmp.eq.s32.totalorder %s15, 0
    %p80 = por %p78, %p79
    %s81 = ssub.s32 %s17, %s24
    %p82 = scmp.eq.s32.totalorder %s81, 0
    %s84 = sadd.s32 %s83, 1
    %s85 = scalar_select %p82, %s83, %s84
    %p88 = pneg %p82
    %p89 = scmp.eq.s32.totalorder %s9, 1
    %p90 = por %p88, %p89
    %p91 = scmp.ne.s32.totalorder %s83, %s86
    %p92 = scmp.eq.s32.totalorder %s9, 0
    %p93 = por %p91, %p92
    %p94 = scmp.ne.s32.totalorder %s83, %s86
    %p95 = scmp.eq.s32.totalorder %s14, 1
    %p96 = por %p94, %p95
    %p97 = scmp.ne.s32.totalorder %s86, %s87
    %p98 = scmp.eq.s32.totalorder %s14, 0
    %p99 = por %p97, %p98
    %p100 = scmp.ne.s32.totalorder %s86, %s87
    %p101 = scmp.eq.s32.totalorder %s15, 1
    %p102 = por %p100, %p101
    %p104 = scmp.ne.s32.totalorder %s87, %s103
    %p105 = scmp.eq.s32.totalorder %s15, 0
    %p106 = por %p104, %p105
    %s107 = ssub.s32 %s16, %s28
    %s108 = ssub.s32 %s17, %s24
    %s109 = sor.u32 %s107, %s108
    %p110 = scmp.eq.s32.totalorder %s109, 0
    %s112 = sadd.s32 %s111, 1
    %s113 = scalar_select %p110, %s111, %s112
    %p116 = pneg %p110
    %p117 = scmp.eq.s32.totalorder %s9, 1
    %p118 = por %p116, %p117
    %p119 = scmp.ne.s32.totalorder %s111, %s114
    %p120 = scmp.eq.s32.totalorder %s9, 0
    %p121 = por %p119, %p120
    %p122 = scmp.ne.s32.totalorder %s111, %s114
    %p123 = scmp.eq.s32.totalorder %s14, 1
    %p124 = por %p122, %p123
    %p125 = scmp.ne.s32.totalorder %s114, %s115
    %p126 = scmp.eq.s32.totalorder %s14, 0
    %p127 = por %p125, %p126
    %p128 = scmp.ne.s32.totalorder %s114, %s115
    %p129 = scmp.eq.s32.totalorder %s15, 1
    %p130 = por %p128, %p129
    %p132 = scmp.ne.s32.totalorder %s115, %s131
    %p133 = scmp.eq.s32.totalorder %s15, 0
    %p134 = por %p132, %p133
    %p135 = scmp.le.s32.totalorder 1, %s9
    %p136 = scmp.lt.s32.totalorder %s9, 3
    %p137 = pnand %p135, %p136
    %p138 = pneg %p137
    // Predicated region
    $region9: #{forward.13} parent=5 // pred_check
      _
    $region10: #{forward.13} parent=5 // pred_check_branch
      %140 = sbr.rel (%p137) target = $region12
    $region11: #{forward.13} parent=5 // pred_region
      %s141 = ssub.s32 %s9, 1
      // Predicated region
      $region13: #{forward.13} parent=11 // pred_check
        %p142 = pneg %p73
      $region14: #{forward.13} parent=11 // pred_check_branch
        %144 = sbr.rel (%p142) target = $region16
      $region15: #{forward.13} parent=11 // pred_region
        %p145 = scmp.lt.s32.totalorder %s19, 0
        %s146 = scalar_select %p145, %s19, 0
        %s147 = smul.addr %s146, 4
        %s148 = scalar_lea.vmem %s1, %s147
      $region16: #{forward.13} parent=11 // pred_fallthru
        _
      // Predicated region
      $region17: #{forward.13} parent=11 // pred_check
        %p149 = pneg %p99
      $region18: #{forward.13} parent=11 // pred_check_branch
        %151 = sbr.rel (%p149) target = $region20
      $region19: #{forward.13} parent=11 // pred_region
        %p152 = scmp.lt.s32.totalorder %s19, 0
        %s153 = scalar_select %p152, %s19, 0
        %s154 = scalar_lea.vmem %s2, %s153
      $region20: #{forward.13} parent=11 // pred_fallthru
        _
    $region12: #{forward.13} parent=5 // pred_fallthru
      _
    %p155 = scmp.lt.s32.totalorder %s9, 2
    // Predicated region
    $region21: #{forward.13} parent=5 // pred_check
      %p156 = pneg %p155
    $region22: #{forward.13} parent=5 // pred_check_branch
      %158 = sbr.rel (%p156) target = $region24
    $region23: #{forward.13} parent=5 // pred_region
      // Predicated region
      $region25: #{forward.13} parent=23 // pred_check
        %p159 = pneg %p41
      $region26: #{forward.13} parent=23 // pred_check_branch
        %161 = sbr.rel (%p159) target = $region28
      $region27: #{forward.13} parent=23 // pred_region
        %p162 = scmp.lt.s32.totalorder %s16, 1
        %s163 = scalar_select %p162, %s16, 1
        %s164 = smul.addr %s163, 48
        %s165 = smul.addr %s164, 4
        %s166 = scalar_lea.vmem %s0, %s165
      $region28: #{forward.13} parent=23 // pred_fallthru
        _
    $region24: #{forward.13} parent=5 // pred_fallthru
      _
    %p167 = scmp.le.s32.totalorder 1, %s9
    %p168 = scmp.lt.s32.totalorder %s9, 3
    %p169 = pnand %p167, %p168
    %p170 = pneg %p169
    // Predicated region
    $region29: #{forward.13} parent=5 // pred_check
      _
    $region30: #{forward.13} parent=5 // pred_check_branch
      %172 = sbr.rel (%p169) target = $region32
    $region31: #{forward.13} parent=5 // pred_region
      %s173 = ssub.s32 %s9, 1
      %p174 = scmp.lt.s32.totalorder %s18, 1
      %s175 = scalar_select %p174, %s18, 1
      %s176 = smul.addr %s175, 48
      %s177 = smul.addr %s176, 4
      %s178 = scalar_lea.vmem %s0, %s177
      %p179 = pneg %p47
      %p180 = pneg %p44
      %p181 = scmp.lt.s32.totalorder %s19, 0
      %s182 = scalar_select %p181, %s19, 0
      %s183 = smul.addr %s182, 4
      %s184 = scalar_lea.vmem %s1, %s183
      %p185 = pneg %p73
      %p186 = pneg %p70
      %p187 = scmp.lt.s32.totalorder %s19, 0
      %s188 = scalar_select %p187, %s19, 0
      %s189 = scalar_lea.vmem %s2, %s188
      %p190 = pneg %p99
      %p191 = pneg %p96
      %p192 = pneg %p127
      %p193 = pneg %p124
      %p194 = scmp.lt.s32.totalorder %s18, 1
      %s195 = scalar_select %p194, %s18, 1
      %p196 = scmp.lt.s32.totalorder %s19, 0
      %s197 = scalar_select %p196, %s19, 0
      %s198 = smul.addr %s195, 9
      %s199 = sadd.s32 %s197, %s198
      %s200 = smul.addr %s199, 4
      %s201 = scalar_lea.vmem %s3, %s200
      %p202 = scmp.lt.s32.totalorder %s18, 1
      %s203 = scalar_select %p202, %s18, 1
      %s204 = smul.addr %s203, 48
      %s205 = smul.addr %s204, 4
      %s206 = scalar_lea.vmem %s0, %s205
      %p207 = scmp.lt.s32.totalorder %s19, 0
      %s208 = scalar_select %p207, %s19, 0
      %s209 = smul.addr %s208, 4
      %s210 = scalar_lea.vmem %s1, %s209
      %p211 = scmp.lt.s32.totalorder %s19, 0
      %s212 = scalar_select %p211, %s19, 0
      %s213 = scalar_lea.vmem %s2, %s212
      %p214 = scmp.lt.s32.totalorder %s18, 1
      %s215 = scalar_select %p214, %s18, 1
      %p216 = scmp.lt.s32.totalorder %s19, 0
      %s217 = scalar_select %p216, %s19, 0
      %s218 = smul.addr %s215, 9
      %s219 = sadd.s32 %s217, %s218
      %s220 = smul.addr %s219, 4
      %s221 = scalar_lea.vmem %s3, %s220
      %v223 = vld [vmem:[%s206] sm:$0xf]
      %v224 = vld [vmem:[%s206 + $0x4] sm:$0xf]
      %v225 = vld [vmem:[%s206 + $0x8] sm:$0xf]
      %v226 = vld [vmem:[%s206 + $0xc] sm:$0xf]
      %v227 = vld [vmem:[%s206 + $0x10] sm:$0xf]
      %v228 = vld [vmem:[%s206 + $0x14] sm:$0xf]
      %v229 = vld [vmem:[%s206 + $0x18] sm:$0xf]
      %v230 = vld [vmem:[%s206 + $0x1c] sm:$0xf]
      %v231 = vld [vmem:[%s206 + $0x20] sm:$0xf]
      %v232 = vld [vmem:[%s210] sm:$0xf]
      %v233 = vld [vmem:[%s210 + $0x4] sm:$0xf]
      %v234 = vld [vmem:[%s210 + $0x8] sm:$0xf]
      %v235 = vld [vmem:[%s210 + $0xc] sm:$0xf]
      %s236 = scalar_lea.vmem %s206, 48
      %v237 = vld [vmem:[%s236] sm:$0xf]
      %v238 = vld [vmem:[%s236 + $0x4] sm:$0xf]
      %v239 = vld [vmem:[%s236 + $0x8] sm:$0xf]
      %v240 = vld [vmem:[%s236 + $0xc] sm:$0xf]
      %v241 = vld [vmem:[%s236 + $0x10] sm:$0xf]
      %v242 = vld [vmem:[%s236 + $0x14] sm:$0xf]
      %v243 = vld [vmem:[%s236 + $0x18] sm:$0xf]
      %v244 = vld [vmem:[%s236 + $0x1c] sm:$0xf]
      %v245 = vld [vmem:[%s236 + $0x20] sm:$0xf]
      %s246 = scalar_lea.vmem %s210, 16
      %v247 = vld [vmem:[%s246] sm:$0xf]
      %v248 = vld [vmem:[%s246 + $0x4] sm:$0xf]
      %v249 = vld [vmem:[%s246 + $0x8] sm:$0xf]
      %v250 = vld [vmem:[%s246 + $0xc] sm:$0xf]
      %v260 = vunpack.c.l.b16 %v237
      %v261 = vunpack.c.l.b16 %v238
      %v262 = vunpack.c.l.b16 %v239
      %v263 = vunpack.c.l.b16 %v240
      %v264 = vunpack.c.l.b16 %v241
      %v265 = vunpack.c.l.b16 %v242
      %v266 = vunpack.c.l.b16 %v243
      %v267 = vunpack.c.l.b16 %v244
      %v268 = vunpack.c.l.b16 %v245
      %v269 = vpack.c.b16 %v261, %v260
      %v270 = vpack.c.b16 %v263, %v262
      %v271 = vpack.c.b16 %v265, %v264
      %v272 = vpack.c.b16 %v267, %v266
      %v273 = vpack.c.b16 %v268, %v268
      %v278 = vunpack.c.l.b16 %v247
      %v279 = vunpack.c.l.b16 %v248
      %v280 = vunpack.c.l.b16 %v249
      %v281 = vunpack.c.l.b16 %v250
      %v282 = vpack.c.b16 %v279, %v278
      %v283 = vpack.c.b16 %v281, %v280
      %vm286 = vcmask 261120
      %v288 = vsel %vm286, %v269, 0
      %v291 = vsel %vm286, %v270, 0
      %v294 = vsel %vm286, %v271, 0
      %v297 = vsel %vm286, %v272, 0
      %v300 = vsel %vm286, %v273, 0
      %302 = vmatpush.bf16.msra.mxu0 0
      %303 = vmatpush.bf16.msra.mxu0 0
      %304 = vmatpush.bf16.msra.mxu0 0
      %305 = vmatpush.bf16.msra.mxu0 0
      %306 = vmatpush.bf16.msra.mxu0 0
      %307 = vmatpush.bf16.msra.mxu0 0
      %308 = vmatpush.bf16.msra.mxu0 %v283
      %309 = vmatpush.bf16.msra.mxu0 %v282
      %310 = vmatmul.bf16.gmra.mxu0 %v288
      %v311 = vpop.f32.mrf.mxu0
      %v312 = vadd.f32 0.0, %v311
      %v313 = vpop.f32.mrf.mxu0
      %v314 = vadd.f32 0.0, %v313
      %315 = vmatmul.bf16.gmra.mxu0 %v291
      %v316 = vpop.f32.mrf.mxu0
      %v317 = vadd.f32 0.0, %v316
      %v318 = vpop.f32.mrf.mxu0
      %v319 = vadd.f32 0.0, %v318
      %320 = vmatmul.bf16.gmra.mxu0 %v294
      %v321 = vpop.f32.mrf.mxu0
      %v322 = vadd.f32 0.0, %v321
      %v323 = vpop.f32.mrf.mxu0
      %v324 = vadd.f32 0.0, %v323
      %325 = vmatmul.bf16.gmra.mxu0 %v297
      %v326 = vpop.f32.mrf.mxu0
      %v327 = vadd.f32 0.0, %v326
      %v328 = vpop.f32.mrf.mxu0
      %v329 = vadd.f32 0.0, %v328
      %330 = vmatmul.bf16.gmra.mxu0 %v300
      %v331 = vpop.f32.mrf.mxu0
      %v332 = vadd.f32 0.0, %v331
      %v333 = vpop.f32.mrf.mxu0
      %334 = vdwg.mxu0
      %v344 = vunpack.c.l.b16 %v223
      %v345 = vunpack.c.l.b16 %v224
      %v346 = vunpack.c.l.b16 %v225
      %v347 = vunpack.c.l.b16 %v226
      %v348 = vunpack.c.l.b16 %v227
      %v349 = vunpack.c.l.b16 %v228
      %v350 = vunpack.c.l.b16 %v229
      %v351 = vunpack.c.l.b16 %v230
      %v352 = vunpack.c.l.b16 %v231
      %v353 = vpack.c.b16 %v345, %v344
      %v354 = vpack.c.b16 %v347, %v346
      %v355 = vpack.c.b16 %v349, %v348
      %v356 = vpack.c.b16 %v351, %v350
      %v357 = vpack.c.b16 %v352, %v352
      %v362 = vunpack.c.l.b16 %v232
      %v363 = vunpack.c.l.b16 %v233
      %v364 = vunpack.c.l.b16 %v234
      %v365 = vunpack.c.l.b16 %v235
      %v366 = vpack.c.b16 %v363, %v362
      %v367 = vpack.c.b16 %v365, %v364
      %v371 = vsel %vm286, %v353, 0
      %v374 = vsel %vm286, %v354, 0
      %v377 = vsel %vm286, %v355, 0
      %v380 = vsel %vm286, %v356, 0
      %v383 = vsel %vm286, %v357, 0
      %385 = vmatpush.bf16.msra.mxu0 0
      %386 = vmatpush.bf16.msra.mxu0 0
      %387 = vmatpush.bf16.msra.mxu0 0
      %388 = vmatpush.bf16.msra.mxu0 0
      %389 = vmatpush.bf16.msra.mxu0 0
      %390 = vmatpush.bf16.msra.mxu0 0
      %391 = vmatpush.bf16.msra.mxu0 %v367
      %392 = vmatpush.bf16.msra.mxu0 %v366
      %393 = vmatmul.bf16.gmra.mxu0 %v371
      %v394 = vpop.f32.mrf.mxu0
      %v395 = vadd.f32 %v312, %v394
      %v396 = vpop.f32.mrf.mxu0
      %v397 = vadd.f32 %v314, %v396
      %398 = vmatmul.bf16.gmra.mxu0 %v374
      %v399 = vpop.f32.mrf.mxu0
      %v400 = vadd.f32 %v317, %v399
      %v401 = vpop.f32.mrf.mxu0
      %v402 = vadd.f32 %v319, %v401
      %403 = vmatmul.bf16.gmra.mxu0 %v377
      %v404 = vpop.f32.mrf.mxu0
      %v405 = vadd.f32 %v322, %v404
      %v406 = vpop.f32.mrf.mxu0
      %v407 = vadd.f32 %v324, %v406
      %408 = vmatmul.bf16.gmra.mxu0 %v380
      %v409 = vpop.f32.mrf.mxu0
      %v410 = vadd.f32 %v327, %v409
      %v411 = vpop.f32.mrf.mxu0
      %v412 = vadd.f32 %v329, %v411
      %413 = vmatmul.bf16.gmra.mxu0 %v383
      %v414 = vpop.f32.mrf.mxu0
      %v415 = vadd.f32 %v332, %v414
      %v416 = vpop.f32.mrf.mxu0
      %417 = vdwg.mxu0
      %v418 = vld [vmem:[%s206] sm:$0xf]
      %v419 = vld [vmem:[%s206 + $0x4] sm:$0xf]
      %v420 = vld [vmem:[%s206 + $0x8] sm:$0xf]
      %v421 = vld [vmem:[%s206 + $0xc] sm:$0xf]
      %v422 = vld [vmem:[%s206 + $0x10] sm:$0xf]
      %v423 = vld [vmem:[%s206 + $0x14] sm:$0xf]
      %v424 = vld [vmem:[%s206 + $0x18] sm:$0xf]
      %v425 = vld [vmem:[%s206 + $0x1c] sm:$0xf]
      %v426 = vld [vmem:[%s206 + $0x20] sm:$0xf]
      %v427 = vld [vmem:[%s206 + $0x24] sm:$0x1]
      %s428 = scalar_lea.vmem %s210, 32
      %v429 = vld [vmem:[%s428] sm:$0xf]
      %v430 = vld [vmem:[%s428 + $0x4] sm:$0xf]
      %v431 = vld [vmem:[%s428 + $0x8] sm:$0xf]
      %v432 = vld [vmem:[%s428 + $0xc] sm:$0xf]
      %v443 = vunpack.c.l.b16 %v418
      %v444 = vunpack.c.l.b16 %v419
      %v445 = vunpack.c.l.b16 %v420
      %v446 = vunpack.c.l.b16 %v421
      %v447 = vunpack.c.l.b16 %v422
      %v448 = vunpack.c.l.b16 %v423
      %v449 = vunpack.c.l.b16 %v424
      %v450 = vunpack.c.l.b16 %v425
      %v451 = vunpack.c.l.b16 %v426
      %v452 = vunpack.c.l.b16 %v427
      %v453 = vpack.c.b16 %v444, %v443
      %v454 = vpack.c.b16 %v446, %v445
      %v455 = vpack.c.b16 %v448, %v447
      %v456 = vpack.c.b16 %v450, %v449
      %v457 = vpack.c.b16 %v452, %v451
      %vm458 = vsmask.f32 7424
      %v460 = vshrl.u32 %v453, 16
      %v462 = vshll.u32 %v453, 16
      %v464 = vrot.slane %v462, 1
      %v465 = vor.u32 %v460, %v464
      %v467 = vshll.u32 %v454, 16
      %v469 = vrot.slane %v467, 1
      %v470 = vsel %vm458, %v465, %v469
      %v471 = vshrl.u32 %v454, 16
      %v473 = vor.u32 %v471, %v469
      %v475 = vshll.u32 %v455, 16
      %v477 = vrot.slane %v475, 1
      %v478 = vsel %vm458, %v473, %v477
      %v479 = vshrl.u32 %v455, 16
      %v481 = vor.u32 %v479, %v477
      %v483 = vshll.u32 %v456, 16
      %v485 = vrot.slane %v483, 1
      %v486 = vsel %vm458, %v481, %v485
      %v487 = vshrl.u32 %v456, 16
      %v489 = vor.u32 %v487, %v485
      %v491 = vshll.u32 %v457, 16
      %v493 = vrot.slane %v491, 1
      %v494 = vsel %vm458, %v489, %v493
      %v495 = vshrl.u32 %v457, 16
      %v497 = vor.u32 %v495, %v493
      %v502 = vunpack.c.l.b16 %v429
      %v503 = vunpack.c.l.b16 %v430
      %v504 = vunpack.c.l.b16 %v431
      %v505 = vunpack.c.l.b16 %v432
      %v506 = vpack.c.b16 %v503, %v502
      %v507 = vpack.c.b16 %v505, %v504
      %v511 = vsel %vm286, %v470, 0
      %v514 = vsel %vm286, %v478, 0
      %v517 = vsel %vm286, %v486, 0
      %v520 = vsel %vm286, %v494, 0
      %v523 = vsel %vm286, %v497, 0
      %525 = vmatpush.bf16.msra.mxu0 0
      %526 = vmatpush.bf16.msra.mxu0 0
      %527 = vmatpush.bf16.msra.mxu0 0
      %528 = vmatpush.bf16.msra.mxu0 0
      %529 = vmatpush.bf16.msra.mxu0 0
      %530 = vmatpush.bf16.msra.mxu0 0
      %531 = vmatpush.bf16.msra.mxu0 %v507
      %532 = vmatpush.bf16.msra.mxu0 %v506
      %533 = vmatmul.bf16.gmra.mxu0 %v511
      %v534 = vpop.f32.mrf.mxu0
      %v535 = vadd.f32 0.0, %v534
      %v536 = vpop.f32.mrf.mxu0
      %v537 = vadd.f32 0.0, %v536
      %538 = vmatmul.bf16.gmra.mxu0 %v514
      %v539 = vpop.f32.mrf.mxu0
      %v540 = vadd.f32 0.0, %v539
      %v541 = vpop.f32.mrf.mxu0
      %v542 = vadd.f32 0.0, %v541
      %543 = vmatmul.bf16.gmra.mxu0 %v517
      %v544 = vpop.f32.mrf.mxu0
      %v545 = vadd.f32 0.0, %v544
      %v546 = vpop.f32.mrf.mxu0
      %v547 = vadd.f32 0.0, %v546
      %548 = vmatmul.bf16.gmra.mxu0 %v520
      %v549 = vpop.f32.mrf.mxu0
      %v550 = vadd.f32 0.0, %v549
      %v551 = vpop.f32.mrf.mxu0
      %v552 = vadd.f32 0.0, %v551
      %553 = vmatmul.bf16.gmra.mxu0 %v523
      %v554 = vpop.f32.mrf.mxu0
      %v555 = vadd.f32 0.0, %v554
      %v556 = vpop.f32.mrf.mxu0
      %557 = vdwg.mxu0
      %v558 = vadd.f32 %v395, %v535
      %v559 = vadd.f32 %v397, %v537
      %v560 = vadd.f32 %v400, %v540
      %v561 = vadd.f32 %v402, %v542
      %v562 = vadd.f32 %v405, %v545
      %v563 = vadd.f32 %v407, %v547
      %v564 = vadd.f32 %v410, %v550
      %v565 = vadd.f32 %v412, %v552
      %v566 = vadd.f32 %v415, %v555
      %s567 = scalar_lea.vmem %s206, 96
      %v568 = vld [vmem:[%s567] sm:$0xf]
      %v569 = vld [vmem:[%s567 + $0x4] sm:$0xf]
      %v570 = vld [vmem:[%s567 + $0x8] sm:$0xf]
      %v571 = vld [vmem:[%s567 + $0xc] sm:$0xf]
      %v572 = vld [vmem:[%s567 + $0x10] sm:$0xf]
      %v573 = vld [vmem:[%s567 + $0x14] sm:$0xf]
      %v574 = vld [vmem:[%s567 + $0x18] sm:$0xf]
      %v575 = vld [vmem:[%s567 + $0x1c] sm:$0xf]
      %v576 = vld [vmem:[%s567 + $0x20] sm:$0xf]
      %s577 = scalar_lea.vmem %s210, 48
      %v578 = vld [vmem:[%s577] sm:$0xf]
      %v579 = vld [vmem:[%s577 + $0x4] sm:$0xf]
      %v580 = vld [vmem:[%s577 + $0x8] sm:$0xf]
      %v581 = vld [vmem:[%s577 + $0xc] sm:$0xf]
      %v591 = vunpack.c.l.b16 %v568
      %v592 = vunpack.c.l.b16 %v569
      %v593 = vunpack.c.l.b16 %v570
      %v594 = vunpack.c.l.b16 %v571
      %v595 = vunpack.c.l.b16 %v572
      %v596 = vunpack.c.l.b16 %v573
      %v597 = vunpack.c.l.b16 %v574
      %v598 = vunpack.c.l.b16 %v575
      %v599 = vunpack.c.l.b16 %v576
      %v600 = vpack.c.b16 %v592, %v591
      %v601 = vpack.c.b16 %v594, %v593
      %v602 = vpack.c.b16 %v596, %v595
      %v603 = vpack.c.b16 %v598, %v597
      %v604 = vpack.c.b16 %v599, %v599
      %v609 = vunpack.c.l.b16 %v578
      %v610 = vunpack.c.l.b16 %v579
      %v611 = vunpack.c.l.b16 %v580
      %v612 = vunpack.c.l.b16 %v581
      %v613 = vpack.c.b16 %v610, %v609
      %v614 = vpack.c.b16 %v612, %v611
      %v618 = vsel %vm286, %v600, 0
      %v621 = vsel %vm286, %v601, 0
      %v624 = vsel %vm286, %v602, 0
      %v627 = vsel %vm286, %v603, 0
      %v630 = vsel %vm286, %v604, 0
      %632 = vmatpush.bf16.msra.mxu0 0
      %633 = vmatpush.bf16.msra.mxu0 0
      %634 = vmatpush.bf16.msra.mxu0 0
      %635 = vmatpush.bf16.msra.mxu0 0
      %636 = vmatpush.bf16.msra.mxu0 0
      %637 = vmatpush.bf16.msra.mxu0 0
      %638 = vmatpush.bf16.msra.mxu0 %v614
      %639 = vmatpush.bf16.msra.mxu0 %v613
      %640 = vmatmul.bf16.gmra.mxu0 %v618
      %v641 = vpop.f32.mrf.mxu0
      %v642 = vadd.f32 0.0, %v641
      %v643 = vpop.f32.mrf.mxu0
      %v644 = vadd.f32 0.0, %v643
      %645 = vmatmul.bf16.gmra.mxu0 %v621
      %v646 = vpop.f32.mrf.mxu0
      %v647 = vadd.f32 0.0, %v646
      %v648 = vpop.f32.mrf.mxu0
      %v649 = vadd.f32 0.0, %v648
      %650 = vmatmul.bf16.gmra.mxu0 %v624
      %v651 = vpop.f32.mrf.mxu0
      %v652 = vadd.f32 0.0, %v651
      %v653 = vpop.f32.mrf.mxu0
      %v654 = vadd.f32 0.0, %v653
      %655 = vmatmul.bf16.gmra.mxu0 %v627
      %v656 = vpop.f32.mrf.mxu0
      %v657 = vadd.f32 0.0, %v656
      %v658 = vpop.f32.mrf.mxu0
      %v659 = vadd.f32 0.0, %v658
      %660 = vmatmul.bf16.gmra.mxu0 %v630
      %v661 = vpop.f32.mrf.mxu0
      %v662 = vadd.f32 0.0, %v661
      %v663 = vpop.f32.mrf.mxu0
      %664 = vdwg.mxu0
      %v665 = vadd.f32 %v558, %v642
      %v666 = vadd.f32 %v559, %v644
      %v667 = vadd.f32 %v560, %v647
      %v668 = vadd.f32 %v561, %v649
      %v669 = vadd.f32 %v562, %v652
      %v670 = vadd.f32 %v563, %v654
      %v671 = vadd.f32 %v564, %v657
      %v672 = vadd.f32 %v565, %v659
      %v673 = vadd.f32 %v566, %v662
      %s674 = scalar_lea.vmem %s206, 144
      %v675 = vld [vmem:[%s674] sm:$0xf]
      %v676 = vld [vmem:[%s674 + $0x4] sm:$0xf]
      %v677 = vld [vmem:[%s674 + $0x8] sm:$0xf]
      %v678 = vld [vmem:[%s674 + $0xc] sm:$0xf]
      %v679 = vld [vmem:[%s674 + $0x10] sm:$0xf]
      %v680 = vld [vmem:[%s674 + $0x14] sm:$0xf]
      %v681 = vld [vmem:[%s674 + $0x18] sm:$0xf]
      %v682 = vld [vmem:[%s674 + $0x1c] sm:$0xf]
      %v683 = vld [vmem:[%s674 + $0x20] sm:$0xf]
      %s684 = scalar_lea.vmem %s210, 64
      %v685 = vld [vmem:[%s684] sm:$0xf]
      %v686 = vld [vmem:[%s684 + $0x4] sm:$0xf]
      %v687 = vld [vmem:[%s684 + $0x8] sm:$0xf]
      %v688 = vld [vmem:[%s684 + $0xc] sm:$0xf]
      %v698 = vunpack.c.l.b16 %v675
      %v699 = vunpack.c.l.b16 %v676
      %v700 = vunpack.c.l.b16 %v677
      %v701 = vunpack.c.l.b16 %v678
      %v702 = vunpack.c.l.b16 %v679
      %v703 = vunpack.c.l.b16 %v680
      %v704 = vunpack.c.l.b16 %v681
      %v705 = vunpack.c.l.b16 %v682
      %v706 = vunpack.c.l.b16 %v683
      %v707 = vpack.c.b16 %v699, %v698
      %v708 = vpack.c.b16 %v701, %v700
      %v709 = vpack.c.b16 %v703, %v702
      %v710 = vpack.c.b16 %v705, %v704
      %v711 = vpack.c.b16 %v706, %v706
      %v716 = vunpack.c.l.b16 %v685
      %v717 = vunpack.c.l.b16 %v686
      %v718 = vunpack.c.l.b16 %v687
      %v719 = vunpack.c.l.b16 %v688
      %v720 = vpack.c.b16 %v717, %v716
      %v721 = vpack.c.b16 %v719, %v718
      %v725 = vsel %vm286, %v707, 0
      %v728 = vsel %vm286, %v708, 0
      %v731 = vsel %vm286, %v709, 0
      %v734 = vsel %vm286, %v710, 0
      %v737 = vsel %vm286, %v711, 0
      %739 = vmatpush.bf16.msra.mxu0 0
      %740 = vmatpush.bf16.msra.mxu0 0
      %741 = vmatpush.bf16.msra.mxu0 0
      %742 = vmatpush.bf16.msra.mxu0 0
      %743 = vmatpush.bf16.msra.mxu0 0
      %744 = vmatpush.bf16.msra.mxu0 0
      %745 = vmatpush.bf16.msra.mxu0 %v721
      %746 = vmatpush.bf16.msra.mxu0 %v720
      %747 = vmatmul.bf16.gmra.mxu0 %v725
      %v748 = vpop.f32.mrf.mxu0
      %v749 = vadd.f32 0.0, %v748
      %v750 = vpop.f32.mrf.mxu0
      %v751 = vadd.f32 0.0, %v750
      %752 = vmatmul.bf16.gmra.mxu0 %v728
      %v753 = vpop.f32.mrf.mxu0
      %v754 = vadd.f32 0.0, %v753
      %v755 = vpop.f32.mrf.mxu0
      %v756 = vadd.f32 0.0, %v755
      %757 = vmatmul.bf16.gmra.mxu0 %v731
      %v758 = vpop.f32.mrf.mxu0
      %v759 = vadd.f32 0.0, %v758
      %v760 = vpop.f32.mrf.mxu0
      %v761 = vadd.f32 0.0, %v760
      %762 = vmatmul.bf16.gmra.mxu0 %v734
      %v763 = vpop.f32.mrf.mxu0
      %v764 = vadd.f32 0.0, %v763
      %v765 = vpop.f32.mrf.mxu0
      %v766 = vadd.f32 0.0, %v765
      %767 = vmatmul.bf16.gmra.mxu0 %v737
      %v768 = vpop.f32.mrf.mxu0
      %v769 = vadd.f32 0.0, %v768
      %v770 = vpop.f32.mrf.mxu0
      %771 = vdwg.mxu0
      %v772 = vadd.f32 %v665, %v749
      %v773 = vadd.f32 %v666, %v751
      %v774 = vadd.f32 %v667, %v754
      %v775 = vadd.f32 %v668, %v756
      %v776 = vadd.f32 %v669, %v759
      %v777 = vadd.f32 %v670, %v761
      %v778 = vadd.f32 %v671, %v764
      %v779 = vadd.f32 %v672, %v766
      %v780 = vadd.f32 %v673, %v769
      %v781 = vld [vmem:[%s567] sm:$0xf]
      %v782 = vld [vmem:[%s567 + $0x4] sm:$0xf]
      %v783 = vld [vmem:[%s567 + $0x8] sm:$0xf]
      %v784 = vld [vmem:[%s567 + $0xc] sm:$0xf]
      %v785 = vld [vmem:[%s567 + $0x10] sm:$0xf]
      %v786 = vld [vmem:[%s567 + $0x14] sm:$0xf]
      %v787 = vld [vmem:[%s567 + $0x18] sm:$0xf]
      %v788 = vld [vmem:[%s567 + $0x1c] sm:$0xf]
      %v789 = vld [vmem:[%s567 + $0x20] sm:$0xf]
      %v790 = vld [vmem:[%s567 + $0x24] sm:$0x1]
      %s791 = scalar_lea.vmem %s210, 80
      %v792 = vld [vmem:[%s791] sm:$0xf]
      %v793 = vld [vmem:[%s791 + $0x4] sm:$0xf]
      %v794 = vld [vmem:[%s791 + $0x8] sm:$0xf]
      %v795 = vld [vmem:[%s791 + $0xc] sm:$0xf]
      %v806 = vunpack.c.l.b16 %v781
      %v807 = vunpack.c.l.b16 %v782
      %v808 = vunpack.c.l.b16 %v783
      %v809 = vunpack.c.l.b16 %v784
      %v810 = vunpack.c.l.b16 %v785
      %v811 = vunpack.c.l.b16 %v786
      %v812 = vunpack.c.l.b16 %v787
      %v813 = vunpack.c.l.b16 %v788
      %v814 = vunpack.c.l.b16 %v789
      %v815 = vunpack.c.l.b16 %v790
      %v816 = vpack.c.b16 %v807, %v806
      %v817 = vpack.c.b16 %v809, %v808
      %v818 = vpack.c.b16 %v811, %v810
      %v819 = vpack.c.b16 %v813, %v812
      %v820 = vpack.c.b16 %v815, %v814
      %v822 = vshrl.u32 %v816, 16
      %v824 = vshll.u32 %v816, 16
      %v826 = vrot.slane %v824, 1
      %v827 = vor.u32 %v822, %v826
      %v829 = vshll.u32 %v817, 16
      %v831 = vrot.slane %v829, 1
      %v832 = vsel %vm458, %v827, %v831
      %v833 = vshrl.u32 %v817, 16
      %v835 = vor.u32 %v833, %v831
      %v837 = vshll.u32 %v818, 16
      %v839 = vrot.slane %v837, 1
      %v840 = vsel %vm458, %v835, %v839
      %v841 = vshrl.u32 %v818, 16
      %v843 = vor.u32 %v841, %v839
      %v845 = vshll.u32 %v819, 16
      %v847 = vrot.slane %v845, 1
      %v848 = vsel %vm458, %v843, %v847
      %v849 = vshrl.u32 %v819, 16
      %v851 = vor.u32 %v849, %v847
      %v853 = vshll.u32 %v820, 16
      %v855 = vrot.slane %v853, 1
      %v856 = vsel %vm458, %v851, %v855
      %v857 = vshrl.u32 %v820, 16
      %v859 = vor.u32 %v857, %v855
      %v864 = vunpack.c.l.b16 %v792
      %v865 = vunpack.c.l.b16 %v793
      %v866 = vunpack.c.l.b16 %v794
      %v867 = vunpack.c.l.b16 %v795
      %v868 = vpack.c.b16 %v865, %v864
      %v869 = vpack.c.b16 %v867, %v866
      %v873 = vsel %vm286, %v832, 0
      %v876 = vsel %vm286, %v840, 0
      %v879 = vsel %vm286, %v848, 0
      %v882 = vsel %vm286, %v856, 0
      %v885 = vsel %vm286, %v859, 0
      %887 = vmatpush.bf16.msra.mxu0 0
      %888 = vmatpush.bf16.msra.mxu0 0
      %889 = vmatpush.bf16.msra.mxu0 0
      %890 = vmatpush.bf16.msra.mxu0 0
      %891 = vmatpush.bf16.msra.mxu0 0
      %892 = vmatpush.bf16.msra.mxu0 0
      %893 = vmatpush.bf16.msra.mxu0 %v869
      %894 = vmatpush.bf16.msra.mxu0 %v868
      %895 = vmatmul.bf16.gmra.mxu0 %v873
      %v896 = vpop.f32.mrf.mxu0
      %v897 = vadd.f32 0.0, %v896
      %v898 = vpop.f32.mrf.mxu0
      %v899 = vadd.f32 0.0, %v898
      %900 = vmatmul.bf16.gmra.mxu0 %v876
      %v901 = vpop.f32.mrf.mxu0
      %v902 = vadd.f32 0.0, %v901
      %v903 = vpop.f32.mrf.mxu0
      %v904 = vadd.f32 0.0, %v903
      %905 = vmatmul.bf16.gmra.mxu0 %v879
      %v906 = vpop.f32.mrf.mxu0
      %v907 = vadd.f32 0.0, %v906
      %v908 = vpop.f32.mrf.mxu0
      %v909 = vadd.f32 0.0, %v908
      %910 = vmatmul.bf16.gmra.mxu0 %v882
      %v911 = vpop.f32.mrf.mxu0
      %v912 = vadd.f32 0.0, %v911
      %v913 = vpop.f32.mrf.mxu0
      %v914 = vadd.f32 0.0, %v913
      %915 = vmatmul.bf16.gmra.mxu0 %v885
      %v916 = vpop.f32.mrf.mxu0
      %v917 = vadd.f32 0.0, %v916
      %v918 = vpop.f32.mrf.mxu0
      %919 = vdwg.mxu0
      %v920 = vadd.f32 %v772, %v897
      %v921 = vadd.f32 %v773, %v899
      %v922 = vadd.f32 %v774, %v902
      %v923 = vadd.f32 %v775, %v904
      %v924 = vadd.f32 %v776, %v907
      %v925 = vadd.f32 %v777, %v909
      %v926 = vadd.f32 %v778, %v912
      %v927 = vadd.f32 %v779, %v914
      %v928 = vadd.f32 %v780, %v917
      %v929 = vld [vmem:[%s206 + $0x4] sm:$0xf]
      %v930 = vld [vmem:[%s206 + $0x8] sm:$0xf]
      %v931 = vld [vmem:[%s206 + $0xc] sm:$0xf]
      %v932 = vld [vmem:[%s206 + $0x10] sm:$0xf]
      %v933 = vld [vmem:[%s206 + $0x14] sm:$0xf]
      %v934 = vld [vmem:[%s206 + $0x18] sm:$0xf]
      %v935 = vld [vmem:[%s206 + $0x1c] sm:$0xf]
      %v936 = vld [vmem:[%s206 + $0x20] sm:$0xf]
      %v937 = vld [vmem:[%s206 + $0x24] sm:$0xf]
      %v938 = vld [vmem:[%s206 + $0x28] sm:$0x1]
      %s939 = scalar_lea.vmem %s210, 96
      %v940 = vld [vmem:[%s939] sm:$0xf]
      %v941 = vld [vmem:[%s939 + $0x4] sm:$0xf]
      %v942 = vld [vmem:[%s939 + $0x8] sm:$0xf]
      %v943 = vld [vmem:[%s939 + $0xc] sm:$0xf]
      %v954 = vunpack.c.l.b16 %v929
      %v955 = vunpack.c.l.b16 %v930
      %v956 = vunpack.c.l.b16 %v931
      %v957 = vunpack.c.l.b16 %v932
      %v958 = vunpack.c.l.b16 %v933
      %v959 = vunpack.c.l.b16 %v934
      %v960 = vunpack.c.l.b16 %v935
      %v961 = vunpack.c.l.b16 %v936
      %v962 = vunpack.c.l.b16 %v937
      %v963 = vunpack.c.l.b16 %v938
      %v964 = vpack.c.b16 %v955, %v954
      %v965 = vpack.c.b16 %v957, %v956
      %v966 = vpack.c.b16 %v959, %v958
      %v967 = vpack.c.b16 %v961, %v960
      %v968 = vpack.c.b16 %v963, %v962
      %v970 = vshrl.u32 %v964, 16
      %v972 = vshll.u32 %v964, 16
      %v974 = vrot.slane %v972, 1
      %v975 = vor.u32 %v970, %v974
      %v977 = vshll.u32 %v965, 16
      %v979 = vrot.slane %v977, 1
      %v980 = vsel %vm458, %v975, %v979
      %v981 = vshrl.u32 %v965, 16
      %v983 = vor.u32 %v981, %v979
      %v985 = vshll.u32 %v966, 16
      %v987 = vrot.slane %v985, 1
      %v988 = vsel %vm458, %v983, %v987
      %v989 = vshrl.u32 %v966, 16
      %v991 = vor.u32 %v989, %v987
      %v993 = vshll.u32 %v967, 16
      %v995 = vrot.slane %v993, 1
      %v996 = vsel %vm458, %v991, %v995
      %v997 = vshrl.u32 %v967, 16
      %v999 = vor.u32 %v997, %v995
      %v1001 = vshll.u32 %v968, 16
      %v1003 = vrot.slane %v1001, 1
      %v1004 = vsel %vm458, %v999, %v1003
      %v1005 = vshrl.u32 %v968, 16
      %v1007 = vor.u32 %v1005, %v1003
      %v1012 = vunpack.c.l.b16 %v940
      %v1013 = vunpack.c.l.b16 %v941
      %v1014 = vunpack.c.l.b16 %v942
      %v1015 = vunpack.c.l.b16 %v943
      %v1016 = vpack.c.b16 %v1013, %v1012
      %v1017 = vpack.c.b16 %v1015, %v1014
      %v1021 = vsel %vm286, %v980, 0
      %v1024 = vsel %vm286, %v988, 0
      %v1027 = vsel %vm286, %v996, 0
      %v1030 = vsel %vm286, %v1004, 0
      %v1033 = vsel %vm286, %v1007, 0
      %1035 = vmatpush.bf16.msra.mxu0 0
      %1036 = vmatpush.bf16.msra.mxu0 0
      %1037 = vmatpush.bf16.msra.mxu0 0
      %1038 = vmatpush.bf16.msra.mxu0 0
      %1039 = vmatpush.bf16.msra.mxu0 0
      %1040 = vmatpush.bf16.msra.mxu0 0
      %1041 = vmatpush.bf16.msra.mxu0 %v1017
      %1042 = vmatpush.bf16.msra.mxu0 %v1016
      %1043 = vmatmul.bf16.gmra.mxu0 %v1021
      %v1044 = vpop.f32.mrf.mxu0
      %v1045 = vadd.f32 0.0, %v1044
      %v1046 = vpop.f32.mrf.mxu0
      %v1047 = vadd.f32 0.0, %v1046
      %1048 = vmatmul.bf16.gmra.mxu0 %v1024
      %v1049 = vpop.f32.mrf.mxu0
      %v1050 = vadd.f32 0.0, %v1049
      %v1051 = vpop.f32.mrf.mxu0
      %v1052 = vadd.f32 0.0, %v1051
      %1053 = vmatmul.bf16.gmra.mxu0 %v1027
      %v1054 = vpop.f32.mrf.mxu0
      %v1055 = vadd.f32 0.0, %v1054
      %v1056 = vpop.f32.mrf.mxu0
      %v1057 = vadd.f32 0.0, %v1056
      %1058 = vmatmul.bf16.gmra.mxu0 %v1030
      %v1059 = vpop.f32.mrf.mxu0
      %v1060 = vadd.f32 0.0, %v1059
      %v1061 = vpop.f32.mrf.mxu0
      %v1062 = vadd.f32 0.0, %v1061
      %1063 = vmatmul.bf16.gmra.mxu0 %v1033
      %v1064 = vpop.f32.mrf.mxu0
      %v1065 = vadd.f32 0.0, %v1064
      %v1066 = vpop.f32.mrf.mxu0
      %1067 = vdwg.mxu0
      %v1068 = vadd.f32 %v920, %v1045
      %v1069 = vadd.f32 %v921, %v1047
      %v1070 = vadd.f32 %v922, %v1050
      %v1071 = vadd.f32 %v923, %v1052
      %v1072 = vadd.f32 %v924, %v1055
      %v1073 = vadd.f32 %v925, %v1057
      %v1074 = vadd.f32 %v926, %v1060
      %v1075 = vadd.f32 %v927, %v1062
      %v1076 = vadd.f32 %v928, %v1065
      %v1077 = vld [vmem:[%s236 + $0x4] sm:$0xf]
      %v1078 = vld [vmem:[%s236 + $0x8] sm:$0xf]
      %v1079 = vld [vmem:[%s236 + $0xc] sm:$0xf]
      %v1080 = vld [vmem:[%s236 + $0x10] sm:$0xf]
      %v1081 = vld [vmem:[%s236 + $0x14] sm:$0xf]
      %v1082 = vld [vmem:[%s236 + $0x18] sm:$0xf]
      %v1083 = vld [vmem:[%s236 + $0x1c] sm:$0xf]
      %v1084 = vld [vmem:[%s236 + $0x20] sm:$0xf]
      %v1085 = vld [vmem:[%s236 + $0x24] sm:$0xf]
      %v1086 = vld [vmem:[%s236 + $0x28] sm:$0x1]
      %s1087 = scalar_lea.vmem %s210, 112
      %v1088 = vld [vmem:[%s1087] sm:$0xf]
      %v1089 = vld [vmem:[%s1087 + $0x4] sm:$0xf]
      %v1090 = vld [vmem:[%s1087 + $0x8] sm:$0xf]
      %v1091 = vld [vmem:[%s1087 + $0xc] sm:$0xf]
      %v1102 = vunpack.c.l.b16 %v1077
      %v1103 = vunpack.c.l.b16 %v1078
      %v1104 = vunpack.c.l.b16 %v1079
      %v1105 = vunpack.c.l.b16 %v1080
      %v1106 = vunpack.c.l.b16 %v1081
      %v1107 = vunpack.c.l.b16 %v1082
      %v1108 = vunpack.c.l.b16 %v1083
      %v1109 = vunpack.c.l.b16 %v1084
      %v1110 = vunpack.c.l.b16 %v1085
      %v1111 = vunpack.c.l.b16 %v1086
      %v1112 = vpack.c.b16 %v1103, %v1102
      %v1113 = vpack.c.b16 %v1105, %v1104
      %v1114 = vpack.c.b16 %v1107, %v1106
      %v1115 = vpack.c.b16 %v1109, %v1108
      %v1116 = vpack.c.b16 %v1111, %v1110
      %v1118 = vshrl.u32 %v1112, 16
      %v1120 = vshll.u32 %v1112, 16
      %v1122 = vrot.slane %v1120, 1
      %v1123 = vor.u32 %v1118, %v1122
      %v1125 = vshll.u32 %v1113, 16
      %v1127 = vrot.slane %v1125, 1
      %v1128 = vsel %vm458, %v1123, %v1127
      %v1129 = vshrl.u32 %v1113, 16
      %v1131 = vor.u32 %v1129, %v1127
      %v1133 = vshll.u32 %v1114, 16
      %v1135 = vrot.slane %v1133, 1
      %v1136 = vsel %vm458, %v1131, %v1135
      %v1137 = vshrl.u32 %v1114, 16
      %v1139 = vor.u32 %v1137, %v1135
      %v1141 = vshll.u32 %v1115, 16
      %v1143 = vrot.slane %v1141, 1
      %v1144 = vsel %vm458, %v1139, %v1143
      %v1145 = vshrl.u32 %v1115, 16
      %v1147 = vor.u32 %v1145, %v1143
      %v1149 = vshll.u32 %v1116, 16
      %v1151 = vrot.slane %v1149, 1
      %v1152 = vsel %vm458, %v1147, %v1151
      %v1153 = vshrl.u32 %v1116, 16
      %v1155 = vor.u32 %v1153, %v1151
      %v1160 = vunpack.c.l.b16 %v1088
      %v1161 = vunpack.c.l.b16 %v1089
      %v1162 = vunpack.c.l.b16 %v1090
      %v1163 = vunpack.c.l.b16 %v1091
      %v1164 = vpack.c.b16 %v1161, %v1160
      %v1165 = vpack.c.b16 %v1163, %v1162
      %v1169 = vsel %vm286, %v1128, 0
      %v1172 = vsel %vm286, %v1136, 0
      %v1175 = vsel %vm286, %v1144, 0
      %v1178 = vsel %vm286, %v1152, 0
      %v1181 = vsel %vm286, %v1155, 0
      %1183 = vmatpush.bf16.msra.mxu0 0
      %1184 = vmatpush.bf16.msra.mxu0 0
      %1185 = vmatpush.bf16.msra.mxu0 0
      %1186 = vmatpush.bf16.msra.mxu0 0
      %1187 = vmatpush.bf16.msra.mxu0 0
      %1188 = vmatpush.bf16.msra.mxu0 0
      %1189 = vmatpush.bf16.msra.mxu0 %v1165
      %1190 = vmatpush.bf16.msra.mxu0 %v1164
      %1191 = vmatmul.bf16.gmra.mxu0 %v1169
      %v1192 = vpop.f32.mrf.mxu0
      %v1193 = vadd.f32 0.0, %v1192
      %v1194 = vpop.f32.mrf.mxu0
      %v1195 = vadd.f32 0.0, %v1194
      %1196 = vmatmul.bf16.gmra.mxu0 %v1172
      %v1197 = vpop.f32.mrf.mxu0
      %v1198 = vadd.f32 0.0, %v1197
      %v1199 = vpop.f32.mrf.mxu0
      %v1200 = vadd.f32 0.0, %v1199
      %1201 = vmatmul.bf16.gmra.mxu0 %v1175
      %v1202 = vpop.f32.mrf.mxu0
      %v1203 = vadd.f32 0.0, %v1202
      %v1204 = vpop.f32.mrf.mxu0
      %v1205 = vadd.f32 0.0, %v1204
      %1206 = vmatmul.bf16.gmra.mxu0 %v1178
      %v1207 = vpop.f32.mrf.mxu0
      %v1208 = vadd.f32 0.0, %v1207
      %v1209 = vpop.f32.mrf.mxu0
      %v1210 = vadd.f32 0.0, %v1209
      %1211 = vmatmul.bf16.gmra.mxu0 %v1181
      %v1212 = vpop.f32.mrf.mxu0
      %v1213 = vadd.f32 0.0, %v1212
      %v1214 = vpop.f32.mrf.mxu0
      %1215 = vdwg.mxu0
      %v1216 = vadd.f32 %v1068, %v1193
      %v1217 = vadd.f32 %v1069, %v1195
      %v1218 = vadd.f32 %v1070, %v1198
      %v1219 = vadd.f32 %v1071, %v1200
      %v1220 = vadd.f32 %v1072, %v1203
      %v1221 = vadd.f32 %v1073, %v1205
      %v1222 = vadd.f32 %v1074, %v1208
      %v1223 = vadd.f32 %v1075, %v1210
      %v1224 = vadd.f32 %v1076, %v1213
      %v1225 = vld [vmem:[%s206 + $0x4] sm:$0xe]
      %s1226 = scalar_lea.vmem %s210, 128
      %v1227 = vld [vmem:[%s1226] sm:$0xf]
      %v1228 = vld [vmem:[%s1226 + $0x4] sm:$0xf]
      %v1229 = vld [vmem:[%s1226 + $0x8] sm:$0xf]
      %v1230 = vld [vmem:[%s1226 + $0xc] sm:$0xf]
      %v1232 = vunpack.c.l.b16 %v1225
      %v1233 = vpack.c.b16 %v955, %v1232
      %vm1234 = vcmask 1046528
      %v1235 = vrot.slane %v1233, 1
      %v1236 = vrot.slane %v965, 1
      %v1237 = vsel %vm1234, %v1235, %v1236
      %v1238 = vrot.slane %v966, 1
      %v1239 = vsel %vm1234, %v1236, %v1238
      %v1240 = vrot.slane %v967, 1
      %v1241 = vsel %vm1234, %v1238, %v1240
      %v1242 = vrot.slane %v968, 1
      %v1243 = vsel %vm1234, %v1240, %v1242
      %v1248 = vunpack.c.l.b16 %v1227
      %v1249 = vunpack.c.l.b16 %v1228
      %v1250 = vunpack.c.l.b16 %v1229
      %v1251 = vunpack.c.l.b16 %v1230
      %v1252 = vpack.c.b16 %v1249, %v1248
      %v1253 = vpack.c.b16 %v1251, %v1250
      %v1257 = vsel %vm286, %v1237, 0
      %v1260 = vsel %vm286, %v1239, 0
      %v1263 = vsel %vm286, %v1241, 0
      %v1266 = vsel %vm286, %v1243, 0
      %v1269 = vsel %vm286, %v1242, 0
      %1271 = vmatpush.bf16.msra.mxu0 0
      %1272 = vmatpush.bf16.msra.mxu0 0
      %1273 = vmatpush.bf16.msra.mxu0 0
      %1274 = vmatpush.bf16.msra.mxu0 0
      %1275 = vmatpush.bf16.msra.mxu0 0
      %1276 = vmatpush.bf16.msra.mxu0 0
      %1277 = vmatpush.bf16.msra.mxu0 %v1253
      %1278 = vmatpush.bf16.msra.mxu0 %v1252
      %1279 = vmatmul.bf16.gmra.mxu0 %v1257
      %v1280 = vpop.f32.mrf.mxu0
      %v1281 = vadd.f32 0.0, %v1280
      %v1282 = vpop.f32.mrf.mxu0
      %v1283 = vadd.f32 0.0, %v1282
      %1284 = vmatmul.bf16.gmra.mxu0 %v1260
      %v1285 = vpop.f32.mrf.mxu0
      %v1286 = vadd.f32 0.0, %v1285
      %v1287 = vpop.f32.mrf.mxu0
      %v1288 = vadd.f32 0.0, %v1287
      %1289 = vmatmul.bf16.gmra.mxu0 %v1263
      %v1290 = vpop.f32.mrf.mxu0
      %v1291 = vadd.f32 0.0, %v1290
      %v1292 = vpop.f32.mrf.mxu0
      %v1293 = vadd.f32 0.0, %v1292
      %1294 = vmatmul.bf16.gmra.mxu0 %v1266
      %v1295 = vpop.f32.mrf.mxu0
      %v1296 = vadd.f32 0.0, %v1295
      %v1297 = vpop.f32.mrf.mxu0
      %v1298 = vadd.f32 0.0, %v1297
      %1299 = vmatmul.bf16.gmra.mxu0 %v1269
      %v1300 = vpop.f32.mrf.mxu0
      %v1301 = vadd.f32 0.0, %v1300
      %v1302 = vpop.f32.mrf.mxu0
      %1303 = vdwg.mxu0
      %v1304 = vadd.f32 %v1216, %v1281
      %v1305 = vadd.f32 %v1217, %v1283
      %v1306 = vadd.f32 %v1218, %v1286
      %v1307 = vadd.f32 %v1219, %v1288
      %v1308 = vadd.f32 %v1220, %v1291
      %v1309 = vadd.f32 %v1221, %v1293
      %v1310 = vadd.f32 %v1222, %v1296
      %v1311 = vadd.f32 %v1223, %v1298
      %v1312 = vadd.f32 %v1224, %v1301
      %v1313 = vld [vmem:[%s213] sm:$0x1]
      %v1315 = vperm.slane %v1313, 0
      %v1317 = vadd.f32 %v1304, %v1315
      %v1318 = vadd.f32 %v1305, %v1315
      %v1319 = vadd.f32 %v1306, %v1315
      %v1320 = vadd.f32 %v1307, %v1315
      %v1321 = vadd.f32 %v1308, %v1315
      %v1322 = vadd.f32 %v1309, %v1315
      %v1323 = vadd.f32 %v1310, %v1315
      %v1324 = vadd.f32 %v1311, %v1315
      %v1325 = vadd.f32 %v1312, %v1315
      %v1326 = vmax.f32 %v1317, 0.0
      %v1327 = vmax.f32 %v1318, 0.0
      %v1328 = vmax.f32 %v1319, 0.0
      %v1329 = vmax.f32 %v1320, 0.0
      %v1330 = vmax.f32 %v1321, 0.0
      %v1331 = vmax.f32 %v1322, 0.0
      %v1332 = vmax.f32 %v1323, 0.0
      %v1333 = vmax.f32 %v1324, 0.0
      %v1334 = vmax.f32 %v1325, 0.0
      %v1335 = vpack.c.bf16 %v1326, %v1326
      %v1336 = vpack.c.bf16 %v1327, %v1327
      %v1337 = vpack.c.bf16 %v1328, %v1328
      %v1338 = vpack.c.bf16 %v1329, %v1329
      %v1339 = vpack.c.bf16 %v1330, %v1330
      %v1340 = vpack.c.bf16 %v1331, %v1331
      %v1341 = vpack.c.bf16 %v1332, %v1332
      %v1342 = vpack.c.bf16 %v1333, %v1333
      %v1343 = vpack.c.bf16 %v1334, %v1334
      %vm1344 = vcmask 519168
      %1345 = vst.msk [vmem:[%s221] sm:$0xf] %vm1344, %v1335
      %1346 = vst.msk [vmem:[%s221 + $0x4] sm:$0xf] %vm1344, %v1336
      %1347 = vst.msk [vmem:[%s221 + $0x8] sm:$0xf] %vm1344, %v1337
      %1348 = vst.msk [vmem:[%s221 + $0xc] sm:$0xf] %vm1344, %v1338
      %1349 = vst.msk [vmem:[%s221 + $0x10] sm:$0xf] %vm1344, %v1339
      %1350 = vst.msk [vmem:[%s221 + $0x14] sm:$0xf] %vm1344, %v1340
      %1351 = vst.msk [vmem:[%s221 + $0x18] sm:$0xf] %vm1344, %v1341
      %1352 = vst.msk [vmem:[%s221 + $0x1c] sm:$0xf] %vm1344, %v1342
      %1353 = vst.msk [vmem:[%s221 + $0x20] sm:$0xf] %vm1344, %v1343
      %p1354 = scmp.lt.s32.totalorder %s18, 1
      %s1355 = scalar_select %p1354, %s18, 1
      %p1356 = scmp.lt.s32.totalorder %s19, 0
      %s1357 = scalar_select %p1356, %s19, 0
      %s1358 = smul.addr %s1355, 9
      %s1359 = sadd.s32 %s1357, %s1358
      %s1360 = smul.addr %s1359, 4
      %s1361 = scalar_lea.vmem %s3, %s1360
      // Predicated region
      $region33: #{forward.13} parent=31 // pred_check
        %p1362 = pneg %p124
      $region34: #{forward.13} parent=31 // pred_check_branch
        %1364 = sbr.rel (%p1362) target = $region36
      $region35: #{forward.13} parent=31 // pred_region
        _
      $region36: #{forward.13} parent=31 // pred_fallthru
        _
    $region32: #{forward.13} parent=5 // pred_fallthru
      _
    %p1365 = scmp.le.s32.totalorder 2, %s9
    // Predicated region
    $region37: #{forward.13} parent=5 // pred_check
      %p1366 = pneg %p1365
    $region38: #{forward.13} parent=5 // pred_check_branch
      %1368 = sbr.rel (%p1366) target = $region40
    $region39: #{forward.13} parent=5 // pred_region
      %s1369 = ssub.s32 %s9, 2
      // Predicated region
      $region41: #{forward.13} parent=39 // pred_check
        %p1370 = pneg %p130
      $region42: #{forward.13} parent=39 // pred_check_branch
        %1372 = sbr.rel (%p1370) target = $region44
      $region43: #{forward.13} parent=39 // pred_region
        %p1373 = scmp.lt.s32.totalorder %s20, 1
        %s1374 = scalar_select %p1373, %s20, 1
        %p1375 = scmp.lt.s32.totalorder %s21, 0
        %s1376 = scalar_select %p1375, %s21, 0
        %s1377 = smul.addr %s1374, 9
        %s1378 = sadd.s32 %s1376, %s1377
        %s1379 = smul.addr %s1378, 4
        %s1380 = scalar_lea.vmem %s3, %s1379
      $region44: #{forward.13} parent=39 // pred_fallthru
        _
    $region40: #{forward.13} parent=5 // pred_fallthru
      _
  $region6: #{forward.13} parent=0 // loop_footer
    %s13 = sadd.s32 1, %s9
  $region7: #{forward.13} parent=0 // loop_footer_branch
    %8 = sbr.rel target = $region3
  $region8: #{forward.13} parent=0 // loop_exit
    _

// kernel: forward.15
$region0: #{forward.15}
  #allocation0 [shape = 'u32[]', space=smem, size = 0x4, offset = 0x4, fixed_abs, tag = 'smem constant byte address 0x4 - core index']
  #allocation1 [shape = 'u32[72,128]{1,0:T(1,128)}', space=vmem, size = 0x9000, scoped, tag = 'internal scratch']
  %s0 = inlined_call_operand.vmem [shape: bf16[2,1,110,64], index: 0, kind: input, shape index: {}]
  %s1 = inlined_call_operand.vmem [shape: bf16[9,64,64], index: 1, kind: input, shape index: {}]
  %s2 = inlined_call_operand.vmem [shape: f32[1,64], index: 2, kind: input, shape index: {}]
  %s3 = inlined_call_operand.vmem [shape: bf16[2,80,64], index: 3, kind: input, shape index: {}]
  %s4 = inlined_call_operand.vmem [shape: bf16[2,80,64], index: 4, kind: output, shape index: {}]
  %s5 = sld [smem:[#allocation0]]
  $region49: #{forward.15} parent=0
    _
  %s7 = ssub.s32 1, %s5
  %s8 = scalar_select 0, %s7, %s5
  loop: start=0, step=1, limit=4
  $region2: #{forward.15} parent=0 // loop_pre_header
    _
  $region3: #{forward.15} parent=0 // loop_header
    %s10 = sphi 0, %s14
    %p11 = scmp.ge.s32.totalorder %s10, 4
    %s17 = sphi 0, %s29
    %s18 = sphi 0, %s25
    %s19 = sphi 0, %s17
    %s20 = sphi 0, %s18
    %s21 = sphi 0, %s19
    %s22 = sphi 0, %s20
    %s32 = sphi 0, %s34
    %s35 = sphi 0, %s32
    %s36 = sphi 0, %s35
    %s52 = sphi 0, %s36
    %s58 = sphi 0, %s60
    %s61 = sphi 0, %s58
    %s62 = sphi 0, %s61
    %s78 = sphi 0, %s62
    %s84 = sphi 0, %s86
    %s87 = sphi 0, %s84
    %s88 = sphi 0, %s87
    %s104 = sphi 0, %s88
    %s112 = sphi 0, %s114
    %s115 = sphi 0, %s112
    %s116 = sphi 0, %s115
    %s132 = sphi 0, %s116
    %s140 = sphi 0, %s142
    %s143 = sphi 0, %s140
    %s144 = sphi 0, %s143
    %s160 = sphi 0, %s144
  $region4: #{forward.15} parent=0 // loop_header_branch
    %13 = sbr.rel (%p11) target = $region8
  $region5: #{forward.15} parent=0 // loop_body
    %s15 = ssub.s32 %s10, 1
    %s16 = ssub.s32 %s10, 2
    %s23 = sadd.s32 1, %s18
    %p24 = scmp.ge.s32.totalorder %s23, 1
    %s25 = scalar_select %p24, 0, %s23
    %s26 = sadd.s32 1, %s17
    %s27 = scalar_select %p24, %s26, %s17
    %p28 = scmp.ge.s32.totalorder %s27, 2
    %s29 = scalar_select %p28, 0, %s27
    %s30 = ssub.s32 %s17, %s29
    %p31 = scmp.eq.s32.totalorder %s30, 0
    %s33 = sadd.s32 %s32, 1
    %s34 = scalar_select %p31, %s32, %s33
    %p37 = pneg %p31
    %p38 = scmp.eq.s32.totalorder %s10, 1
    %p39 = por %p37, %p38
    %p40 = scmp.ne.s32.totalorder %s32, %s35
    %p41 = scmp.eq.s32.totalorder %s10, 0
    %p42 = por %p40, %p41
    %p43 = scmp.ne.s32.totalorder %s32, %s35
    %p44 = scmp.eq.s32.totalorder %s15, 1
    %p45 = por %p43, %p44
    %p46 = scmp.ne.s32.totalorder %s35, %s36
    %p47 = scmp.eq.s32.totalorder %s15, 0
    %p48 = por %p46, %p47
    %p49 = scmp.ne.s32.totalorder %s35, %s36
    %p50 = scmp.eq.s32.totalorder %s16, 1
    %p51 = por %p49, %p50
    %p53 = scmp.ne.s32.totalorder %s36, %s52
    %p54 = scmp.eq.s32.totalorder %s16, 0
    %p55 = por %p53, %p54
    %s56 = ssub.s32 %s18, %s25
    %p57 = scmp.eq.s32.totalorder %s56, 0
    %s59 = sadd.s32 %s58, 1
    %s60 = scalar_select %p57, %s58, %s59
    %p63 = pneg %p57
    %p64 = scmp.eq.s32.totalorder %s10, 1
    %p65 = por %p63, %p64
    %p66 = scmp.ne.s32.totalorder %s58, %s61
    %p67 = scmp.eq.s32.totalorder %s10, 0
    %p68 = por %p66, %p67
    %p69 = scmp.ne.s32.totalorder %s58, %s61
    %p70 = scmp.eq.s32.totalorder %s15, 1
    %p71 = por %p69, %p70
    %p72 = scmp.ne.s32.totalorder %s61, %s62
    %p73 = scmp.eq.s32.totalorder %s15, 0
    %p74 = por %p72, %p73
    %p75 = scmp.ne.s32.totalorder %s61, %s62
    %p76 = scmp.eq.s32.totalorder %s16, 1
    %p77 = por %p75, %p76
    %p79 = scmp.ne.s32.totalorder %s62, %s78
    %p80 = scmp.eq.s32.totalorder %s16, 0
    %p81 = por %p79, %p80
    %s82 = ssub.s32 %s18, %s25
    %p83 = scmp.eq.s32.totalorder %s82, 0
    %s85 = sadd.s32 %s84, 1
    %s86 = scalar_select %p83, %s84, %s85
    %p89 = pneg %p83
    %p90 = scmp.eq.s32.totalorder %s10, 1
    %p91 = por %p89, %p90
    %p92 = scmp.ne.s32.totalorder %s84, %s87
    %p93 = scmp.eq.s32.totalorder %s10, 0
    %p94 = por %p92, %p93
    %p95 = scmp.ne.s32.totalorder %s84, %s87
    %p96 = scmp.eq.s32.totalorder %s15, 1
    %p97 = por %p95, %p96
    %p98 = scmp.ne.s32.totalorder %s87, %s88
    %p99 = scmp.eq.s32.totalorder %s15, 0
    %p100 = por %p98, %p99
    %p101 = scmp.ne.s32.totalorder %s87, %s88
    %p102 = scmp.eq.s32.totalorder %s16, 1
    %p103 = por %p101, %p102
    %p105 = scmp.ne.s32.totalorder %s88, %s104
    %p106 = scmp.eq.s32.totalorder %s16, 0
    %p107 = por %p105, %p106
    %s108 = ssub.s32 %s17, %s29
    %s109 = ssub.s32 %s18, %s25
    %s110 = sor.u32 %s108, %s109
    %p111 = scmp.eq.s32.totalorder %s110, 0
    %s113 = sadd.s32 %s112, 1
    %s114 = scalar_select %p111, %s112, %s113
    %p117 = pneg %p111
    %p118 = scmp.eq.s32.totalorder %s10, 1
    %p119 = por %p117, %p118
    %p120 = scmp.ne.s32.totalorder %s112, %s115
    %p121 = scmp.eq.s32.totalorder %s10, 0
    %p122 = por %p120, %p121
    %p123 = scmp.ne.s32.totalorder %s112, %s115
    %p124 = scmp.eq.s32.totalorder %s15, 1
    %p125 = por %p123, %p124
    %p126 = scmp.ne.s32.totalorder %s115, %s116
    %p127 = scmp.eq.s32.totalorder %s15, 0
    %p128 = por %p126, %p127
    %p129 = scmp.ne.s32.totalorder %s115, %s116
    %p130 = scmp.eq.s32.totalorder %s16, 1
    %p131 = por %p129, %p130
    %p133 = scmp.ne.s32.totalorder %s116, %s132
    %p134 = scmp.eq.s32.totalorder %s16, 0
    %p135 = por %p133, %p134
    %s136 = ssub.s32 %s17, %s29
    %s137 = ssub.s32 %s18, %s25
    %s138 = sor.u32 %s136, %s137
    %p139 = scmp.eq.s32.totalorder %s138, 0
    %s141 = sadd.s32 %s140, 1
    %s142 = scalar_select %p139, %s140, %s141
    %p145 = pneg %p139
    %p146 = scmp.eq.s32.totalorder %s10, 1
    %p147 = por %p145, %p146
    %p148 = scmp.ne.s32.totalorder %s140, %s143
    %p149 = scmp.eq.s32.totalorder %s10, 0
    %p150 = por %p148, %p149
    %p151 = scmp.ne.s32.totalorder %s140, %s143
    %p152 = scmp.eq.s32.totalorder %s15, 1
    %p153 = por %p151, %p152
    %p154 = scmp.ne.s32.totalorder %s143, %s144
    %p155 = scmp.eq.s32.totalorder %s15, 0
    %p156 = por %p154, %p155
    %p157 = scmp.ne.s32.totalorder %s143, %s144
    %p158 = scmp.eq.s32.totalorder %s16, 1
    %p159 = por %p157, %p158
    %p161 = scmp.ne.s32.totalorder %s144, %s160
    %p162 = scmp.eq.s32.totalorder %s16, 0
    %p163 = por %p161, %p162
    %p164 = scmp.le.s32.totalorder 1, %s10
    %p165 = scmp.lt.s32.totalorder %s10, 3
    %p166 = pnand %p164, %p165
    %p167 = pneg %p166
    // Predicated region
    $region9: #{forward.15} parent=5 // pred_check
      _
    $region10: #{forward.15} parent=5 // pred_check_branch
      %169 = sbr.rel (%p166) target = $region12
    $region11: #{forward.15} parent=5 // pred_region
      %s170 = ssub.s32 %s10, 1
      // Predicated region
      $region13: #{forward.15} parent=11 // pred_check
        %p171 = pneg %p74
      $region14: #{forward.15} parent=11 // pred_check_branch
        %173 = sbr.rel (%p171) target = $region16
      $region15: #{forward.15} parent=11 // pred_region
        %p174 = scmp.lt.s32.totalorder %s20, 0
        %s175 = scalar_select %p174, %s20, 0
        %s176 = smul.addr %s175, 4
        %s177 = scalar_lea.vmem %s1, %s176
      $region16: #{forward.15} parent=11 // pred_fallthru
        _
      // Predicated region
      $region17: #{forward.15} parent=11 // pred_check
        %p178 = pneg %p100
      $region18: #{forward.15} parent=11 // pred_check_branch
        %180 = sbr.rel (%p178) target = $region20
      $region19: #{forward.15} parent=11 // pred_region
        %p181 = scmp.lt.s32.totalorder %s20, 0
        %s182 = scalar_select %p181, %s20, 0
        %s183 = scalar_lea.vmem %s2, %s182
      $region20: #{forward.15} parent=11 // pred_fallthru
        _
    $region12: #{forward.15} parent=5 // pred_fallthru
      _
    %p184 = scmp.lt.s32.totalorder %s10, 2
    // Predicated region
    $region21: #{forward.15} parent=5 // pred_check
      %p185 = pneg %p184
    $region22: #{forward.15} parent=5 // pred_check_branch
      %187 = sbr.rel (%p185) target = $region24
    $region23: #{forward.15} parent=5 // pred_region
      // Predicated region
      $region25: #{forward.15} parent=23 // pred_check
        %p188 = pneg %p42
      $region26: #{forward.15} parent=23 // pred_check_branch
        %190 = sbr.rel (%p188) target = $region28
      $region27: #{forward.15} parent=23 // pred_region
        %p191 = scmp.lt.s32.totalorder %s17, 1
        %s192 = scalar_select %p191, %s17, 1
        %s193 = smul.addr %s192, 14
        %s194 = smul.addr %s193, 4
        %s195 = scalar_lea.vmem %s0, %s194
      $region28: #{forward.15} parent=23 // pred_fallthru
        _
      // Predicated region
      $region29: #{forward.15} parent=23 // pred_check
        %p196 = pneg %p122
      $region30: #{forward.15} parent=23 // pred_check_branch
        %198 = sbr.rel (%p196) target = $region32
      $region31: #{forward.15} parent=23 // pred_region
        %p199 = scmp.lt.s32.totalorder %s17, 1
        %s200 = scalar_select %p199, %s17, 1
        %p201 = scmp.lt.s32.totalorder %s18, 0
        %s202 = scalar_select %p201, %s18, 0
        %s203 = smul.addr %s200, 10
        %s204 = sadd.s32 %s202, %s203
        %s205 = smul.addr %s204, 4
        %s206 = scalar_lea.vmem %s3, %s205
      $region32: #{forward.15} parent=23 // pred_fallthru
        _
    $region24: #{forward.15} parent=5 // pred_fallthru
      _
    %p207 = scmp.le.s32.totalorder 1, %s10
    %p208 = scmp.lt.s32.totalorder %s10, 3
    %p209 = pnand %p207, %p208
    %p210 = pneg %p209
    // Predicated region
    $region33: #{forward.15} parent=5 // pred_check
      _
    $region34: #{forward.15} parent=5 // pred_check_branch
      %212 = sbr.rel (%p209) target = $region36
    $region35: #{forward.15} parent=5 // pred_region
      %s213 = ssub.s32 %s10, 1
      %p214 = scmp.lt.s32.totalorder %s19, 1
      %s215 = scalar_select %p214, %s19, 1
      %s216 = smul.addr %s215, 14
      %s217 = smul.addr %s216, 4
      %s218 = scalar_lea.vmem %s0, %s217
      %p219 = pneg %p48
      %p220 = pneg %p45
      %p221 = scmp.lt.s32.totalorder %s20, 0
      %s222 = scalar_select %p221, %s20, 0
      %s223 = smul.addr %s222, 4
      %s224 = scalar_lea.vmem %s1, %s223
      %p225 = pneg %p74
      %p226 = pneg %p71
      %p227 = scmp.lt.s32.totalorder %s20, 0
      %s228 = scalar_select %p227, %s20, 0
      %s229 = scalar_lea.vmem %s2, %s228
      %p230 = pneg %p100
      %p231 = pneg %p97
      %p232 = scmp.lt.s32.totalorder %s19, 1
      %s233 = scalar_select %p232, %s19, 1
      %p234 = scmp.lt.s32.totalorder %s20, 0
      %s235 = scalar_select %p234, %s20, 0
      %s236 = smul.addr %s233, 10
      %s237 = sadd.s32 %s235, %s236
      %s238 = smul.addr %s237, 4
      %s239 = scalar_lea.vmem %s3, %s238
      %p240 = pneg %p128
      %p241 = pneg %p125
      %p242 = pneg %p156
      %p243 = pneg %p153
      %p244 = scmp.lt.s32.totalorder %s19, 1
      %s245 = scalar_select %p244, %s19, 1
      %p246 = scmp.lt.s32.totalorder %s20, 0
      %s247 = scalar_select %p246, %s20, 0
      %s248 = smul.addr %s245, 10
      %s249 = sadd.s32 %s247, %s248
      %s250 = smul.addr %s249, 4
      %s251 = scalar_lea.vmem %s4, %s250
      %p252 = scmp.lt.s32.totalorder %s19, 1
      %s253 = scalar_select %p252, %s19, 1
      %s254 = smul.addr %s253, 14
      %s255 = smul.addr %s254, 4
      %s256 = scalar_lea.vmem %s0, %s255
      %p257 = scmp.lt.s32.totalorder %s20, 0
      %s258 = scalar_select %p257, %s20, 0
      %s259 = smul.addr %s258, 4
      %s260 = scalar_lea.vmem %s1, %s259
      %p261 = scmp.lt.s32.totalorder %s20, 0
      %s262 = scalar_select %p261, %s20, 0
      %s263 = scalar_lea.vmem %s2, %s262
      %p264 = scmp.lt.s32.totalorder %s19, 1
      %s265 = scalar_select %p264, %s19, 1
      %p266 = scmp.lt.s32.totalorder %s20, 0
      %s267 = scalar_select %p266, %s20, 0
      %s268 = smul.addr %s265, 10
      %s269 = sadd.s32 %s267, %s268
      %s270 = smul.addr %s269, 4
      %s271 = scalar_lea.vmem %s3, %s270
      %p272 = scmp.lt.s32.totalorder %s19, 1
      %s273 = scalar_select %p272, %s19, 1
      %p274 = scmp.lt.s32.totalorder %s20, 0
      %s275 = scalar_select %p274, %s20, 0
      %s276 = smul.addr %s273, 10
      %s277 = sadd.s32 %s275, %s276
      %s278 = smul.addr %s277, 4
      %s279 = scalar_lea.vmem %s4, %s278
      %v281 = vld [vmem:[%s256] sm:$0xf]
      %v282 = vld [vmem:[%s256 + $0x4] sm:$0xf]
      %v283 = vld [vmem:[%s256 + $0x8] sm:$0xf]
      %v284 = vld [vmem:[%s256 + $0xc] sm:$0xf]
      %v285 = vld [vmem:[%s256 + $0x10] sm:$0xf]
      %v286 = vld [vmem:[%s256 + $0x14] sm:$0xf]
      %v287 = vld [vmem:[%s256 + $0x18] sm:$0xf]
      %v288 = vld [vmem:[%s256 + $0x1c] sm:$0xf]
      %v289 = vld [vmem:[%s256 + $0x20] sm:$0xf]
      %v290 = vld [vmem:[%s256 + $0x24] sm:$0xf]
      %v291 = vld [vmem:[%s260] sm:$0xf]
      %v292 = vld [vmem:[%s260 + $0x4] sm:$0xf]
      %v293 = vld [vmem:[%s260 + $0x8] sm:$0xf]
      %v294 = vld [vmem:[%s260 + $0xc] sm:$0xf]
      %v295 = vld [vmem:[%s260 + $0x10] sm:$0xf]
      %v296 = vld [vmem:[%s260 + $0x14] sm:$0xf]
      %v297 = vld [vmem:[%s260 + $0x18] sm:$0xf]
      %v298 = vld [vmem:[%s260 + $0x1c] sm:$0xf]
      %v299 = vld [vmem:[%s256 + $0x28] sm:$0x1]
      %s300 = scalar_lea.vmem %s260, 32
      %v301 = vld [vmem:[%s300] sm:$0xf]
      %v302 = vld [vmem:[%s300 + $0x4] sm:$0xf]
      %v303 = vld [vmem:[%s300 + $0x8] sm:$0xf]
      %v304 = vld [vmem:[%s300 + $0xc] sm:$0xf]
      %v305 = vld [vmem:[%s300 + $0x10] sm:$0xf]
      %v306 = vld [vmem:[%s300 + $0x14] sm:$0xf]
      %v307 = vld [vmem:[%s300 + $0x18] sm:$0xf]
      %v308 = vld [vmem:[%s300 + $0x1c] sm:$0xf]
      %v320 = vunpack.c.l.b16 %v281
      %v321 = vunpack.c.l.b16 %v282
      %v322 = vunpack.c.l.b16 %v283
      %v323 = vunpack.c.l.b16 %v284
      %v324 = vunpack.c.l.b16 %v285
      %v325 = vunpack.c.l.b16 %v286
      %v326 = vunpack.c.l.b16 %v287
      %v327 = vunpack.c.l.b16 %v288
      %v328 = vunpack.c.l.b16 %v289
      %v329 = vunpack.c.l.b16 %v290
      %v330 = vunpack.c.l.b16 %v299
      %v331 = vpack.c.b16 %v321, %v320
      %v332 = vpack.c.b16 %v323, %v322
      %v333 = vpack.c.b16 %v325, %v324
      %v334 = vpack.c.b16 %v327, %v326
      %v335 = vpack.c.b16 %v329, %v328
      %v336 = vpack.c.b16 %v330, %v330
      %vm337 = vsmask.f32 7424
      %v339 = vshrl.u32 %v331, 16
      %v341 = vshll.u32 %v331, 16
      %v343 = vrot.slane %v341, 1
      %v344 = vor.u32 %v339, %v343
      %v346 = vshll.u32 %v332, 16
      %v348 = vrot.slane %v346, 1
      %v349 = vsel %vm337, %v344, %v348
      %v350 = vshrl.u32 %v332, 16
      %v352 = vor.u32 %v350, %v348
      %v354 = vshll.u32 %v333, 16
      %v356 = vrot.slane %v354, 1
      %v357 = vsel %vm337, %v352, %v356
      %v358 = vshrl.u32 %v333, 16
      %v360 = vor.u32 %v358, %v356
      %v362 = vshll.u32 %v334, 16
      %v364 = vrot.slane %v362, 1
      %v365 = vsel %vm337, %v360, %v364
      %v366 = vshrl.u32 %v334, 16
      %v368 = vor.u32 %v366, %v364
      %v370 = vshll.u32 %v335, 16
      %v372 = vrot.slane %v370, 1
      %v373 = vsel %vm337, %v368, %v372
      %v374 = vshrl.u32 %v335, 16
      %v376 = vor.u32 %v374, %v372
      %v378 = vshll.u32 %v336, 16
      %v380 = vrot.slane %v378, 1
      %v381 = vsel %vm337, %v376, %v380
      %v390 = vunpack.c.l.b16 %v301
      %v391 = vunpack.c.l.b16 %v302
      %v392 = vunpack.c.l.b16 %v303
      %v393 = vunpack.c.l.b16 %v304
      %v394 = vunpack.c.l.b16 %v305
      %v395 = vunpack.c.l.b16 %v306
      %v396 = vunpack.c.l.b16 %v307
      %v397 = vunpack.c.l.b16 %v308
      %v398 = vpack.c.b16 %v391, %v390
      %v399 = vpack.c.b16 %v393, %v392
      %v400 = vpack.c.b16 %v395, %v394
      %v401 = vpack.c.b16 %v397, %v396
      %vm406 = vcmask 523264
      %v408 = vsel %vm406, %v349, 0
      %v411 = vsel %vm406, %v357, 0
      %v414 = vsel %vm406, %v365, 0
      %v417 = vsel %vm406, %v373, 0
      %v420 = vsel %vm406, %v381, 0
      %422 = vmatpush.bf16.msra.mxu0 0
      %423 = vmatpush.bf16.msra.mxu0 0
      %424 = vmatpush.bf16.msra.mxu0 0
      %425 = vmatpush.bf16.msra.mxu0 0
      %426 = vmatpush.bf16.msra.mxu0 %v401
      %427 = vmatpush.bf16.msra.mxu0 %v400
      %428 = vmatpush.bf16.msra.mxu0 %v399
      %429 = vmatpush.bf16.msra.mxu0 %v398
      %430 = vmatmul.bf16.gmra.mxu0 %v408
      %v431 = vpop.f32.mrf.mxu0
      %v432 = vadd.f32 0.0, %v431
      %v433 = vpop.f32.mrf.mxu0
      %v434 = vadd.f32 0.0, %v433
      %435 = vmatmul.bf16.gmra.mxu0 %v411
      %v436 = vpop.f32.mrf.mxu0
      %v437 = vadd.f32 0.0, %v436
      %v438 = vpop.f32.mrf.mxu0
      %v439 = vadd.f32 0.0, %v438
      %440 = vmatmul.bf16.gmra.mxu0 %v414
      %v441 = vpop.f32.mrf.mxu0
      %v442 = vadd.f32 0.0, %v441
      %v443 = vpop.f32.mrf.mxu0
      %v444 = vadd.f32 0.0, %v443
      %445 = vmatmul.bf16.gmra.mxu0 %v417
      %v446 = vpop.f32.mrf.mxu0
      %v447 = vadd.f32 0.0, %v446
      %v448 = vpop.f32.mrf.mxu0
      %v449 = vadd.f32 0.0, %v448
      %450 = vmatmul.bf16.gmra.mxu0 %v420
      %v451 = vpop.f32.mrf.mxu0
      %v452 = vadd.f32 0.0, %v451
      %v453 = vpop.f32.mrf.mxu0
      %v454 = vadd.f32 0.0, %v453
      %455 = vdwg.mxu0
      %v464 = vunpack.c.l.b16 %v291
      %v465 = vunpack.c.l.b16 %v292
      %v466 = vunpack.c.l.b16 %v293
      %v467 = vunpack.c.l.b16 %v294
      %v468 = vunpack.c.l.b16 %v295
      %v469 = vunpack.c.l.b16 %v296
      %v470 = vunpack.c.l.b16 %v297
      %v471 = vunpack.c.l.b16 %v298
      %v472 = vpack.c.b16 %v465, %v464
      %v473 = vpack.c.b16 %v467, %v466
      %v474 = vpack.c.b16 %v469, %v468
      %v475 = vpack.c.b16 %v471, %v470
      %v480 = vsel %vm406, %v331, 0
      %v482 = vsel %vm406, %v332, 0
      %v484 = vsel %vm406, %v333, 0
      %v486 = vsel %vm406, %v334, 0
      %v488 = vsel %vm406, %v335, 0
      %490 = vmatpush.bf16.msra.mxu0 0
      %491 = vmatpush.bf16.msra.mxu0 0
      %492 = vmatpush.bf16.msra.mxu0 0
      %493 = vmatpush.bf16.msra.mxu0 0
      %494 = vmatpush.bf16.msra.mxu0 %v475
      %495 = vmatpush.bf16.msra.mxu0 %v474
      %496 = vmatpush.bf16.msra.mxu0 %v473
      %497 = vmatpush.bf16.msra.mxu0 %v472
      %498 = vmatmul.bf16.gmra.mxu0 %v480
      %v499 = vpop.f32.mrf.mxu0
      %v500 = vadd.f32 %v432, %v499
      %v501 = vpop.f32.mrf.mxu0
      %v502 = vadd.f32 %v434, %v501
      %503 = vmatmul.bf16.gmra.mxu0 %v482
      %v504 = vpop.f32.mrf.mxu0
      %v505 = vadd.f32 %v437, %v504
      %v506 = vpop.f32.mrf.mxu0
      %v507 = vadd.f32 %v439, %v506
      %508 = vmatmul.bf16.gmra.mxu0 %v484
      %v509 = vpop.f32.mrf.mxu0
      %v510 = vadd.f32 %v442, %v509
      %v511 = vpop.f32.mrf.mxu0
      %v512 = vadd.f32 %v444, %v511
      %513 = vmatmul.bf16.gmra.mxu0 %v486
      %v514 = vpop.f32.mrf.mxu0
      %v515 = vadd.f32 %v447, %v514
      %v516 = vpop.f32.mrf.mxu0
      %v517 = vadd.f32 %v449, %v516
      %518 = vmatmul.bf16.gmra.mxu0 %v488
      %v519 = vpop.f32.mrf.mxu0
      %v520 = vadd.f32 %v452, %v519
      %v521 = vpop.f32.mrf.mxu0
      %v522 = vadd.f32 %v454, %v521
      %523 = vdwg.mxu0
      %v524 = vld [vmem:[%s256] sm:$0xe]
      %s525 = scalar_lea.vmem %s260, 64
      %v526 = vld [vmem:[%s525] sm:$0xf]
      %v527 = vld [vmem:[%s525 + $0x4] sm:$0xf]
      %v528 = vld [vmem:[%s525 + $0x8] sm:$0xf]
      %v529 = vld [vmem:[%s525 + $0xc] sm:$0xf]
      %v530 = vld [vmem:[%s525 + $0x10] sm:$0xf]
      %v531 = vld [vmem:[%s525 + $0x14] sm:$0xf]
      %v532 = vld [vmem:[%s525 + $0x18] sm:$0xf]
      %v533 = vld [vmem:[%s525 + $0x1c] sm:$0xf]
      %v535 = vunpack.c.l.b16 %v524
      %v536 = vpack.c.b16 %v321, %v535
      %vm537 = vcmask 1046528
      %v538 = vrot.slane %v536, 1
      %v539 = vrot.slane %v332, 1
      %v540 = vsel %vm537, %v538, %v539
      %v541 = vrot.slane %v333, 1
      %v542 = vsel %vm537, %v539, %v541
      %v543 = vrot.slane %v334, 1
      %v544 = vsel %vm537, %v541, %v543
      %v545 = vrot.slane %v335, 1
      %v546 = vsel %vm537, %v543, %v545
      %v547 = vrot.slane %v336, 1
      %v548 = vsel %vm537, %v545, %v547
      %v557 = vunpack.c.l.b16 %v526
      %v558 = vunpack.c.l.b16 %v527
      %v559 = vunpack.c.l.b16 %v528
      %v560 = vunpack.c.l.b16 %v529
      %v561 = vunpack.c.l.b16 %v530
      %v562 = vunpack.c.l.b16 %v531
      %v563 = vunpack.c.l.b16 %v532
      %v564 = vunpack.c.l.b16 %v533
      %v565 = vpack.c.b16 %v558, %v557
      %v566 = vpack.c.b16 %v560, %v559
      %v567 = vpack.c.b16 %v562, %v561
      %v568 = vpack.c.b16 %v564, %v563
      %v574 = vsel %vm406, %v540, 0
      %v577 = vsel %vm406, %v542, 0
      %v580 = vsel %vm406, %v544, 0
      %v583 = vsel %vm406, %v546, 0
      %v586 = vsel %vm406, %v548, 0
      %588 = vmatpush.bf16.msra.mxu0 0
      %589 = vmatpush.bf16.msra.mxu0 0
      %590 = vmatpush.bf16.msra.mxu0 0
      %591 = vmatpush.bf16.msra.mxu0 0
      %592 = vmatpush.bf16.msra.mxu0 %v568
      %593 = vmatpush.bf16.msra.mxu0 %v567
      %594 = vmatpush.bf16.msra.mxu0 %v566
      %595 = vmatpush.bf16.msra.mxu0 %v565
      %596 = vmatmul.bf16.gmra.mxu0 %v574
      %v597 = vpop.f32.mrf.mxu0
      %v598 = vadd.f32 0.0, %v597
      %v599 = vpop.f32.mrf.mxu0
      %v600 = vadd.f32 0.0, %v599
      %601 = vmatmul.bf16.gmra.mxu0 %v577
      %v602 = vpop.f32.mrf.mxu0
      %v603 = vadd.f32 0.0, %v602
      %v604 = vpop.f32.mrf.mxu0
      %v605 = vadd.f32 0.0, %v604
      %606 = vmatmul.bf16.gmra.mxu0 %v580
      %v607 = vpop.f32.mrf.mxu0
      %v608 = vadd.f32 0.0, %v607
      %v609 = vpop.f32.mrf.mxu0
      %v610 = vadd.f32 0.0, %v609
      %611 = vmatmul.bf16.gmra.mxu0 %v583
      %v612 = vpop.f32.mrf.mxu0
      %v613 = vadd.f32 0.0, %v612
      %v614 = vpop.f32.mrf.mxu0
      %v615 = vadd.f32 0.0, %v614
      %616 = vmatmul.bf16.gmra.mxu0 %v586
      %v617 = vpop.f32.mrf.mxu0
      %v618 = vadd.f32 0.0, %v617
      %v619 = vpop.f32.mrf.mxu0
      %v620 = vadd.f32 0.0, %v619
      %621 = vdwg.mxu0
      %v622 = vadd.f32 %v500, %v598
      %v623 = vadd.f32 %v502, %v600
      %v624 = vadd.f32 %v505, %v603
      %v625 = vadd.f32 %v507, %v605
      %v626 = vadd.f32 %v510, %v608
      %v627 = vadd.f32 %v512, %v610
      %v628 = vadd.f32 %v515, %v613
      %v629 = vadd.f32 %v517, %v615
      %v630 = vadd.f32 %v520, %v618
      %v631 = vadd.f32 %v522, %v620
      %v632 = vld [vmem:[%s256 + $0x4] sm:$0xe]
      %v633 = vld [vmem:[%s256 + $0x8] sm:$0xf]
      %v634 = vld [vmem:[%s256 + $0xc] sm:$0xf]
      %v635 = vld [vmem:[%s256 + $0x10] sm:$0xf]
      %v636 = vld [vmem:[%s256 + $0x14] sm:$0xf]
      %v637 = vld [vmem:[%s256 + $0x18] sm:$0xf]
      %v638 = vld [vmem:[%s256 + $0x1c] sm:$0xf]
      %v639 = vld [vmem:[%s256 + $0x20] sm:$0xf]
      %v640 = vld [vmem:[%s256 + $0x24] sm:$0xf]
      %v641 = vld [vmem:[%s256 + $0x28] sm:$0xf]
      %v642 = vld [vmem:[%s256 + $0x2c] sm:$0x1]
      %s643 = scalar_lea.vmem %s260, 96
      %v644 = vld [vmem:[%s643] sm:$0xf]
      %v645 = vld [vmem:[%s643 + $0x4] sm:$0xf]
      %v646 = vld [vmem:[%s643 + $0x8] sm:$0xf]
      %v647 = vld [vmem:[%s643 + $0xc] sm:$0xf]
      %v648 = vld [vmem:[%s643 + $0x10] sm:$0xf]
      %v649 = vld [vmem:[%s643 + $0x14] sm:$0xf]
      %v650 = vld [vmem:[%s643 + $0x18] sm:$0xf]
      %v651 = vld [vmem:[%s643 + $0x1c] sm:$0xf]
      %v663 = vunpack.c.l.b16 %v632
      %v664 = vunpack.c.l.b16 %v633
      %v665 = vunpack.c.l.b16 %v634
      %v666 = vunpack.c.l.b16 %v635
      %v667 = vunpack.c.l.b16 %v636
      %v668 = vunpack.c.l.b16 %v637
      %v669 = vunpack.c.l.b16 %v638
      %v670 = vunpack.c.l.b16 %v639
      %v671 = vunpack.c.l.b16 %v640
      %v672 = vunpack.c.l.b16 %v641
      %v673 = vunpack.c.l.b16 %v642
      %v674 = vpack.c.b16 %v664, %v663
      %v675 = vpack.c.b16 %v666, %v665
      %v676 = vpack.c.b16 %v668, %v667
      %v677 = vpack.c.b16 %v670, %v669
      %v678 = vpack.c.b16 %v672, %v671
      %v679 = vpack.c.b16 %v673, %v673
      %v680 = vrot.slane %v674, 1
      %v681 = vrot.slane %v675, 1
      %v682 = vsel %vm537, %v680, %v681
      %v683 = vrot.slane %v676, 1
      %v684 = vsel %vm537, %v681, %v683
      %v685 = vrot.slane %v677, 1
      %v686 = vsel %vm537, %v683, %v685
      %v687 = vrot.slane %v678, 1
      %v688 = vsel %vm537, %v685, %v687
      %v689 = vrot.slane %v679, 1
      %v690 = vsel %vm537, %v687, %v689
      %v699 = vunpack.c.l.b16 %v644
      %v700 = vunpack.c.l.b16 %v645
      %v701 = vunpack.c.l.b16 %v646
      %v702 = vunpack.c.l.b16 %v647
      %v703 = vunpack.c.l.b16 %v648
      %v704 = vunpack.c.l.b16 %v649
      %v705 = vunpack.c.l.b16 %v650
      %v706 = vunpack.c.l.b16 %v651
      %v707 = vpack.c.b16 %v700, %v699
      %v708 = vpack.c.b16 %v702, %v701
      %v709 = vpack.c.b16 %v704, %v703
      %v710 = vpack.c.b16 %v706, %v705
      %v716 = vsel %vm406, %v682, 0
      %v719 = vsel %vm406, %v684, 0
      %v722 = vsel %vm406, %v686, 0
      %v725 = vsel %vm406, %v688, 0
      %v728 = vsel %vm406, %v690, 0
      %730 = vmatpush.bf16.msra.mxu0 0
      %731 = vmatpush.bf16.msra.mxu0 0
      %732 = vmatpush.bf16.msra.mxu0 0
      %733 = vmatpush.bf16.msra.mxu0 0
      %734 = vmatpush.bf16.msra.mxu0 %v710
      %735 = vmatpush.bf16.msra.mxu0 %v709
      %736 = vmatpush.bf16.msra.mxu0 %v708
      %737 = vmatpush.bf16.msra.mxu0 %v707
      %738 = vmatmul.bf16.gmra.mxu0 %v716
      %v739 = vpop.f32.mrf.mxu0
      %v740 = vadd.f32 0.0, %v739
      %v741 = vpop.f32.mrf.mxu0
      %v742 = vadd.f32 0.0, %v741
      %743 = vmatmul.bf16.gmra.mxu0 %v719
      %v744 = vpop.f32.mrf.mxu0
      %v745 = vadd.f32 0.0, %v744
      %v746 = vpop.f32.mrf.mxu0
      %v747 = vadd.f32 0.0, %v746
      %748 = vmatmul.bf16.gmra.mxu0 %v722
      %v749 = vpop.f32.mrf.mxu0
      %v750 = vadd.f32 0.0, %v749
      %v751 = vpop.f32.mrf.mxu0
      %v752 = vadd.f32 0.0, %v751
      %753 = vmatmul.bf16.gmra.mxu0 %v725
      %v754 = vpop.f32.mrf.mxu0
      %v755 = vadd.f32 0.0, %v754
      %v756 = vpop.f32.mrf.mxu0
      %v757 = vadd.f32 0.0, %v756
      %758 = vmatmul.bf16.gmra.mxu0 %v728
      %v759 = vpop.f32.mrf.mxu0
      %v760 = vadd.f32 0.0, %v759
      %v761 = vpop.f32.mrf.mxu0
      %v762 = vadd.f32 0.0, %v761
      %763 = vdwg.mxu0
      %v764 = vadd.f32 %v622, %v740
      %v765 = vadd.f32 %v623, %v742
      %v766 = vadd.f32 %v624, %v745
      %v767 = vadd.f32 %v625, %v747
      %v768 = vadd.f32 %v626, %v750
      %v769 = vadd.f32 %v627, %v752
      %v770 = vadd.f32 %v628, %v755
      %v771 = vadd.f32 %v629, %v757
      %v772 = vadd.f32 %v630, %v760
      %v773 = vadd.f32 %v631, %v762
      %v774 = vld [vmem:[%s256 + $0x2c] sm:$0x3]
      %s775 = scalar_lea.vmem %s260, 128
      %v776 = vld [vmem:[%s775] sm:$0xf]
      %v777 = vld [vmem:[%s775 + $0x4] sm:$0xf]
      %v778 = vld [vmem:[%s775 + $0x8] sm:$0xf]
      %v779 = vld [vmem:[%s775 + $0xc] sm:$0xf]
      %v780 = vld [vmem:[%s775 + $0x10] sm:$0xf]
      %v781 = vld [vmem:[%s775 + $0x14] sm:$0xf]
      %v782 = vld [vmem:[%s775 + $0x18] sm:$0xf]
      %v783 = vld [vmem:[%s775 + $0x1c] sm:$0xf]
      %v785 = vunpack.c.l.b16 %v774
      %v786 = vpack.c.b16 %v785, %v785
      %vm787 = vsmask.f32 6400
      %v789 = vshrl.u32 %v674, 16
      %v791 = vrot.slane %v789, 1
      %v792 = vshll.u32 %v674, 16
      %v794 = vrot.slane %v792, 2
      %v795 = vor.u32 %v791, %v794
      %v797 = vshrl.u32 %v675, 16
      %v799 = vrot.slane %v797, 1
      %v800 = vshll.u32 %v675, 16
      %v802 = vrot.slane %v800, 2
      %v803 = vor.u32 %v799, %v802
      %v804 = vsel %vm787, %v795, %v803
      %v806 = vshrl.u32 %v676, 16
      %v808 = vrot.slane %v806, 1
      %v809 = vshll.u32 %v676, 16
      %v811 = vrot.slane %v809, 2
      %v812 = vor.u32 %v808, %v811
      %v813 = vsel %vm787, %v803, %v812
      %v815 = vshrl.u32 %v677, 16
      %v817 = vrot.slane %v815, 1
      %v818 = vshll.u32 %v677, 16
      %v820 = vrot.slane %v818, 2
      %v821 = vor.u32 %v817, %v820
      %v822 = vsel %vm787, %v812, %v821
      %v824 = vshrl.u32 %v678, 16
      %v826 = vrot.slane %v824, 1
      %v827 = vshll.u32 %v678, 16
      %v829 = vrot.slane %v827, 2
      %v830 = vor.u32 %v826, %v829
      %v831 = vsel %vm787, %v821, %v830
      %v833 = vshrl.u32 %v786, 16
      %v835 = vrot.slane %v833, 1
      %v836 = vshll.u32 %v786, 16
      %v838 = vrot.slane %v836, 2
      %v839 = vor.u32 %v835, %v838
      %v840 = vsel %vm787, %v830, %v839
      %v849 = vunpack.c.l.b16 %v776
      %v850 = vunpack.c.l.b16 %v777
      %v851 = vunpack.c.l.b16 %v778
      %v852 = vunpack.c.l.b16 %v779
      %v853 = vunpack.c.l.b16 %v780
      %v854 = vunpack.c.l.b16 %v781
      %v855 = vunpack.c.l.b16 %v782
      %v856 = vunpack.c.l.b16 %v783
      %v857 = vpack.c.b16 %v850, %v849
      %v858 = vpack.c.b16 %v852, %v851
      %v859 = vpack.c.b16 %v854, %v853
      %v860 = vpack.c.b16 %v856, %v855
      %v866 = vsel %vm406, %v804, 0
      %v869 = vsel %vm406, %v813, 0
      %v872 = vsel %vm406, %v822, 0
      %v875 = vsel %vm406, %v831, 0
      %v878 = vsel %vm406, %v840, 0
      %880 = vmatpush.bf16.msra.mxu0 0
      %881 = vmatpush.bf16.msra.mxu0 0
      %882 = vmatpush.bf16.msra.mxu0 0
      %883 = vmatpush.bf16.msra.mxu0 0
      %884 = vmatpush.bf16.msra.mxu0 %v860
      %885 = vmatpush.bf16.msra.mxu0 %v859
      %886 = vmatpush.bf16.msra.mxu0 %v858
      %887 = vmatpush.bf16.msra.mxu0 %v857
      %888 = vmatmul.bf16.gmra.mxu0 %v866
      %v889 = vpop.f32.mrf.mxu0
      %v890 = vadd.f32 0.0, %v889
      %v891 = vpop.f32.mrf.mxu0
      %v892 = vadd.f32 0.0, %v891
      %893 = vmatmul.bf16.gmra.mxu0 %v869
      %v894 = vpop.f32.mrf.mxu0
      %v895 = vadd.f32 0.0, %v894
      %v896 = vpop.f32.mrf.mxu0
      %v897 = vadd.f32 0.0, %v896
      %898 = vmatmul.bf16.gmra.mxu0 %v872
      %v899 = vpop.f32.mrf.mxu0
      %v900 = vadd.f32 0.0, %v899
      %v901 = vpop.f32.mrf.mxu0
      %v902 = vadd.f32 0.0, %v901
      %903 = vmatmul.bf16.gmra.mxu0 %v875
      %v904 = vpop.f32.mrf.mxu0
      %v905 = vadd.f32 0.0, %v904
      %v906 = vpop.f32.mrf.mxu0
      %v907 = vadd.f32 0.0, %v906
      %908 = vmatmul.bf16.gmra.mxu0 %v878
      %v909 = vpop.f32.mrf.mxu0
      %v910 = vadd.f32 0.0, %v909
      %v911 = vpop.f32.mrf.mxu0
      %v912 = vadd.f32 0.0, %v911
      %913 = vdwg.mxu0
      %v914 = vadd.f32 %v764, %v890
      %v915 = vadd.f32 %v765, %v892
      %v916 = vadd.f32 %v766, %v895
      %v917 = vadd.f32 %v767, %v897
      %v918 = vadd.f32 %v768, %v900
      %v919 = vadd.f32 %v769, %v902
      %v920 = vadd.f32 %v770, %v905
      %v921 = vadd.f32 %v771, %v907
      %v922 = vadd.f32 %v772, %v910
      %v923 = vadd.f32 %v773, %v912
      %v924 = vld [vmem:[%s256 + $0x4] sm:$0xc]
      %s925 = scalar_lea.vmem %s260, 160
      %v926 = vld [vmem:[%s925] sm:$0xf]
      %v927 = vld [vmem:[%s925 + $0x4] sm:$0xf]
      %v928 = vld [vmem:[%s925 + $0x8] sm:$0xf]
      %v929 = vld [vmem:[%s925 + $0xc] sm:$0xf]
      %v930 = vld [vmem:[%s925 + $0x10] sm:$0xf]
      %v931 = vld [vmem:[%s925 + $0x14] sm:$0xf]
      %v932 = vld [vmem:[%s925 + $0x18] sm:$0xf]
      %v933 = vld [vmem:[%s925 + $0x1c] sm:$0xf]
      %v935 = vunpack.c.l.b16 %v924
      %v936 = vpack.c.b16 %v664, %v935
      %vm937 = vcmask 1045504
      %v938 = vrot.slane %v936, 2
      %v939 = vrot.slane %v675, 2
      %v940 = vsel %vm937, %v938, %v939
      %v941 = vrot.slane %v676, 2
      %v942 = vsel %vm937, %v939, %v941
      %v943 = vrot.slane %v677, 2
      %v944 = vsel %vm937, %v941, %v943
      %v945 = vrot.slane %v678, 2
      %v946 = vsel %vm937, %v943, %v945
      %v947 = vrot.slane %v786, 2
      %v948 = vsel %vm937, %v945, %v947
      %v957 = vunpack.c.l.b16 %v926
      %v958 = vunpack.c.l.b16 %v927
      %v959 = vunpack.c.l.b16 %v928
      %v960 = vunpack.c.l.b16 %v929
      %v961 = vunpack.c.l.b16 %v930
      %v962 = vunpack.c.l.b16 %v931
      %v963 = vunpack.c.l.b16 %v932
      %v964 = vunpack.c.l.b16 %v933
      %v965 = vpack.c.b16 %v958, %v957
      %v966 = vpack.c.b16 %v960, %v959
      %v967 = vpack.c.b16 %v962, %v961
      %v968 = vpack.c.b16 %v964, %v963
      %v974 = vsel %vm406, %v940, 0
      %v977 = vsel %vm406, %v942, 0
      %v980 = vsel %vm406, %v944, 0
      %v983 = vsel %vm406, %v946, 0
      %v986 = vsel %vm406, %v948, 0
      %988 = vmatpush.bf16.msra.mxu0 0
      %989 = vmatpush.bf16.msra.mxu0 0
      %990 = vmatpush.bf16.msra.mxu0 0
      %991 = vmatpush.bf16.msra.mxu0 0
      %992 = vmatpush.bf16.msra.mxu0 %v968
      %993 = vmatpush.bf16.msra.mxu0 %v967
      %994 = vmatpush.bf16.msra.mxu0 %v966
      %995 = vmatpush.bf16.msra.mxu0 %v965
      %996 = vmatmul.bf16.gmra.mxu0 %v974
      %v997 = vpop.f32.mrf.mxu0
      %v998 = vadd.f32 0.0, %v997
      %v999 = vpop.f32.mrf.mxu0
      %v1000 = vadd.f32 0.0, %v999
      %1001 = vmatmul.bf16.gmra.mxu0 %v977
      %v1002 = vpop.f32.mrf.mxu0
      %v1003 = vadd.f32 0.0, %v1002
      %v1004 = vpop.f32.mrf.mxu0
      %v1005 = vadd.f32 0.0, %v1004
      %1006 = vmatmul.bf16.gmra.mxu0 %v980
      %v1007 = vpop.f32.mrf.mxu0
      %v1008 = vadd.f32 0.0, %v1007
      %v1009 = vpop.f32.mrf.mxu0
      %v1010 = vadd.f32 0.0, %v1009
      %1011 = vmatmul.bf16.gmra.mxu0 %v983
      %v1012 = vpop.f32.mrf.mxu0
      %v1013 = vadd.f32 0.0, %v1012
      %v1014 = vpop.f32.mrf.mxu0
      %v1015 = vadd.f32 0.0, %v1014
      %1016 = vmatmul.bf16.gmra.mxu0 %v986
      %v1017 = vpop.f32.mrf.mxu0
      %v1018 = vadd.f32 0.0, %v1017
      %v1019 = vpop.f32.mrf.mxu0
      %v1020 = vadd.f32 0.0, %v1019
      %1021 = vdwg.mxu0
      %v1022 = vadd.f32 %v914, %v998
      %v1023 = vadd.f32 %v915, %v1000
      %v1024 = vadd.f32 %v916, %v1003
      %v1025 = vadd.f32 %v917, %v1005
      %v1026 = vadd.f32 %v918, %v1008
      %v1027 = vadd.f32 %v919, %v1010
      %v1028 = vadd.f32 %v920, %v1013
      %v1029 = vadd.f32 %v921, %v1015
      %v1030 = vadd.f32 %v922, %v1018
      %v1031 = vadd.f32 %v923, %v1020
      %v1032 = vld [vmem:[%s256 + $0x8] sm:$0xc]
      %v1033 = vld [vmem:[%s256 + $0xc] sm:$0xf]
      %v1034 = vld [vmem:[%s256 + $0x10] sm:$0xf]
      %v1035 = vld [vmem:[%s256 + $0x14] sm:$0xf]
      %v1036 = vld [vmem:[%s256 + $0x18] sm:$0xf]
      %v1037 = vld [vmem:[%s256 + $0x1c] sm:$0xf]
      %v1038 = vld [vmem:[%s256 + $0x20] sm:$0xf]
      %v1039 = vld [vmem:[%s256 + $0x24] sm:$0xf]
      %v1040 = vld [vmem:[%s256 + $0x28] sm:$0xf]
      %v1041 = vld [vmem:[%s256 + $0x2c] sm:$0xf]
      %v1042 = vld [vmem:[%s256 + $0x30] sm:$0x3]
      %s1043 = scalar_lea.vmem %s260, 192
      %v1044 = vld [vmem:[%s1043] sm:$0xf]
      %v1045 = vld [vmem:[%s1043 + $0x4] sm:$0xf]
      %v1046 = vld [vmem:[%s1043 + $0x8] sm:$0xf]
      %v1047 = vld [vmem:[%s1043 + $0xc] sm:$0xf]
      %v1048 = vld [vmem:[%s1043 + $0x10] sm:$0xf]
      %v1049 = vld [vmem:[%s1043 + $0x14] sm:$0xf]
      %v1050 = vld [vmem:[%s1043 + $0x18] sm:$0xf]
      %v1051 = vld [vmem:[%s1043 + $0x1c] sm:$0xf]
      %v1063 = vunpack.c.l.b16 %v1032
      %v1064 = vunpack.c.l.b16 %v1033
      %v1065 = vunpack.c.l.b16 %v1034
      %v1066 = vunpack.c.l.b16 %v1035
      %v1067 = vunpack.c.l.b16 %v1036
      %v1068 = vunpack.c.l.b16 %v1037
      %v1069 = vunpack.c.l.b16 %v1038
      %v1070 = vunpack.c.l.b16 %v1039
      %v1071 = vunpack.c.l.b16 %v1040
      %v1072 = vunpack.c.l.b16 %v1041
      %v1073 = vunpack.c.l.b16 %v1042
      %v1074 = vpack.c.b16 %v1064, %v1063
      %v1075 = vpack.c.b16 %v1066, %v1065
      %v1076 = vpack.c.b16 %v1068, %v1067
      %v1077 = vpack.c.b16 %v1070, %v1069
      %v1078 = vpack.c.b16 %v1072, %v1071
      %v1079 = vpack.c.b16 %v1073, %v1073
      %v1080 = vrot.slane %v1074, 2
      %v1081 = vrot.slane %v1075, 2
      %v1082 = vsel %vm937, %v1080, %v1081
      %v1083 = vrot.slane %v1076, 2
      %v1084 = vsel %vm937, %v1081, %v1083
      %v1085 = vrot.slane %v1077, 2
      %v1086 = vsel %vm937, %v1083, %v1085
      %v1087 = vrot.slane %v1078, 2
      %v1088 = vsel %vm937, %v1085, %v1087
      %v1089 = vrot.slane %v1079, 2
      %v1090 = vsel %vm937, %v1087, %v1089
      %v1099 = vunpack.c.l.b16 %v1044
      %v1100 = vunpack.c.l.b16 %v1045
      %v1101 = vunpack.c.l.b16 %v1046
      %v1102 = vunpack.c.l.b16 %v1047
      %v1103 = vunpack.c.l.b16 %v1048
      %v1104 = vunpack.c.l.b16 %v1049
      %v1105 = vunpack.c.l.b16 %v1050
      %v1106 = vunpack.c.l.b16 %v1051
      %v1107 = vpack.c.b16 %v1100, %v1099
      %v1108 = vpack.c.b16 %v1102, %v1101
      %v1109 = vpack.c.b16 %v1104, %v1103
      %v1110 = vpack.c.b16 %v1106, %v1105
      %v1116 = vsel %vm406, %v1082, 0
      %v1119 = vsel %vm406, %v1084, 0
      %v1122 = vsel %vm406, %v1086, 0
      %v1125 = vsel %vm406, %v1088, 0
      %v1128 = vsel %vm406, %v1090, 0
      %1130 = vmatpush.bf16.msra.mxu0 0
      %1131 = vmatpush.bf16.msra.mxu0 0
      %1132 = vmatpush.bf16.msra.mxu0 0
      %1133 = vmatpush.bf16.msra.mxu0 0
      %1134 = vmatpush.bf16.msra.mxu0 %v1110
      %1135 = vmatpush.bf16.msra.mxu0 %v1109
      %1136 = vmatpush.bf16.msra.mxu0 %v1108
      %1137 = vmatpush.bf16.msra.mxu0 %v1107
      %1138 = vmatmul.bf16.gmra.mxu0 %v1116
      %v1139 = vpop.f32.mrf.mxu0
      %v1140 = vadd.f32 0.0, %v1139
      %v1141 = vpop.f32.mrf.mxu0
      %v1142 = vadd.f32 0.0, %v1141
      %1143 = vmatmul.bf16.gmra.mxu0 %v1119
      %v1144 = vpop.f32.mrf.mxu0
      %v1145 = vadd.f32 0.0, %v1144
      %v1146 = vpop.f32.mrf.mxu0
      %v1147 = vadd.f32 0.0, %v1146
      %1148 = vmatmul.bf16.gmra.mxu0 %v1122
      %v1149 = vpop.f32.mrf.mxu0
      %v1150 = vadd.f32 0.0, %v1149
      %v1151 = vpop.f32.mrf.mxu0
      %v1152 = vadd.f32 0.0, %v1151
      %1153 = vmatmul.bf16.gmra.mxu0 %v1125
      %v1154 = vpop.f32.mrf.mxu0
      %v1155 = vadd.f32 0.0, %v1154
      %v1156 = vpop.f32.mrf.mxu0
      %v1157 = vadd.f32 0.0, %v1156
      %1158 = vmatmul.bf16.gmra.mxu0 %v1128
      %v1159 = vpop.f32.mrf.mxu0
      %v1160 = vadd.f32 0.0, %v1159
      %v1161 = vpop.f32.mrf.mxu0
      %v1162 = vadd.f32 0.0, %v1161
      %1163 = vdwg.mxu0
      %v1164 = vadd.f32 %v1022, %v1140
      %v1165 = vadd.f32 %v1023, %v1142
      %v1166 = vadd.f32 %v1024, %v1145
      %v1167 = vadd.f32 %v1025, %v1147
      %v1168 = vadd.f32 %v1026, %v1150
      %v1169 = vadd.f32 %v1027, %v1152
      %v1170 = vadd.f32 %v1028, %v1155
      %v1171 = vadd.f32 %v1029, %v1157
      %v1172 = vadd.f32 %v1030, %v1160
      %v1173 = vadd.f32 %v1031, %v1162
      %v1174 = vld [vmem:[%s256 + $0x30] sm:$0x7]
      %s1175 = scalar_lea.vmem %s260, 224
      %v1176 = vld [vmem:[%s1175] sm:$0xf]
      %v1177 = vld [vmem:[%s1175 + $0x4] sm:$0xf]
      %v1178 = vld [vmem:[%s1175 + $0x8] sm:$0xf]
      %v1179 = vld [vmem:[%s1175 + $0xc] sm:$0xf]
      %v1180 = vld [vmem:[%s1175 + $0x10] sm:$0xf]
      %v1181 = vld [vmem:[%s1175 + $0x14] sm:$0xf]
      %v1182 = vld [vmem:[%s1175 + $0x18] sm:$0xf]
      %v1183 = vld [vmem:[%s1175 + $0x1c] sm:$0xf]
      %v1185 = vunpack.c.l.b16 %v1174
      %v1186 = vpack.c.b16 %v1185, %v1185
      %vm1187 = vsmask.f32 5376
      %v1189 = vshrl.u32 %v1074, 16
      %v1191 = vrot.slane %v1189, 2
      %v1192 = vshll.u32 %v1074, 16
      %v1194 = vrot.slane %v1192, 3
      %v1195 = vor.u32 %v1191, %v1194
      %v1197 = vshrl.u32 %v1075, 16
      %v1199 = vrot.slane %v1197, 2
      %v1200 = vshll.u32 %v1075, 16
      %v1202 = vrot.slane %v1200, 3
      %v1203 = vor.u32 %v1199, %v1202
      %v1204 = vsel %vm1187, %v1195, %v1203
      %v1206 = vshrl.u32 %v1076, 16
      %v1208 = vrot.slane %v1206, 2
      %v1209 = vshll.u32 %v1076, 16
      %v1211 = vrot.slane %v1209, 3
      %v1212 = vor.u32 %v1208, %v1211
      %v1213 = vsel %vm1187, %v1203, %v1212
      %v1215 = vshrl.u32 %v1077, 16
      %v1217 = vrot.slane %v1215, 2
      %v1218 = vshll.u32 %v1077, 16
      %v1220 = vrot.slane %v1218, 3
      %v1221 = vor.u32 %v1217, %v1220
      %v1222 = vsel %vm1187, %v1212, %v1221
      %v1224 = vshrl.u32 %v1078, 16
      %v1226 = vrot.slane %v1224, 2
      %v1227 = vshll.u32 %v1078, 16
      %v1229 = vrot.slane %v1227, 3
      %v1230 = vor.u32 %v1226, %v1229
      %v1231 = vsel %vm1187, %v1221, %v1230
      %v1233 = vshrl.u32 %v1186, 16
      %v1235 = vrot.slane %v1233, 2
      %v1236 = vshll.u32 %v1186, 16
      %v1238 = vrot.slane %v1236, 3
      %v1239 = vor.u32 %v1235, %v1238
      %v1240 = vsel %vm1187, %v1230, %v1239
      %v1249 = vunpack.c.l.b16 %v1176
      %v1250 = vunpack.c.l.b16 %v1177
      %v1251 = vunpack.c.l.b16 %v1178
      %v1252 = vunpack.c.l.b16 %v1179
      %v1253 = vunpack.c.l.b16 %v1180
      %v1254 = vunpack.c.l.b16 %v1181
      %v1255 = vunpack.c.l.b16 %v1182
      %v1256 = vunpack.c.l.b16 %v1183
      %v1257 = vpack.c.b16 %v1250, %v1249
      %v1258 = vpack.c.b16 %v1252, %v1251
      %v1259 = vpack.c.b16 %v1254, %v1253
      %v1260 = vpack.c.b16 %v1256, %v1255
      %v1266 = vsel %vm406, %v1204, 0
      %v1269 = vsel %vm406, %v1213, 0
      %v1272 = vsel %vm406, %v1222, 0
      %v1275 = vsel %vm406, %v1231, 0
      %v1278 = vsel %vm406, %v1240, 0
      %1280 = vmatpush.bf16.msra.mxu0 0
      %1281 = vmatpush.bf16.msra.mxu0 0
      %1282 = vmatpush.bf16.msra.mxu0 0
      %1283 = vmatpush.bf16.msra.mxu0 0
      %1284 = vmatpush.bf16.msra.mxu0 %v1260
      %1285 = vmatpush.bf16.msra.mxu0 %v1259
      %1286 = vmatpush.bf16.msra.mxu0 %v1258
      %1287 = vmatpush.bf16.msra.mxu0 %v1257
      %1288 = vmatmul.bf16.gmra.mxu0 %v1266
      %v1289 = vpop.f32.mrf.mxu0
      %v1290 = vadd.f32 0.0, %v1289
      %v1291 = vpop.f32.mrf.mxu0
      %v1292 = vadd.f32 0.0, %v1291
      %1293 = vmatmul.bf16.gmra.mxu0 %v1269
      %v1294 = vpop.f32.mrf.mxu0
      %v1295 = vadd.f32 0.0, %v1294
      %v1296 = vpop.f32.mrf.mxu0
      %v1297 = vadd.f32 0.0, %v1296
      %1298 = vmatmul.bf16.gmra.mxu0 %v1272
      %v1299 = vpop.f32.mrf.mxu0
      %v1300 = vadd.f32 0.0, %v1299
      %v1301 = vpop.f32.mrf.mxu0
      %v1302 = vadd.f32 0.0, %v1301
      %1303 = vmatmul.bf16.gmra.mxu0 %v1275
      %v1304 = vpop.f32.mrf.mxu0
      %v1305 = vadd.f32 0.0, %v1304
      %v1306 = vpop.f32.mrf.mxu0
      %v1307 = vadd.f32 0.0, %v1306
      %1308 = vmatmul.bf16.gmra.mxu0 %v1278
      %v1309 = vpop.f32.mrf.mxu0
      %v1310 = vadd.f32 0.0, %v1309
      %v1311 = vpop.f32.mrf.mxu0
      %v1312 = vadd.f32 0.0, %v1311
      %1313 = vdwg.mxu0
      %v1314 = vadd.f32 %v1164, %v1290
      %v1315 = vadd.f32 %v1165, %v1292
      %v1316 = vadd.f32 %v1166, %v1295
      %v1317 = vadd.f32 %v1167, %v1297
      %v1318 = vadd.f32 %v1168, %v1300
      %v1319 = vadd.f32 %v1169, %v1302
      %v1320 = vadd.f32 %v1170, %v1305
      %v1321 = vadd.f32 %v1171, %v1307
      %v1322 = vadd.f32 %v1172, %v1310
      %v1323 = vadd.f32 %v1173, %v1312
      %v1324 = vld [vmem:[%s256 + $0x8] sm:$0x8]
      %s1325 = scalar_lea.vmem %s260, 256
      %v1326 = vld [vmem:[%s1325] sm:$0xf]
      %v1327 = vld [vmem:[%s1325 + $0x4] sm:$0xf]
      %v1328 = vld [vmem:[%s1325 + $0x8] sm:$0xf]
      %v1329 = vld [vmem:[%s1325 + $0xc] sm:$0xf]
      %v1330 = vld [vmem:[%s1325 + $0x10] sm:$0xf]
      %v1331 = vld [vmem:[%s1325 + $0x14] sm:$0xf]
      %v1332 = vld [vmem:[%s1325 + $0x18] sm:$0xf]
      %v1333 = vld [vmem:[%s1325 + $0x1c] sm:$0xf]
      %v1335 = vunpack.c.l.b16 %v1324
      %v1336 = vpack.c.b16 %v1064, %v1335
      %vm1337 = vcmask 1044480
      %v1338 = vrot.slane %v1336, 3
      %v1339 = vrot.slane %v1075, 3
      %v1340 = vsel %vm1337, %v1338, %v1339
      %v1341 = vrot.slane %v1076, 3
      %v1342 = vsel %vm1337, %v1339, %v1341
      %v1343 = vrot.slane %v1077, 3
      %v1344 = vsel %vm1337, %v1341, %v1343
      %v1345 = vrot.slane %v1078, 3
      %v1346 = vsel %vm1337, %v1343, %v1345
      %v1347 = vrot.slane %v1186, 3
      %v1348 = vsel %vm1337, %v1345, %v1347
      %v1357 = vunpack.c.l.b16 %v1326
      %v1358 = vunpack.c.l.b16 %v1327
      %v1359 = vunpack.c.l.b16 %v1328
      %v1360 = vunpack.c.l.b16 %v1329
      %v1361 = vunpack.c.l.b16 %v1330
      %v1362 = vunpack.c.l.b16 %v1331
      %v1363 = vunpack.c.l.b16 %v1332
      %v1364 = vunpack.c.l.b16 %v1333
      %v1365 = vpack.c.b16 %v1358, %v1357
      %v1366 = vpack.c.b16 %v1360, %v1359
      %v1367 = vpack.c.b16 %v1362, %v1361
      %v1368 = vpack.c.b16 %v1364, %v1363
      %v1374 = vsel %vm406, %v1340, 0
      %v1377 = vsel %vm406, %v1342, 0
      %v1380 = vsel %vm406, %v1344, 0
      %v1383 = vsel %vm406, %v1346, 0
      %v1386 = vsel %vm406, %v1348, 0
      %1388 = vmatpush.bf16.msra.mxu0 0
      %1389 = vmatpush.bf16.msra.mxu0 0
      %1390 = vmatpush.bf16.msra.mxu0 0
      %1391 = vmatpush.bf16.msra.mxu0 0
      %1392 = vmatpush.bf16.msra.mxu0 %v1368
      %1393 = vmatpush.bf16.msra.mxu0 %v1367
      %1394 = vmatpush.bf16.msra.mxu0 %v1366
      %1395 = vmatpush.bf16.msra.mxu0 %v1365
      %1396 = vmatmul.bf16.gmra.mxu0 %v1374
      %v1397 = vpop.f32.mrf.mxu0
      %v1398 = vadd.f32 0.0, %v1397
      %v1399 = vpop.f32.mrf.mxu0
      %v1400 = vadd.f32 0.0, %v1399
      %1401 = vmatmul.bf16.gmra.mxu0 %v1377
      %v1402 = vpop.f32.mrf.mxu0
      %v1403 = vadd.f32 0.0, %v1402
      %v1404 = vpop.f32.mrf.mxu0
      %v1405 = vadd.f32 0.0, %v1404
      %1406 = vmatmul.bf16.gmra.mxu0 %v1380
      %v1407 = vpop.f32.mrf.mxu0
      %v1408 = vadd.f32 0.0, %v1407
      %v1409 = vpop.f32.mrf.mxu0
      %v1410 = vadd.f32 0.0, %v1409
      %1411 = vmatmul.bf16.gmra.mxu0 %v1383
      %v1412 = vpop.f32.mrf.mxu0
      %v1413 = vadd.f32 0.0, %v1412
      %v1414 = vpop.f32.mrf.mxu0
      %v1415 = vadd.f32 0.0, %v1414
      %1416 = vmatmul.bf16.gmra.mxu0 %v1386
      %v1417 = vpop.f32.mrf.mxu0
      %v1418 = vadd.f32 0.0, %v1417
      %v1419 = vpop.f32.mrf.mxu0
      %v1420 = vadd.f32 0.0, %v1419
      %1421 = vdwg.mxu0
      %v1422 = vadd.f32 %v1314, %v1398
      %v1423 = vadd.f32 %v1315, %v1400
      %v1424 = vadd.f32 %v1316, %v1403
      %v1425 = vadd.f32 %v1317, %v1405
      %v1426 = vadd.f32 %v1318, %v1408
      %v1427 = vadd.f32 %v1319, %v1410
      %v1428 = vadd.f32 %v1320, %v1413
      %v1429 = vadd.f32 %v1321, %v1415
      %v1430 = vadd.f32 %v1322, %v1418
      %v1431 = vadd.f32 %v1323, %v1420
      %v1432 = vld [vmem:[%s263] sm:$0x1]
      %v1434 = vperm.slane %v1432, 0
      %v1436 = vadd.f32 %v1422, %v1434
      %v1437 = vadd.f32 %v1423, %v1434
      %v1438 = vadd.f32 %v1424, %v1434
      %v1439 = vadd.f32 %v1425, %v1434
      %v1440 = vadd.f32 %v1426, %v1434
      %v1441 = vadd.f32 %v1427, %v1434
      %v1442 = vadd.f32 %v1428, %v1434
      %v1443 = vadd.f32 %v1429, %v1434
      %v1444 = vadd.f32 %v1430, %v1434
      %v1445 = vadd.f32 %v1431, %v1434
      %v1446 = vld [vmem:[%s271] sm:$0xf]
      %v1447 = vld [vmem:[%s271 + $0x4] sm:$0xf]
      %v1448 = vld [vmem:[%s271 + $0x8] sm:$0xf]
      %v1449 = vld [vmem:[%s271 + $0xc] sm:$0xf]
      %v1450 = vld [vmem:[%s271 + $0x10] sm:$0xf]
      %v1451 = vld [vmem:[%s271 + $0x14] sm:$0xf]
      %v1452 = vld [vmem:[%s271 + $0x18] sm:$0xf]
      %v1453 = vld [vmem:[%s271 + $0x1c] sm:$0xf]
      %v1454 = vld [vmem:[%s271 + $0x20] sm:$0xf]
      %v1455 = vld [vmem:[%s271 + $0x24] sm:$0xf]
      %v1456 = vunpack.c.l.bf16 %v1446
      %v1457 = vunpack.c.l.bf16 %v1447
      %v1458 = vunpack.c.l.bf16 %v1448
      %v1459 = vunpack.c.l.bf16 %v1449
      %v1460 = vunpack.c.l.bf16 %v1450
      %v1461 = vunpack.c.l.bf16 %v1451
      %v1462 = vunpack.c.l.bf16 %v1452
      %v1463 = vunpack.c.l.bf16 %v1453
      %v1464 = vunpack.c.l.bf16 %v1454
      %v1465 = vunpack.c.l.bf16 %v1455
      %v1466 = vadd.f32 %v1436, %v1456
      %v1467 = vadd.f32 %v1437, %v1457
      %v1468 = vadd.f32 %v1438, %v1458
      %v1469 = vadd.f32 %v1439, %v1459
      %v1470 = vadd.f32 %v1440, %v1460
      %v1471 = vadd.f32 %v1441, %v1461
      %v1472 = vadd.f32 %v1442, %v1462
      %v1473 = vadd.f32 %v1443, %v1463
      %v1474 = vadd.f32 %v1444, %v1464
      %v1475 = vadd.f32 %v1445, %v1465
      %v1476 = vmax.f32 %v1466, 0.0
      %v1477 = vmax.f32 %v1467, 0.0
      %v1478 = vmax.f32 %v1468, 0.0
      %v1479 = vmax.f32 %v1469, 0.0
      %v1480 = vmax.f32 %v1470, 0.0
      %v1481 = vmax.f32 %v1471, 0.0
      %v1482 = vmax.f32 %v1472, 0.0
      %v1483 = vmax.f32 %v1473, 0.0
      %v1484 = vmax.f32 %v1474, 0.0
      %v1485 = vmax.f32 %v1475, 0.0
      %v1486 = vpack.c.bf16 %v1476, %v1476
      %v1487 = vpack.c.bf16 %v1477, %v1477
      %v1488 = vpack.c.bf16 %v1478, %v1478
      %v1489 = vpack.c.bf16 %v1479, %v1479
      %v1490 = vpack.c.bf16 %v1480, %v1480
      %v1491 = vpack.c.bf16 %v1481, %v1481
      %v1492 = vpack.c.bf16 %v1482, %v1482
      %v1493 = vpack.c.bf16 %v1483, %v1483
      %v1494 = vpack.c.bf16 %v1484, %v1484
      %v1495 = vpack.c.bf16 %v1485, %v1485
      %vm1496 = vcmask 519168
      %1497 = vst.msk [vmem:[%s279] sm:$0xf] %vm1496, %v1486
      %1498 = vst.msk [vmem:[%s279 + $0x4] sm:$0xf] %vm1496, %v1487
      %1499 = vst.msk [vmem:[%s279 + $0x8] sm:$0xf] %vm1496, %v1488
      %1500 = vst.msk [vmem:[%s279 + $0xc] sm:$0xf] %vm1496, %v1489
      %1501 = vst.msk [vmem:[%s279 + $0x10] sm:$0xf] %vm1496, %v1490
      %1502 = vst.msk [vmem:[%s279 + $0x14] sm:$0xf] %vm1496, %v1491
      %1503 = vst.msk [vmem:[%s279 + $0x18] sm:$0xf] %vm1496, %v1492
      %1504 = vst.msk [vmem:[%s279 + $0x1c] sm:$0xf] %vm1496, %v1493
      %1505 = vst.msk [vmem:[%s279 + $0x20] sm:$0xf] %vm1496, %v1494
      %1506 = vst.msk [vmem:[%s279 + $0x24] sm:$0xf] %vm1496, %v1495
      %p1507 = scmp.lt.s32.totalorder %s19, 1
      %s1508 = scalar_select %p1507, %s19, 1
      %p1509 = scmp.lt.s32.totalorder %s20, 0
      %s1510 = scalar_select %p1509, %s20, 0
      %s1511 = smul.addr %s1508, 10
      %s1512 = sadd.s32 %s1510, %s1511
      %s1513 = smul.addr %s1512, 4
      %s1514 = scalar_lea.vmem %s4, %s1513
      // Predicated region
      $region37: #{forward.15} parent=35 // pred_check
        %p1515 = pneg %p153
      $region38: #{forward.15} parent=35 // pred_check_branch
        %1517 = sbr.rel (%p1515) target = $region40
      $region39: #{forward.15} parent=35 // pred_region
        _
      $region40: #{forward.15} parent=35 // pred_fallthru
        _
    $region36: #{forward.15} parent=5 // pred_fallthru
      _
    %p1518 = scmp.le.s32.totalorder 2, %s10
    // Predicated region
    $region41: #{forward.15} parent=5 // pred_check
      %p1519 = pneg %p1518
    $region42: #{forward.15} parent=5 // pred_check_branch
      %1521 = sbr.rel (%p1519) target = $region44
    $region43: #{forward.15} parent=5 // pred_region
      %s1522 = ssub.s32 %s10, 2
      // Predicated region
      $region45: #{forward.15} parent=43 // pred_check
        %p1523 = pneg %p159
      $region46: #{forward.15} parent=43 // pred_check_branch
        %1525 = sbr.rel (%p1523) target = $region48
      $region47: #{forward.15} parent=43 // pred_region
        %p1526 = scmp.lt.s32.totalorder %s21, 1
        %s1527 = scalar_select %p1526, %s21, 1
        %p1528 = scmp.lt.s32.totalorder %s22, 0
        %s1529 = scalar_select %p1528, %s22, 0
        %s1530 = smul.addr %s1527, 10
        %s1531 = sadd.s32 %s1529, %s1530
        %s1532 = smul.addr %s1531, 4
        %s1533 = scalar_lea.vmem %s4, %s1532
      $region48: #{forward.15} parent=43 // pred_fallthru
        _
    $region44: #{forward.15} parent=5 // pred_fallthru
      _
  $region6: #{forward.15} parent=0 // loop_footer
    %s14 = sadd.s32 1, %s10
  $region7: #{forward.15} parent=0 // loop_footer_branch
    %9 = sbr.rel target = $region3
  $region8: #{forward.15} parent=0 // loop_exit
    _

// kernel: forward.11
$region0: #{forward.11}
  #allocation0 [shape = 'u32[]', space=smem, size = 0x4, offset = 0x4, fixed_abs, tag = 'smem constant byte address 0x4 - core index']
  #allocation1 [shape = 'u32[72,128]{1,0:T(1,128)}', space=vmem, size = 0x9000, scoped, tag = 'internal scratch']
  %s0 = inlined_call_operand.vmem [shape: bf16[2,1,110,64], index: 0, kind: input, shape index: {}]
  %s1 = inlined_call_operand.vmem [shape: bf16[9,64,64], index: 1, kind: input, shape index: {}]
  %s2 = inlined_call_operand.vmem [shape: f32[1,64], index: 2, kind: input, shape index: {}]
  %s3 = inlined_call_operand.vmem [shape: bf16[2,80,64], index: 3, kind: output, shape index: {}]
  %s4 = sld [smem:[#allocation0]]
  $region45: #{forward.11} parent=0
    _
  %s6 = ssub.s32 1, %s4
  %s7 = scalar_select 0, %s6, %s4
  loop: start=0, step=1, limit=4
  $region2: #{forward.11} parent=0 // loop_pre_header
    _
  $region3: #{forward.11} parent=0 // loop_header
    %s9 = sphi 0, %s13
    %p10 = scmp.ge.s32.totalorder %s9, 4
    %s16 = sphi 0, %s28
    %s17 = sphi 0, %s24
    %s18 = sphi 0, %s16
    %s19 = sphi 0, %s17
    %s20 = sphi 0, %s18
    %s21 = sphi 0, %s19
    %s31 = sphi 0, %s33
    %s34 = sphi 0, %s31
    %s35 = sphi 0, %s34
    %s51 = sphi 0, %s35
    %s57 = sphi 0, %s59
    %s60 = sphi 0, %s57
    %s61 = sphi 0, %s60
    %s77 = sphi 0, %s61
    %s83 = sphi 0, %s85
    %s86 = sphi 0, %s83
    %s87 = sphi 0, %s86
    %s103 = sphi 0, %s87
    %s111 = sphi 0, %s113
    %s114 = sphi 0, %s111
    %s115 = sphi 0, %s114
    %s131 = sphi 0, %s115
  $region4: #{forward.11} parent=0 // loop_header_branch
    %12 = sbr.rel (%p10) target = $region8
  $region5: #{forward.11} parent=0 // loop_body
    %s14 = ssub.s32 %s9, 1
    %s15 = ssub.s32 %s9, 2
    %s22 = sadd.s32 1, %s17
    %p23 = scmp.ge.s32.totalorder %s22, 1
    %s24 = scalar_select %p23, 0, %s22
    %s25 = sadd.s32 1, %s16
    %s26 = scalar_select %p23, %s25, %s16
    %p27 = scmp.ge.s32.totalorder %s26, 2
    %s28 = scalar_select %p27, 0, %s26
    %s29 = ssub.s32 %s16, %s28
    %p30 = scmp.eq.s32.totalorder %s29, 0
    %s32 = sadd.s32 %s31, 1
    %s33 = scalar_select %p30, %s31, %s32
    %p36 = pneg %p30
    %p37 = scmp.eq.s32.totalorder %s9, 1
    %p38 = por %p36, %p37
    %p39 = scmp.ne.s32.totalorder %s31, %s34
    %p40 = scmp.eq.s32.totalorder %s9, 0
    %p41 = por %p39, %p40
    %p42 = scmp.ne.s32.totalorder %s31, %s34
    %p43 = scmp.eq.s32.totalorder %s14, 1
    %p44 = por %p42, %p43
    %p45 = scmp.ne.s32.totalorder %s34, %s35
    %p46 = scmp.eq.s32.totalorder %s14, 0
    %p47 = por %p45, %p46
    %p48 = scmp.ne.s32.totalorder %s34, %s35
    %p49 = scmp.eq.s32.totalorder %s15, 1
    %p50 = por %p48, %p49
    %p52 = scmp.ne.s32.totalorder %s35, %s51
    %p53 = scmp.eq.s32.totalorder %s15, 0
    %p54 = por %p52, %p53
    %s55 = ssub.s32 %s17, %s24
    %p56 = scmp.eq.s32.totalorder %s55, 0
    %s58 = sadd.s32 %s57, 1
    %s59 = scalar_select %p56, %s57, %s58
    %p62 = pneg %p56
    %p63 = scmp.eq.s32.totalorder %s9, 1
    %p64 = por %p62, %p63
    %p65 = scmp.ne.s32.totalorder %s57, %s60
    %p66 = scmp.eq.s32.totalorder %s9, 0
    %p67 = por %p65, %p66
    %p68 = scmp.ne.s32.totalorder %s57, %s60
    %p69 = scmp.eq.s32.totalorder %s14, 1
    %p70 = por %p68, %p69
    %p71 = scmp.ne.s32.totalorder %s60, %s61
    %p72 = scmp.eq.s32.totalorder %s14, 0
    %p73 = por %p71, %p72
    %p74 = scmp.ne.s32.totalorder %s60, %s61
    %p75 = scmp.eq.s32.totalorder %s15, 1
    %p76 = por %p74, %p75
    %p78 = scmp.ne.s32.totalorder %s61, %s77
    %p79 = scmp.eq.s32.totalorder %s15, 0
    %p80 = por %p78, %p79
    %s81 = ssub.s32 %s17, %s24
    %p82 = scmp.eq.s32.totalorder %s81, 0
    %s84 = sadd.s32 %s83, 1
    %s85 = scalar_select %p82, %s83, %s84
    %p88 = pneg %p82
    %p89 = scmp.eq.s32.totalorder %s9, 1
    %p90 = por %p88, %p89
    %p91 = scmp.ne.s32.totalorder %s83, %s86
    %p92 = scmp.eq.s32.totalorder %s9, 0
    %p93 = por %p91, %p92
    %p94 = scmp.ne.s32.totalorder %s83, %s86
    %p95 = scmp.eq.s32.totalorder %s14, 1
    %p96 = por %p94, %p95
    %p97 = scmp.ne.s32.totalorder %s86, %s87
    %p98 = scmp.eq.s32.totalorder %s14, 0
    %p99 = por %p97, %p98
    %p100 = scmp.ne.s32.totalorder %s86, %s87
    %p101 = scmp.eq.s32.totalorder %s15, 1
    %p102 = por %p100, %p101
    %p104 = scmp.ne.s32.totalorder %s87, %s103
    %p105 = scmp.eq.s32.totalorder %s15, 0
    %p106 = por %p104, %p105
    %s107 = ssub.s32 %s16, %s28
    %s108 = ssub.s32 %s17, %s24
    %s109 = sor.u32 %s107, %s108
    %p110 = scmp.eq.s32.totalorder %s109, 0
    %s112 = sadd.s32 %s111, 1
    %s113 = scalar_select %p110, %s111, %s112
    %p116 = pneg %p110
    %p117 = scmp.eq.s32.totalorder %s9, 1
    %p118 = por %p116, %p117
    %p119 = scmp.ne.s32.totalorder %s111, %s114
    %p120 = scmp.eq.s32.totalorder %s9, 0
    %p121 = por %p119, %p120
    %p122 = scmp.ne.s32.totalorder %s111, %s114
    %p123 = scmp.eq.s32.totalorder %s14, 1
    %p124 = por %p122, %p123
    %p125 = scmp.ne.s32.totalorder %s114, %s115
    %p126 = scmp.eq.s32.totalorder %s14, 0
    %p127 = por %p125, %p126
    %p128 = scmp.ne.s32.totalorder %s114, %s115
    %p129 = scmp.eq.s32.totalorder %s15, 1
    %p130 = por %p128, %p129
    %p132 = scmp.ne.s32.totalorder %s115, %s131
    %p133 = scmp.eq.s32.totalorder %s15, 0
    %p134 = por %p132, %p133
    %p135 = scmp.le.s32.totalorder 1, %s9
    %p136 = scmp.lt.s32.totalorder %s9, 3
    %p137 = pnand %p135, %p136
    %p138 = pneg %p137
    // Predicated region
    $region9: #{forward.11} parent=5 // pred_check
      _
    $region10: #{forward.11} parent=5 // pred_check_branch
      %140 = sbr.rel (%p137) target = $region12
    $region11: #{forward.11} parent=5 // pred_region
      %s141 = ssub.s32 %s9, 1
      // Predicated region
      $region13: #{forward.11} parent=11 // pred_check
        %p142 = pneg %p73
      $region14: #{forward.11} parent=11 // pred_check_branch
        %144 = sbr.rel (%p142) target = $region16
      $region15: #{forward.11} parent=11 // pred_region
        %p145 = scmp.lt.s32.totalorder %s19, 0
        %s146 = scalar_select %p145, %s19, 0
        %s147 = smul.addr %s146, 4
        %s148 = scalar_lea.vmem %s1, %s147
      $region16: #{forward.11} parent=11 // pred_fallthru
        _
      // Predicated region
      $region17: #{forward.11} parent=11 // pred_check
        %p149 = pneg %p99
      $region18: #{forward.11} parent=11 // pred_check_branch
        %151 = sbr.rel (%p149) target = $region20
      $region19: #{forward.11} parent=11 // pred_region
        %p152 = scmp.lt.s32.totalorder %s19, 0
        %s153 = scalar_select %p152, %s19, 0
        %s154 = scalar_lea.vmem %s2, %s153
      $region20: #{forward.11} parent=11 // pred_fallthru
        _
    $region12: #{forward.11} parent=5 // pred_fallthru
      _
    %p155 = scmp.lt.s32.totalorder %s9, 2
    // Predicated region
    $region21: #{forward.11} parent=5 // pred_check
      %p156 = pneg %p155
    $region22: #{forward.11} parent=5 // pred_check_branch
      %158 = sbr.rel (%p156) target = $region24
    $region23: #{forward.11} parent=5 // pred_region
      // Predicated region
      $region25: #{forward.11} parent=23 // pred_check
        %p159 = pneg %p41
      $region26: #{forward.11} parent=23 // pred_check_branch
        %161 = sbr.rel (%p159) target = $region28
      $region27: #{forward.11} parent=23 // pred_region
        %p162 = scmp.lt.s32.totalorder %s16, 1
        %s163 = scalar_select %p162, %s16, 1
        %s164 = smul.addr %s163, 14
        %s165 = smul.addr %s164, 4
        %s166 = scalar_lea.vmem %s0, %s165
      $region28: #{forward.11} parent=23 // pred_fallthru
        _
    $region24: #{forward.11} parent=5 // pred_fallthru
      _
    %p167 = scmp.le.s32.totalorder 1, %s9
    %p168 = scmp.lt.s32.totalorder %s9, 3
    %p169 = pnand %p167, %p168
    %p170 = pneg %p169
    // Predicated region
    $region29: #{forward.11} parent=5 // pred_check
      _
    $region30: #{forward.11} parent=5 // pred_check_branch
      %172 = sbr.rel (%p169) target = $region32
    $region31: #{forward.11} parent=5 // pred_region
      %s173 = ssub.s32 %s9, 1
      %p174 = scmp.lt.s32.totalorder %s18, 1
      %s175 = scalar_select %p174, %s18, 1
      %s176 = smul.addr %s175, 14
      %s177 = smul.addr %s176, 4
      %s178 = scalar_lea.vmem %s0, %s177
      %p179 = pneg %p47
      %p180 = pneg %p44
      %p181 = scmp.lt.s32.totalorder %s19, 0
      %s182 = scalar_select %p181, %s19, 0
      %s183 = smul.addr %s182, 4
      %s184 = scalar_lea.vmem %s1, %s183
      %p185 = pneg %p73
      %p186 = pneg %p70
      %p187 = scmp.lt.s32.totalorder %s19, 0
      %s188 = scalar_select %p187, %s19, 0
      %s189 = scalar_lea.vmem %s2, %s188
      %p190 = pneg %p99
      %p191 = pneg %p96
      %p192 = pneg %p127
      %p193 = pneg %p124
      %p194 = scmp.lt.s32.totalorder %s18, 1
      %s195 = scalar_select %p194, %s18, 1
      %p196 = scmp.lt.s32.totalorder %s19, 0
      %s197 = scalar_select %p196, %s19, 0
      %s198 = smul.addr %s195, 10
      %s199 = sadd.s32 %s197, %s198
      %s200 = smul.addr %s199, 4
      %s201 = scalar_lea.vmem %s3, %s200
      %p202 = scmp.lt.s32.totalorder %s18, 1
      %s203 = scalar_select %p202, %s18, 1
      %s204 = smul.addr %s203, 14
      %s205 = smul.addr %s204, 4
      %s206 = scalar_lea.vmem %s0, %s205
      %p207 = scmp.lt.s32.totalorder %s19, 0
      %s208 = scalar_select %p207, %s19, 0
      %s209 = smul.addr %s208, 4
      %s210 = scalar_lea.vmem %s1, %s209
      %p211 = scmp.lt.s32.totalorder %s19, 0
      %s212 = scalar_select %p211, %s19, 0
      %s213 = scalar_lea.vmem %s2, %s212
      %p214 = scmp.lt.s32.totalorder %s18, 1
      %s215 = scalar_select %p214, %s18, 1
      %p216 = scmp.lt.s32.totalorder %s19, 0
      %s217 = scalar_select %p216, %s19, 0
      %s218 = smul.addr %s215, 10
      %s219 = sadd.s32 %s217, %s218
      %s220 = smul.addr %s219, 4
      %s221 = scalar_lea.vmem %s3, %s220
      %v223 = vld [vmem:[%s206] sm:$0xf]
      %v224 = vld [vmem:[%s206 + $0x4] sm:$0xf]
      %v225 = vld [vmem:[%s206 + $0x8] sm:$0xf]
      %v226 = vld [vmem:[%s206 + $0xc] sm:$0xf]
      %v227 = vld [vmem:[%s206 + $0x10] sm:$0xf]
      %v228 = vld [vmem:[%s206 + $0x14] sm:$0xf]
      %v229 = vld [vmem:[%s206 + $0x18] sm:$0xf]
      %v230 = vld [vmem:[%s206 + $0x1c] sm:$0xf]
      %v231 = vld [vmem:[%s206 + $0x20] sm:$0xf]
      %v232 = vld [vmem:[%s206 + $0x24] sm:$0xf]
      %v233 = vld [vmem:[%s210] sm:$0xf]
      %v234 = vld [vmem:[%s210 + $0x4] sm:$0xf]
      %v235 = vld [vmem:[%s210 + $0x8] sm:$0xf]
      %v236 = vld [vmem:[%s210 + $0xc] sm:$0xf]
      %v237 = vld [vmem:[%s210 + $0x10] sm:$0xf]
      %v238 = vld [vmem:[%s210 + $0x14] sm:$0xf]
      %v239 = vld [vmem:[%s210 + $0x18] sm:$0xf]
      %v240 = vld [vmem:[%s210 + $0x1c] sm:$0xf]
      %v241 = vld [vmem:[%s206 + $0x28] sm:$0x1]
      %s242 = scalar_lea.vmem %s210, 32
      %v243 = vld [vmem:[%s242] sm:$0xf]
      %v244 = vld [vmem:[%s242 + $0x4] sm:$0xf]
      %v245 = vld [vmem:[%s242 + $0x8] sm:$0xf]
      %v246 = vld [vmem:[%s242 + $0xc] sm:$0xf]
      %v247 = vld [vmem:[%s242 + $0x10] sm:$0xf]
      %v248 = vld [vmem:[%s242 + $0x14] sm:$0xf]
      %v249 = vld [vmem:[%s242 + $0x18] sm:$0xf]
      %v250 = vld [vmem:[%s242 + $0x1c] sm:$0xf]
      %v262 = vunpack.c.l.b16 %v223
      %v263 = vunpack.c.l.b16 %v224
      %v264 = vunpack.c.l.b16 %v225
      %v265 = vunpack.c.l.b16 %v226
      %v266 = vunpack.c.l.b16 %v227
      %v267 = vunpack.c.l.b16 %v228
      %v268 = vunpack.c.l.b16 %v229
      %v269 = vunpack.c.l.b16 %v230
      %v270 = vunpack.c.l.b16 %v231
      %v271 = vunpack.c.l.b16 %v232
      %v272 = vunpack.c.l.b16 %v241
      %v273 = vpack.c.b16 %v263, %v262
      %v274 = vpack.c.b16 %v265, %v264
      %v275 = vpack.c.b16 %v267, %v266
      %v276 = vpack.c.b16 %v269, %v268
      %v277 = vpack.c.b16 %v271, %v270
      %v278 = vpack.c.b16 %v272, %v272
      %vm279 = vsmask.f32 7424
      %v281 = vshrl.u32 %v273, 16
      %v283 = vshll.u32 %v273, 16
      %v285 = vrot.slane %v283, 1
      %v286 = vor.u32 %v281, %v285
      %v288 = vshll.u32 %v274, 16
      %v290 = vrot.slane %v288, 1
      %v291 = vsel %vm279, %v286, %v290
      %v292 = vshrl.u32 %v274, 16
      %v294 = vor.u32 %v292, %v290
      %v296 = vshll.u32 %v275, 16
      %v298 = vrot.slane %v296, 1
      %v299 = vsel %vm279, %v294, %v298
      %v300 = vshrl.u32 %v275, 16
      %v302 = vor.u32 %v300, %v298
      %v304 = vshll.u32 %v276, 16
      %v306 = vrot.slane %v304, 1
      %v307 = vsel %vm279, %v302, %v306
      %v308 = vshrl.u32 %v276, 16
      %v310 = vor.u32 %v308, %v306
      %v312 = vshll.u32 %v277, 16
      %v314 = vrot.slane %v312, 1
      %v315 = vsel %vm279, %v310, %v314
      %v316 = vshrl.u32 %v277, 16
      %v318 = vor.u32 %v316, %v314
      %v320 = vshll.u32 %v278, 16
      %v322 = vrot.slane %v320, 1
      %v323 = vsel %vm279, %v318, %v322
      %v332 = vunpack.c.l.b16 %v243
      %v333 = vunpack.c.l.b16 %v244
      %v334 = vunpack.c.l.b16 %v245
      %v335 = vunpack.c.l.b16 %v246
      %v336 = vunpack.c.l.b16 %v247
      %v337 = vunpack.c.l.b16 %v248
      %v338 = vunpack.c.l.b16 %v249
      %v339 = vunpack.c.l.b16 %v250
      %v340 = vpack.c.b16 %v333, %v332
      %v341 = vpack.c.b16 %v335, %v334
      %v342 = vpack.c.b16 %v337, %v336
      %v343 = vpack.c.b16 %v339, %v338
      %vm348 = vcmask 523264
      %v350 = vsel %vm348, %v291, 0
      %v353 = vsel %vm348, %v299, 0
      %v356 = vsel %vm348, %v307, 0
      %v359 = vsel %vm348, %v315, 0
      %v362 = vsel %vm348, %v323, 0
      %364 = vmatpush.bf16.msra.mxu0 0
      %365 = vmatpush.bf16.msra.mxu0 0
      %366 = vmatpush.bf16.msra.mxu0 0
      %367 = vmatpush.bf16.msra.mxu0 0
      %368 = vmatpush.bf16.msra.mxu0 %v343
      %369 = vmatpush.bf16.msra.mxu0 %v342
      %370 = vmatpush.bf16.msra.mxu0 %v341
      %371 = vmatpush.bf16.msra.mxu0 %v340
      %372 = vmatmul.bf16.gmra.mxu0 %v350
      %v373 = vpop.f32.mrf.mxu0
      %v374 = vadd.f32 0.0, %v373
      %v375 = vpop.f32.mrf.mxu0
      %v376 = vadd.f32 0.0, %v375
      %377 = vmatmul.bf16.gmra.mxu0 %v353
      %v378 = vpop.f32.mrf.mxu0
      %v379 = vadd.f32 0.0, %v378
      %v380 = vpop.f32.mrf.mxu0
      %v381 = vadd.f32 0.0, %v380
      %382 = vmatmul.bf16.gmra.mxu0 %v356
      %v383 = vpop.f32.mrf.mxu0
      %v384 = vadd.f32 0.0, %v383
      %v385 = vpop.f32.mrf.mxu0
      %v386 = vadd.f32 0.0, %v385
      %387 = vmatmul.bf16.gmra.mxu0 %v359
      %v388 = vpop.f32.mrf.mxu0
      %v389 = vadd.f32 0.0, %v388
      %v390 = vpop.f32.mrf.mxu0
      %v391 = vadd.f32 0.0, %v390
      %392 = vmatmul.bf16.gmra.mxu0 %v362
      %v393 = vpop.f32.mrf.mxu0
      %v394 = vadd.f32 0.0, %v393
      %v395 = vpop.f32.mrf.mxu0
      %v396 = vadd.f32 0.0, %v395
      %397 = vdwg.mxu0
      %v406 = vunpack.c.l.b16 %v233
      %v407 = vunpack.c.l.b16 %v234
      %v408 = vunpack.c.l.b16 %v235
      %v409 = vunpack.c.l.b16 %v236
      %v410 = vunpack.c.l.b16 %v237
      %v411 = vunpack.c.l.b16 %v238
      %v412 = vunpack.c.l.b16 %v239
      %v413 = vunpack.c.l.b16 %v240
      %v414 = vpack.c.b16 %v407, %v406
      %v415 = vpack.c.b16 %v409, %v408
      %v416 = vpack.c.b16 %v411, %v410
      %v417 = vpack.c.b16 %v413, %v412
      %v422 = vsel %vm348, %v273, 0
      %v424 = vsel %vm348, %v274, 0
      %v426 = vsel %vm348, %v275, 0
      %v428 = vsel %vm348, %v276, 0
      %v430 = vsel %vm348, %v277, 0
      %432 = vmatpush.bf16.msra.mxu0 0
      %433 = vmatpush.bf16.msra.mxu0 0
      %434 = vmatpush.bf16.msra.mxu0 0
      %435 = vmatpush.bf16.msra.mxu0 0
      %436 = vmatpush.bf16.msra.mxu0 %v417
      %437 = vmatpush.bf16.msra.mxu0 %v416
      %438 = vmatpush.bf16.msra.mxu0 %v415
      %439 = vmatpush.bf16.msra.mxu0 %v414
      %440 = vmatmul.bf16.gmra.mxu0 %v422
      %v441 = vpop.f32.mrf.mxu0
      %v442 = vadd.f32 %v374, %v441
      %v443 = vpop.f32.mrf.mxu0
      %v444 = vadd.f32 %v376, %v443
      %445 = vmatmul.bf16.gmra.mxu0 %v424
      %v446 = vpop.f32.mrf.mxu0
      %v447 = vadd.f32 %v379, %v446
      %v448 = vpop.f32.mrf.mxu0
      %v449 = vadd.f32 %v381, %v448
      %450 = vmatmul.bf16.gmra.mxu0 %v426
      %v451 = vpop.f32.mrf.mxu0
      %v452 = vadd.f32 %v384, %v451
      %v453 = vpop.f32.mrf.mxu0
      %v454 = vadd.f32 %v386, %v453
      %455 = vmatmul.bf16.gmra.mxu0 %v428
      %v456 = vpop.f32.mrf.mxu0
      %v457 = vadd.f32 %v389, %v456
      %v458 = vpop.f32.mrf.mxu0
      %v459 = vadd.f32 %v391, %v458
      %460 = vmatmul.bf16.gmra.mxu0 %v430
      %v461 = vpop.f32.mrf.mxu0
      %v462 = vadd.f32 %v394, %v461
      %v463 = vpop.f32.mrf.mxu0
      %v464 = vadd.f32 %v396, %v463
      %465 = vdwg.mxu0
      %v466 = vld [vmem:[%s206] sm:$0xe]
      %s467 = scalar_lea.vmem %s210, 64
      %v468 = vld [vmem:[%s467] sm:$0xf]
      %v469 = vld [vmem:[%s467 + $0x4] sm:$0xf]
      %v470 = vld [vmem:[%s467 + $0x8] sm:$0xf]
      %v471 = vld [vmem:[%s467 + $0xc] sm:$0xf]
      %v472 = vld [vmem:[%s467 + $0x10] sm:$0xf]
      %v473 = vld [vmem:[%s467 + $0x14] sm:$0xf]
      %v474 = vld [vmem:[%s467 + $0x18] sm:$0xf]
      %v475 = vld [vmem:[%s467 + $0x1c] sm:$0xf]
      %v477 = vunpack.c.l.b16 %v466
      %v478 = vpack.c.b16 %v263, %v477
      %vm479 = vcmask 1046528
      %v480 = vrot.slane %v478, 1
      %v481 = vrot.slane %v274, 1
      %v482 = vsel %vm479, %v480, %v481
      %v483 = vrot.slane %v275, 1
      %v484 = vsel %vm479, %v481, %v483
      %v485 = vrot.slane %v276, 1
      %v486 = vsel %vm479, %v483, %v485
      %v487 = vrot.slane %v277, 1
      %v488 = vsel %vm479, %v485, %v487
      %v489 = vrot.slane %v278, 1
      %v490 = vsel %vm479, %v487, %v489
      %v499 = vunpack.c.l.b16 %v468
      %v500 = vunpack.c.l.b16 %v469
      %v501 = vunpack.c.l.b16 %v470
      %v502 = vunpack.c.l.b16 %v471
      %v503 = vunpack.c.l.b16 %v472
      %v504 = vunpack.c.l.b16 %v473
      %v505 = vunpack.c.l.b16 %v474
      %v506 = vunpack.c.l.b16 %v475
      %v507 = vpack.c.b16 %v500, %v499
      %v508 = vpack.c.b16 %v502, %v501
      %v509 = vpack.c.b16 %v504, %v503
      %v510 = vpack.c.b16 %v506, %v505
      %v516 = vsel %vm348, %v482, 0
      %v519 = vsel %vm348, %v484, 0
      %v522 = vsel %vm348, %v486, 0
      %v525 = vsel %vm348, %v488, 0
      %v528 = vsel %vm348, %v490, 0
      %530 = vmatpush.bf16.msra.mxu0 0
      %531 = vmatpush.bf16.msra.mxu0 0
      %532 = vmatpush.bf16.msra.mxu0 0
      %533 = vmatpush.bf16.msra.mxu0 0
      %534 = vmatpush.bf16.msra.mxu0 %v510
      %535 = vmatpush.bf16.msra.mxu0 %v509
      %536 = vmatpush.bf16.msra.mxu0 %v508
      %537 = vmatpush.bf16.msra.mxu0 %v507
      %538 = vmatmul.bf16.gmra.mxu0 %v516
      %v539 = vpop.f32.mrf.mxu0
      %v540 = vadd.f32 0.0, %v539
      %v541 = vpop.f32.mrf.mxu0
      %v542 = vadd.f32 0.0, %v541
      %543 = vmatmul.bf16.gmra.mxu0 %v519
      %v544 = vpop.f32.mrf.mxu0
      %v545 = vadd.f32 0.0, %v544
      %v546 = vpop.f32.mrf.mxu0
      %v547 = vadd.f32 0.0, %v546
      %548 = vmatmul.bf16.gmra.mxu0 %v522
      %v549 = vpop.f32.mrf.mxu0
      %v550 = vadd.f32 0.0, %v549
      %v551 = vpop.f32.mrf.mxu0
      %v552 = vadd.f32 0.0, %v551
      %553 = vmatmul.bf16.gmra.mxu0 %v525
      %v554 = vpop.f32.mrf.mxu0
      %v555 = vadd.f32 0.0, %v554
      %v556 = vpop.f32.mrf.mxu0
      %v557 = vadd.f32 0.0, %v556
      %558 = vmatmul.bf16.gmra.mxu0 %v528
      %v559 = vpop.f32.mrf.mxu0
      %v560 = vadd.f32 0.0, %v559
      %v561 = vpop.f32.mrf.mxu0
      %v562 = vadd.f32 0.0, %v561
      %563 = vdwg.mxu0
      %v564 = vadd.f32 %v442, %v540
      %v565 = vadd.f32 %v444, %v542
      %v566 = vadd.f32 %v447, %v545
      %v567 = vadd.f32 %v449, %v547
      %v568 = vadd.f32 %v452, %v550
      %v569 = vadd.f32 %v454, %v552
      %v570 = vadd.f32 %v457, %v555
      %v571 = vadd.f32 %v459, %v557
      %v572 = vadd.f32 %v462, %v560
      %v573 = vadd.f32 %v464, %v562
      %v574 = vld [vmem:[%s206 + $0x4] sm:$0xe]
      %v575 = vld [vmem:[%s206 + $0x8] sm:$0xf]
      %v576 = vld [vmem:[%s206 + $0xc] sm:$0xf]
      %v577 = vld [vmem:[%s206 + $0x10] sm:$0xf]
      %v578 = vld [vmem:[%s206 + $0x14] sm:$0xf]
      %v579 = vld [vmem:[%s206 + $0x18] sm:$0xf]
      %v580 = vld [vmem:[%s206 + $0x1c] sm:$0xf]
      %v581 = vld [vmem:[%s206 + $0x20] sm:$0xf]
      %v582 = vld [vmem:[%s206 + $0x24] sm:$0xf]
      %v583 = vld [vmem:[%s206 + $0x28] sm:$0xf]
      %v584 = vld [vmem:[%s206 + $0x2c] sm:$0x1]
      %s585 = scalar_lea.vmem %s210, 96
      %v586 = vld [vmem:[%s585] sm:$0xf]
      %v587 = vld [vmem:[%s585 + $0x4] sm:$0xf]
      %v588 = vld [vmem:[%s585 + $0x8] sm:$0xf]
      %v589 = vld [vmem:[%s585 + $0xc] sm:$0xf]
      %v590 = vld [vmem:[%s585 + $0x10] sm:$0xf]
      %v591 = vld [vmem:[%s585 + $0x14] sm:$0xf]
      %v592 = vld [vmem:[%s585 + $0x18] sm:$0xf]
      %v593 = vld [vmem:[%s585 + $0x1c] sm:$0xf]
      %v605 = vunpack.c.l.b16 %v574
      %v606 = vunpack.c.l.b16 %v575
      %v607 = vunpack.c.l.b16 %v576
      %v608 = vunpack.c.l.b16 %v577
      %v609 = vunpack.c.l.b16 %v578
      %v610 = vunpack.c.l.b16 %v579
      %v611 = vunpack.c.l.b16 %v580
      %v612 = vunpack.c.l.b16 %v581
      %v613 = vunpack.c.l.b16 %v582
      %v614 = vunpack.c.l.b16 %v583
      %v615 = vunpack.c.l.b16 %v584
      %v616 = vpack.c.b16 %v606, %v605
      %v617 = vpack.c.b16 %v608, %v607
      %v618 = vpack.c.b16 %v610, %v609
      %v619 = vpack.c.b16 %v612, %v611
      %v620 = vpack.c.b16 %v614, %v613
      %v621 = vpack.c.b16 %v615, %v615
      %v622 = vrot.slane %v616, 1
      %v623 = vrot.slane %v617, 1
      %v624 = vsel %vm479, %v622, %v623
      %v625 = vrot.slane %v618, 1
      %v626 = vsel %vm479, %v623, %v625
      %v627 = vrot.slane %v619, 1
      %v628 = vsel %vm479, %v625, %v627
      %v629 = vrot.slane %v620, 1
      %v630 = vsel %vm479, %v627, %v629
      %v631 = vrot.slane %v621, 1
      %v632 = vsel %vm479, %v629, %v631
      %v641 = vunpack.c.l.b16 %v586
      %v642 = vunpack.c.l.b16 %v587
      %v643 = vunpack.c.l.b16 %v588
      %v644 = vunpack.c.l.b16 %v589
      %v645 = vunpack.c.l.b16 %v590
      %v646 = vunpack.c.l.b16 %v591
      %v647 = vunpack.c.l.b16 %v592
      %v648 = vunpack.c.l.b16 %v593
      %v649 = vpack.c.b16 %v642, %v641
      %v650 = vpack.c.b16 %v644, %v643
      %v651 = vpack.c.b16 %v646, %v645
      %v652 = vpack.c.b16 %v648, %v647
      %v658 = vsel %vm348, %v624, 0
      %v661 = vsel %vm348, %v626, 0
      %v664 = vsel %vm348, %v628, 0
      %v667 = vsel %vm348, %v630, 0
      %v670 = vsel %vm348, %v632, 0
      %672 = vmatpush.bf16.msra.mxu0 0
      %673 = vmatpush.bf16.msra.mxu0 0
      %674 = vmatpush.bf16.msra.mxu0 0
      %675 = vmatpush.bf16.msra.mxu0 0
      %676 = vmatpush.bf16.msra.mxu0 %v652
      %677 = vmatpush.bf16.msra.mxu0 %v651
      %678 = vmatpush.bf16.msra.mxu0 %v650
      %679 = vmatpush.bf16.msra.mxu0 %v649
      %680 = vmatmul.bf16.gmra.mxu0 %v658
      %v681 = vpop.f32.mrf.mxu0
      %v682 = vadd.f32 0.0, %v681
      %v683 = vpop.f32.mrf.mxu0
      %v684 = vadd.f32 0.0, %v683
      %685 = vmatmul.bf16.gmra.mxu0 %v661
      %v686 = vpop.f32.mrf.mxu0
      %v687 = vadd.f32 0.0, %v686
      %v688 = vpop.f32.mrf.mxu0
      %v689 = vadd.f32 0.0, %v688
      %690 = vmatmul.bf16.gmra.mxu0 %v664
      %v691 = vpop.f32.mrf.mxu0
      %v692 = vadd.f32 0.0, %v691
      %v693 = vpop.f32.mrf.mxu0
      %v694 = vadd.f32 0.0, %v693
      %695 = vmatmul.bf16.gmra.mxu0 %v667
      %v696 = vpop.f32.mrf.mxu0
      %v697 = vadd.f32 0.0, %v696
      %v698 = vpop.f32.mrf.mxu0
      %v699 = vadd.f32 0.0, %v698
      %700 = vmatmul.bf16.gmra.mxu0 %v670
      %v701 = vpop.f32.mrf.mxu0
      %v702 = vadd.f32 0.0, %v701
      %v703 = vpop.f32.mrf.mxu0
      %v704 = vadd.f32 0.0, %v703
      %705 = vdwg.mxu0
      %v706 = vadd.f32 %v564, %v682
      %v707 = vadd.f32 %v565, %v684
      %v708 = vadd.f32 %v566, %v687
      %v709 = vadd.f32 %v567, %v689
      %v710 = vadd.f32 %v568, %v692
      %v711 = vadd.f32 %v569, %v694
      %v712 = vadd.f32 %v570, %v697
      %v713 = vadd.f32 %v571, %v699
      %v714 = vadd.f32 %v572, %v702
      %v715 = vadd.f32 %v573, %v704
      %v716 = vld [vmem:[%s206 + $0x2c] sm:$0x3]
      %s717 = scalar_lea.vmem %s210, 128
      %v718 = vld [vmem:[%s717] sm:$0xf]
      %v719 = vld [vmem:[%s717 + $0x4] sm:$0xf]
      %v720 = vld [vmem:[%s717 + $0x8] sm:$0xf]
      %v721 = vld [vmem:[%s717 + $0xc] sm:$0xf]
      %v722 = vld [vmem:[%s717 + $0x10] sm:$0xf]
      %v723 = vld [vmem:[%s717 + $0x14] sm:$0xf]
      %v724 = vld [vmem:[%s717 + $0x18] sm:$0xf]
      %v725 = vld [vmem:[%s717 + $0x1c] sm:$0xf]
      %v727 = vunpack.c.l.b16 %v716
      %v728 = vpack.c.b16 %v727, %v727
      %vm729 = vsmask.f32 6400
      %v731 = vshrl.u32 %v616, 16
      %v733 = vrot.slane %v731, 1
      %v734 = vshll.u32 %v616, 16
      %v736 = vrot.slane %v734, 2
      %v737 = vor.u32 %v733, %v736
      %v739 = vshrl.u32 %v617, 16
      %v741 = vrot.slane %v739, 1
      %v742 = vshll.u32 %v617, 16
      %v744 = vrot.slane %v742, 2
      %v745 = vor.u32 %v741, %v744
      %v746 = vsel %vm729, %v737, %v745
      %v748 = vshrl.u32 %v618, 16
      %v750 = vrot.slane %v748, 1
      %v751 = vshll.u32 %v618, 16
      %v753 = vrot.slane %v751, 2
      %v754 = vor.u32 %v750, %v753
      %v755 = vsel %vm729, %v745, %v754
      %v757 = vshrl.u32 %v619, 16
      %v759 = vrot.slane %v757, 1
      %v760 = vshll.u32 %v619, 16
      %v762 = vrot.slane %v760, 2
      %v763 = vor.u32 %v759, %v762
      %v764 = vsel %vm729, %v754, %v763
      %v766 = vshrl.u32 %v620, 16
      %v768 = vrot.slane %v766, 1
      %v769 = vshll.u32 %v620, 16
      %v771 = vrot.slane %v769, 2
      %v772 = vor.u32 %v768, %v771
      %v773 = vsel %vm729, %v763, %v772
      %v775 = vshrl.u32 %v728, 16
      %v777 = vrot.slane %v775, 1
      %v778 = vshll.u32 %v728, 16
      %v780 = vrot.slane %v778, 2
      %v781 = vor.u32 %v777, %v780
      %v782 = vsel %vm729, %v772, %v781
      %v791 = vunpack.c.l.b16 %v718
      %v792 = vunpack.c.l.b16 %v719
      %v793 = vunpack.c.l.b16 %v720
      %v794 = vunpack.c.l.b16 %v721
      %v795 = vunpack.c.l.b16 %v722
      %v796 = vunpack.c.l.b16 %v723
      %v797 = vunpack.c.l.b16 %v724
      %v798 = vunpack.c.l.b16 %v725
      %v799 = vpack.c.b16 %v792, %v791
      %v800 = vpack.c.b16 %v794, %v793
      %v801 = vpack.c.b16 %v796, %v795
      %v802 = vpack.c.b16 %v798, %v797
      %v808 = vsel %vm348, %v746, 0
      %v811 = vsel %vm348, %v755, 0
      %v814 = vsel %vm348, %v764, 0
      %v817 = vsel %vm348, %v773, 0
      %v820 = vsel %vm348, %v782, 0
      %822 = vmatpush.bf16.msra.mxu0 0
      %823 = vmatpush.bf16.msra.mxu0 0
      %824 = vmatpush.bf16.msra.mxu0 0
      %825 = vmatpush.bf16.msra.mxu0 0
      %826 = vmatpush.bf16.msra.mxu0 %v802
      %827 = vmatpush.bf16.msra.mxu0 %v801
      %828 = vmatpush.bf16.msra.mxu0 %v800
      %829 = vmatpush.bf16.msra.mxu0 %v799
      %830 = vmatmul.bf16.gmra.mxu0 %v808
      %v831 = vpop.f32.mrf.mxu0
      %v832 = vadd.f32 0.0, %v831
      %v833 = vpop.f32.mrf.mxu0
      %v834 = vadd.f32 0.0, %v833
      %835 = vmatmul.bf16.gmra.mxu0 %v811
      %v836 = vpop.f32.mrf.mxu0
      %v837 = vadd.f32 0.0, %v836
      %v838 = vpop.f32.mrf.mxu0
      %v839 = vadd.f32 0.0, %v838
      %840 = vmatmul.bf16.gmra.mxu0 %v814
      %v841 = vpop.f32.mrf.mxu0
      %v842 = vadd.f32 0.0, %v841
      %v843 = vpop.f32.mrf.mxu0
      %v844 = vadd.f32 0.0, %v843
      %845 = vmatmul.bf16.gmra.mxu0 %v817
      %v846 = vpop.f32.mrf.mxu0
      %v847 = vadd.f32 0.0, %v846
      %v848 = vpop.f32.mrf.mxu0
      %v849 = vadd.f32 0.0, %v848
      %850 = vmatmul.bf16.gmra.mxu0 %v820
      %v851 = vpop.f32.mrf.mxu0
      %v852 = vadd.f32 0.0, %v851
      %v853 = vpop.f32.mrf.mxu0
      %v854 = vadd.f32 0.0, %v853
      %855 = vdwg.mxu0
      %v856 = vadd.f32 %v706, %v832
      %v857 = vadd.f32 %v707, %v834
      %v858 = vadd.f32 %v708, %v837
      %v859 = vadd.f32 %v709, %v839
      %v860 = vadd.f32 %v710, %v842
      %v861 = vadd.f32 %v711, %v844
      %v862 = vadd.f32 %v712, %v847
      %v863 = vadd.f32 %v713, %v849
      %v864 = vadd.f32 %v714, %v852
      %v865 = vadd.f32 %v715, %v854
      %v866 = vld [vmem:[%s206 + $0x4] sm:$0xc]
      %s867 = scalar_lea.vmem %s210, 160
      %v868 = vld [vmem:[%s867] sm:$0xf]
      %v869 = vld [vmem:[%s867 + $0x4] sm:$0xf]
      %v870 = vld [vmem:[%s867 + $0x8] sm:$0xf]
      %v871 = vld [vmem:[%s867 + $0xc] sm:$0xf]
      %v872 = vld [vmem:[%s867 + $0x10] sm:$0xf]
      %v873 = vld [vmem:[%s867 + $0x14] sm:$0xf]
      %v874 = vld [vmem:[%s867 + $0x18] sm:$0xf]
      %v875 = vld [vmem:[%s867 + $0x1c] sm:$0xf]
      %v877 = vunpack.c.l.b16 %v866
      %v878 = vpack.c.b16 %v606, %v877
      %vm879 = vcmask 1045504
      %v880 = vrot.slane %v878, 2
      %v881 = vrot.slane %v617, 2
      %v882 = vsel %vm879, %v880, %v881
      %v883 = vrot.slane %v618, 2
      %v884 = vsel %vm879, %v881, %v883
      %v885 = vrot.slane %v619, 2
      %v886 = vsel %vm879, %v883, %v885
      %v887 = vrot.slane %v620, 2
      %v888 = vsel %vm879, %v885, %v887
      %v889 = vrot.slane %v728, 2
      %v890 = vsel %vm879, %v887, %v889
      %v899 = vunpack.c.l.b16 %v868
      %v900 = vunpack.c.l.b16 %v869
      %v901 = vunpack.c.l.b16 %v870
      %v902 = vunpack.c.l.b16 %v871
      %v903 = vunpack.c.l.b16 %v872
      %v904 = vunpack.c.l.b16 %v873
      %v905 = vunpack.c.l.b16 %v874
      %v906 = vunpack.c.l.b16 %v875
      %v907 = vpack.c.b16 %v900, %v899
      %v908 = vpack.c.b16 %v902, %v901
      %v909 = vpack.c.b16 %v904, %v903
      %v910 = vpack.c.b16 %v906, %v905
      %v916 = vsel %vm348, %v882, 0
      %v919 = vsel %vm348, %v884, 0
      %v922 = vsel %vm348, %v886, 0
      %v925 = vsel %vm348, %v888, 0
      %v928 = vsel %vm348, %v890, 0
      %930 = vmatpush.bf16.msra.mxu0 0
      %931 = vmatpush.bf16.msra.mxu0 0
      %932 = vmatpush.bf16.msra.mxu0 0
      %933 = vmatpush.bf16.msra.mxu0 0
      %934 = vmatpush.bf16.msra.mxu0 %v910
      %935 = vmatpush.bf16.msra.mxu0 %v909
      %936 = vmatpush.bf16.msra.mxu0 %v908
      %937 = vmatpush.bf16.msra.mxu0 %v907
      %938 = vmatmul.bf16.gmra.mxu0 %v916
      %v939 = vpop.f32.mrf.mxu0
      %v940 = vadd.f32 0.0, %v939
      %v941 = vpop.f32.mrf.mxu0
      %v942 = vadd.f32 0.0, %v941
      %943 = vmatmul.bf16.gmra.mxu0 %v919
      %v944 = vpop.f32.mrf.mxu0
      %v945 = vadd.f32 0.0, %v944
      %v946 = vpop.f32.mrf.mxu0
      %v947 = vadd.f32 0.0, %v946
      %948 = vmatmul.bf16.gmra.mxu0 %v922
      %v949 = vpop.f32.mrf.mxu0
      %v950 = vadd.f32 0.0, %v949
      %v951 = vpop.f32.mrf.mxu0
      %v952 = vadd.f32 0.0, %v951
      %953 = vmatmul.bf16.gmra.mxu0 %v925
      %v954 = vpop.f32.mrf.mxu0
      %v955 = vadd.f32 0.0, %v954
      %v956 = vpop.f32.mrf.mxu0
      %v957 = vadd.f32 0.0, %v956
      %958 = vmatmul.bf16.gmra.mxu0 %v928
      %v959 = vpop.f32.mrf.mxu0
      %v960 = vadd.f32 0.0, %v959
      %v961 = vpop.f32.mrf.mxu0
      %v962 = vadd.f32 0.0, %v961
      %963 = vdwg.mxu0
      %v964 = vadd.f32 %v856, %v940
      %v965 = vadd.f32 %v857, %v942
      %v966 = vadd.f32 %v858, %v945
      %v967 = vadd.f32 %v859, %v947
      %v968 = vadd.f32 %v860, %v950
      %v969 = vadd.f32 %v861, %v952
      %v970 = vadd.f32 %v862, %v955
      %v971 = vadd.f32 %v863, %v957
      %v972 = vadd.f32 %v864, %v960
      %v973 = vadd.f32 %v865, %v962
      %v974 = vld [vmem:[%s206 + $0x8] sm:$0xc]
      %v975 = vld [vmem:[%s206 + $0xc] sm:$0xf]
      %v976 = vld [vmem:[%s206 + $0x10] sm:$0xf]
      %v977 = vld [vmem:[%s206 + $0x14] sm:$0xf]
      %v978 = vld [vmem:[%s206 + $0x18] sm:$0xf]
      %v979 = vld [vmem:[%s206 + $0x1c] sm:$0xf]
      %v980 = vld [vmem:[%s206 + $0x20] sm:$0xf]
      %v981 = vld [vmem:[%s206 + $0x24] sm:$0xf]
      %v982 = vld [vmem:[%s206 + $0x28] sm:$0xf]
      %v983 = vld [vmem:[%s206 + $0x2c] sm:$0xf]
      %v984 = vld [vmem:[%s206 + $0x30] sm:$0x3]
      %s985 = scalar_lea.vmem %s210, 192
      %v986 = vld [vmem:[%s985] sm:$0xf]
      %v987 = vld [vmem:[%s985 + $0x4] sm:$0xf]
      %v988 = vld [vmem:[%s985 + $0x8] sm:$0xf]
      %v989 = vld [vmem:[%s985 + $0xc] sm:$0xf]
      %v990 = vld [vmem:[%s985 + $0x10] sm:$0xf]
      %v991 = vld [vmem:[%s985 + $0x14] sm:$0xf]
      %v992 = vld [vmem:[%s985 + $0x18] sm:$0xf]
      %v993 = vld [vmem:[%s985 + $0x1c] sm:$0xf]
      %v1005 = vunpack.c.l.b16 %v974
      %v1006 = vunpack.c.l.b16 %v975
      %v1007 = vunpack.c.l.b16 %v976
      %v1008 = vunpack.c.l.b16 %v977
      %v1009 = vunpack.c.l.b16 %v978
      %v1010 = vunpack.c.l.b16 %v979
      %v1011 = vunpack.c.l.b16 %v980
      %v1012 = vunpack.c.l.b16 %v981
      %v1013 = vunpack.c.l.b16 %v982
      %v1014 = vunpack.c.l.b16 %v983
      %v1015 = vunpack.c.l.b16 %v984
      %v1016 = vpack.c.b16 %v1006, %v1005
      %v1017 = vpack.c.b16 %v1008, %v1007
      %v1018 = vpack.c.b16 %v1010, %v1009
      %v1019 = vpack.c.b16 %v1012, %v1011
      %v1020 = vpack.c.b16 %v1014, %v1013
      %v1021 = vpack.c.b16 %v1015, %v1015
      %v1022 = vrot.slane %v1016, 2
      %v1023 = vrot.slane %v1017, 2
      %v1024 = vsel %vm879, %v1022, %v1023
      %v1025 = vrot.slane %v1018, 2
      %v1026 = vsel %vm879, %v1023, %v1025
      %v1027 = vrot.slane %v1019, 2
      %v1028 = vsel %vm879, %v1025, %v1027
      %v1029 = vrot.slane %v1020, 2
      %v1030 = vsel %vm879, %v1027, %v1029
      %v1031 = vrot.slane %v1021, 2
      %v1032 = vsel %vm879, %v1029, %v1031
      %v1041 = vunpack.c.l.b16 %v986
      %v1042 = vunpack.c.l.b16 %v987
      %v1043 = vunpack.c.l.b16 %v988
      %v1044 = vunpack.c.l.b16 %v989
      %v1045 = vunpack.c.l.b16 %v990
      %v1046 = vunpack.c.l.b16 %v991
      %v1047 = vunpack.c.l.b16 %v992
      %v1048 = vunpack.c.l.b16 %v993
      %v1049 = vpack.c.b16 %v1042, %v1041
      %v1050 = vpack.c.b16 %v1044, %v1043
      %v1051 = vpack.c.b16 %v1046, %v1045
      %v1052 = vpack.c.b16 %v1048, %v1047
      %v1058 = vsel %vm348, %v1024, 0
      %v1061 = vsel %vm348, %v1026, 0
      %v1064 = vsel %vm348, %v1028, 0
      %v1067 = vsel %vm348, %v1030, 0
      %v1070 = vsel %vm348, %v1032, 0
      %1072 = vmatpush.bf16.msra.mxu0 0
      %1073 = vmatpush.bf16.msra.mxu0 0
      %1074 = vmatpush.bf16.msra.mxu0 0
      %1075 = vmatpush.bf16.msra.mxu0 0
      %1076 = vmatpush.bf16.msra.mxu0 %v1052
      %1077 = vmatpush.bf16.msra.mxu0 %v1051
      %1078 = vmatpush.bf16.msra.mxu0 %v1050
      %1079 = vmatpush.bf16.msra.mxu0 %v1049
      %1080 = vmatmul.bf16.gmra.mxu0 %v1058
      %v1081 = vpop.f32.mrf.mxu0
      %v1082 = vadd.f32 0.0, %v1081
      %v1083 = vpop.f32.mrf.mxu0
      %v1084 = vadd.f32 0.0, %v1083
      %1085 = vmatmul.bf16.gmra.mxu0 %v1061
      %v1086 = vpop.f32.mrf.mxu0
      %v1087 = vadd.f32 0.0, %v1086
      %v1088 = vpop.f32.mrf.mxu0
      %v1089 = vadd.f32 0.0, %v1088
      %1090 = vmatmul.bf16.gmra.mxu0 %v1064
      %v1091 = vpop.f32.mrf.mxu0
      %v1092 = vadd.f32 0.0, %v1091
      %v1093 = vpop.f32.mrf.mxu0
      %v1094 = vadd.f32 0.0, %v1093
      %1095 = vmatmul.bf16.gmra.mxu0 %v1067
      %v1096 = vpop.f32.mrf.mxu0
      %v1097 = vadd.f32 0.0, %v1096
      %v1098 = vpop.f32.mrf.mxu0
      %v1099 = vadd.f32 0.0, %v1098
      %1100 = vmatmul.bf16.gmra.mxu0 %v1070
      %v1101 = vpop.f32.mrf.mxu0
      %v1102 = vadd.f32 0.0, %v1101
      %v1103 = vpop.f32.mrf.mxu0
      %v1104 = vadd.f32 0.0, %v1103
      %1105 = vdwg.mxu0
      %v1106 = vadd.f32 %v964, %v1082
      %v1107 = vadd.f32 %v965, %v1084
      %v1108 = vadd.f32 %v966, %v1087
      %v1109 = vadd.f32 %v967, %v1089
      %v1110 = vadd.f32 %v968, %v1092
      %v1111 = vadd.f32 %v969, %v1094
      %v1112 = vadd.f32 %v970, %v1097
      %v1113 = vadd.f32 %v971, %v1099
      %v1114 = vadd.f32 %v972, %v1102
      %v1115 = vadd.f32 %v973, %v1104
      %v1116 = vld [vmem:[%s206 + $0x30] sm:$0x7]
      %s1117 = scalar_lea.vmem %s210, 224
      %v1118 = vld [vmem:[%s1117] sm:$0xf]
      %v1119 = vld [vmem:[%s1117 + $0x4] sm:$0xf]
      %v1120 = vld [vmem:[%s1117 + $0x8] sm:$0xf]
      %v1121 = vld [vmem:[%s1117 + $0xc] sm:$0xf]
      %v1122 = vld [vmem:[%s1117 + $0x10] sm:$0xf]
      %v1123 = vld [vmem:[%s1117 + $0x14] sm:$0xf]
      %v1124 = vld [vmem:[%s1117 + $0x18] sm:$0xf]
      %v1125 = vld [vmem:[%s1117 + $0x1c] sm:$0xf]
      %v1127 = vunpack.c.l.b16 %v1116
      %v1128 = vpack.c.b16 %v1127, %v1127
      %vm1129 = vsmask.f32 5376
      %v1131 = vshrl.u32 %v1016, 16
      %v1133 = vrot.slane %v1131, 2
      %v1134 = vshll.u32 %v1016, 16
      %v1136 = vrot.slane %v1134, 3
      %v1137 = vor.u32 %v1133, %v1136
      %v1139 = vshrl.u32 %v1017, 16
      %v1141 = vrot.slane %v1139, 2
      %v1142 = vshll.u32 %v1017, 16
      %v1144 = vrot.slane %v1142, 3
      %v1145 = vor.u32 %v1141, %v1144
      %v1146 = vsel %vm1129, %v1137, %v1145
      %v1148 = vshrl.u32 %v1018, 16
      %v1150 = vrot.slane %v1148, 2
      %v1151 = vshll.u32 %v1018, 16
      %v1153 = vrot.slane %v1151, 3
      %v1154 = vor.u32 %v1150, %v1153
      %v1155 = vsel %vm1129, %v1145, %v1154
      %v1157 = vshrl.u32 %v1019, 16
      %v1159 = vrot.slane %v1157, 2
      %v1160 = vshll.u32 %v1019, 16
      %v1162 = vrot.slane %v1160, 3
      %v1163 = vor.u32 %v1159, %v1162
      %v1164 = vsel %vm1129, %v1154, %v1163
      %v1166 = vshrl.u32 %v1020, 16
      %v1168 = vrot.slane %v1166, 2
      %v1169 = vshll.u32 %v1020, 16
      %v1171 = vrot.slane %v1169, 3
      %v1172 = vor.u32 %v1168, %v1171
      %v1173 = vsel %vm1129, %v1163, %v1172
      %v1175 = vshrl.u32 %v1128, 16
      %v1177 = vrot.slane %v1175, 2
      %v1178 = vshll.u32 %v1128, 16
      %v1180 = vrot.slane %v1178, 3
      %v1181 = vor.u32 %v1177, %v1180
      %v1182 = vsel %vm1129, %v1172, %v1181
      %v1191 = vunpack.c.l.b16 %v1118
      %v1192 = vunpack.c.l.b16 %v1119
      %v1193 = vunpack.c.l.b16 %v1120
      %v1194 = vunpack.c.l.b16 %v1121
      %v1195 = vunpack.c.l.b16 %v1122
      %v1196 = vunpack.c.l.b16 %v1123
      %v1197 = vunpack.c.l.b16 %v1124
      %v1198 = vunpack.c.l.b16 %v1125
      %v1199 = vpack.c.b16 %v1192, %v1191
      %v1200 = vpack.c.b16 %v1194, %v1193
      %v1201 = vpack.c.b16 %v1196, %v1195
      %v1202 = vpack.c.b16 %v1198, %v1197
      %v1208 = vsel %vm348, %v1146, 0
      %v1211 = vsel %vm348, %v1155, 0
      %v1214 = vsel %vm348, %v1164, 0
      %v1217 = vsel %vm348, %v1173, 0
      %v1220 = vsel %vm348, %v1182, 0
      %1222 = vmatpush.bf16.msra.mxu0 0
      %1223 = vmatpush.bf16.msra.mxu0 0
      %1224 = vmatpush.bf16.msra.mxu0 0
      %1225 = vmatpush.bf16.msra.mxu0 0
      %1226 = vmatpush.bf16.msra.mxu0 %v1202
      %1227 = vmatpush.bf16.msra.mxu0 %v1201
      %1228 = vmatpush.bf16.msra.mxu0 %v1200
      %1229 = vmatpush.bf16.msra.mxu0 %v1199
      %1230 = vmatmul.bf16.gmra.mxu0 %v1208
      %v1231 = vpop.f32.mrf.mxu0
      %v1232 = vadd.f32 0.0, %v1231
      %v1233 = vpop.f32.mrf.mxu0
      %v1234 = vadd.f32 0.0, %v1233
      %1235 = vmatmul.bf16.gmra.mxu0 %v1211
      %v1236 = vpop.f32.mrf.mxu0
      %v1237 = vadd.f32 0.0, %v1236
      %v1238 = vpop.f32.mrf.mxu0
      %v1239 = vadd.f32 0.0, %v1238
      %1240 = vmatmul.bf16.gmra.mxu0 %v1214
      %v1241 = vpop.f32.mrf.mxu0
      %v1242 = vadd.f32 0.0, %v1241
      %v1243 = vpop.f32.mrf.mxu0
      %v1244 = vadd.f32 0.0, %v1243
      %1245 = vmatmul.bf16.gmra.mxu0 %v1217
      %v1246 = vpop.f32.mrf.mxu0
      %v1247 = vadd.f32 0.0, %v1246
      %v1248 = vpop.f32.mrf.mxu0
      %v1249 = vadd.f32 0.0, %v1248
      %1250 = vmatmul.bf16.gmra.mxu0 %v1220
      %v1251 = vpop.f32.mrf.mxu0
      %v1252 = vadd.f32 0.0, %v1251
      %v1253 = vpop.f32.mrf.mxu0
      %v1254 = vadd.f32 0.0, %v1253
      %1255 = vdwg.mxu0
      %v1256 = vadd.f32 %v1106, %v1232
      %v1257 = vadd.f32 %v1107, %v1234
      %v1258 = vadd.f32 %v1108, %v1237
      %v1259 = vadd.f32 %v1109, %v1239
      %v1260 = vadd.f32 %v1110, %v1242
      %v1261 = vadd.f32 %v1111, %v1244
      %v1262 = vadd.f32 %v1112, %v1247
      %v1263 = vadd.f32 %v1113, %v1249
      %v1264 = vadd.f32 %v1114, %v1252
      %v1265 = vadd.f32 %v1115, %v1254
      %v1266 = vld [vmem:[%s206 + $0x8] sm:$0x8]
      %s1267 = scalar_lea.vmem %s210, 256
      %v1268 = vld [vmem:[%s1267] sm:$0xf]
      %v1269 = vld [vmem:[%s1267 + $0x4] sm:$0xf]
      %v1270 = vld [vmem:[%s1267 + $0x8] sm:$0xf]
      %v1271 = vld [vmem:[%s1267 + $0xc] sm:$0xf]
      %v1272 = vld [vmem:[%s1267 + $0x10] sm:$0xf]
      %v1273 = vld [vmem:[%s1267 + $0x14] sm:$0xf]
      %v1274 = vld [vmem:[%s1267 + $0x18] sm:$0xf]
      %v1275 = vld [vmem:[%s1267 + $0x1c] sm:$0xf]
      %v1277 = vunpack.c.l.b16 %v1266
      %v1278 = vpack.c.b16 %v1006, %v1277
      %vm1279 = vcmask 1044480
      %v1280 = vrot.slane %v1278, 3
      %v1281 = vrot.slane %v1017, 3
      %v1282 = vsel %vm1279, %v1280, %v1281
      %v1283 = vrot.slane %v1018, 3
      %v1284 = vsel %vm1279, %v1281, %v1283
      %v1285 = vrot.slane %v1019, 3
      %v1286 = vsel %vm1279, %v1283, %v1285
      %v1287 = vrot.slane %v1020, 3
      %v1288 = vsel %vm1279, %v1285, %v1287
      %v1289 = vrot.slane %v1128, 3
      %v1290 = vsel %vm1279, %v1287, %v1289
      %v1299 = vunpack.c.l.b16 %v1268
      %v1300 = vunpack.c.l.b16 %v1269
      %v1301 = vunpack.c.l.b16 %v1270
      %v1302 = vunpack.c.l.b16 %v1271
      %v1303 = vunpack.c.l.b16 %v1272
      %v1304 = vunpack.c.l.b16 %v1273
      %v1305 = vunpack.c.l.b16 %v1274
      %v1306 = vunpack.c.l.b16 %v1275
      %v1307 = vpack.c.b16 %v1300, %v1299
      %v1308 = vpack.c.b16 %v1302, %v1301
      %v1309 = vpack.c.b16 %v1304, %v1303
      %v1310 = vpack.c.b16 %v1306, %v1305
      %v1316 = vsel %vm348, %v1282, 0
      %v1319 = vsel %vm348, %v1284, 0
      %v1322 = vsel %vm348, %v1286, 0
      %v1325 = vsel %vm348, %v1288, 0
      %v1328 = vsel %vm348, %v1290, 0
      %1330 = vmatpush.bf16.msra.mxu0 0
      %1331 = vmatpush.bf16.msra.mxu0 0
      %1332 = vmatpush.bf16.msra.mxu0 0
      %1333 = vmatpush.bf16.msra.mxu0 0
      %1334 = vmatpush.bf16.msra.mxu0 %v1310
      %1335 = vmatpush.bf16.msra.mxu0 %v1309
      %1336 = vmatpush.bf16.msra.mxu0 %v1308
      %1337 = vmatpush.bf16.msra.mxu0 %v1307
      %1338 = vmatmul.bf16.gmra.mxu0 %v1316
      %v1339 = vpop.f32.mrf.mxu0
      %v1340 = vadd.f32 0.0, %v1339
      %v1341 = vpop.f32.mrf.mxu0
      %v1342 = vadd.f32 0.0, %v1341
      %1343 = vmatmul.bf16.gmra.mxu0 %v1319
      %v1344 = vpop.f32.mrf.mxu0
      %v1345 = vadd.f32 0.0, %v1344
      %v1346 = vpop.f32.mrf.mxu0
      %v1347 = vadd.f32 0.0, %v1346
      %1348 = vmatmul.bf16.gmra.mxu0 %v1322
      %v1349 = vpop.f32.mrf.mxu0
      %v1350 = vadd.f32 0.0, %v1349
      %v1351 = vpop.f32.mrf.mxu0
      %v1352 = vadd.f32 0.0, %v1351
      %1353 = vmatmul.bf16.gmra.mxu0 %v1325
      %v1354 = vpop.f32.mrf.mxu0
      %v1355 = vadd.f32 0.0, %v1354
      %v1356 = vpop.f32.mrf.mxu0
      %v1357 = vadd.f32 0.0, %v1356
      %1358 = vmatmul.bf16.gmra.mxu0 %v1328
      %v1359 = vpop.f32.mrf.mxu0
      %v1360 = vadd.f32 0.0, %v1359
      %v1361 = vpop.f32.mrf.mxu0
      %v1362 = vadd.f32 0.0, %v1361
      %1363 = vdwg.mxu0
      %v1364 = vadd.f32 %v1256, %v1340
      %v1365 = vadd.f32 %v1257, %v1342
      %v1366 = vadd.f32 %v1258, %v1345
      %v1367 = vadd.f32 %v1259, %v1347
      %v1368 = vadd.f32 %v1260, %v1350
      %v1369 = vadd.f32 %v1261, %v1352
      %v1370 = vadd.f32 %v1262, %v1355
      %v1371 = vadd.f32 %v1263, %v1357
      %v1372 = vadd.f32 %v1264, %v1360
      %v1373 = vadd.f32 %v1265, %v1362
      %v1374 = vld [vmem:[%s213] sm:$0x1]
      %v1376 = vperm.slane %v1374, 0
      %v1378 = vadd.f32 %v1364, %v1376
      %v1379 = vadd.f32 %v1365, %v1376
      %v1380 = vadd.f32 %v1366, %v1376
      %v1381 = vadd.f32 %v1367, %v1376
      %v1382 = vadd.f32 %v1368, %v1376
      %v1383 = vadd.f32 %v1369, %v1376
      %v1384 = vadd.f32 %v1370, %v1376
      %v1385 = vadd.f32 %v1371, %v1376
      %v1386 = vadd.f32 %v1372, %v1376
      %v1387 = vadd.f32 %v1373, %v1376
      %v1388 = vmax.f32 %v1378, 0.0
      %v1389 = vmax.f32 %v1379, 0.0
      %v1390 = vmax.f32 %v1380, 0.0
      %v1391 = vmax.f32 %v1381, 0.0
      %v1392 = vmax.f32 %v1382, 0.0
      %v1393 = vmax.f32 %v1383, 0.0
      %v1394 = vmax.f32 %v1384, 0.0
      %v1395 = vmax.f32 %v1385, 0.0
      %v1396 = vmax.f32 %v1386, 0.0
      %v1397 = vmax.f32 %v1387, 0.0
      %v1398 = vpack.c.bf16 %v1388, %v1388
      %v1399 = vpack.c.bf16 %v1389, %v1389
      %v1400 = vpack.c.bf16 %v1390, %v1390
      %v1401 = vpack.c.bf16 %v1391, %v1391
      %v1402 = vpack.c.bf16 %v1392, %v1392
      %v1403 = vpack.c.bf16 %v1393, %v1393
      %v1404 = vpack.c.bf16 %v1394, %v1394
      %v1405 = vpack.c.bf16 %v1395, %v1395
      %v1406 = vpack.c.bf16 %v1396, %v1396
      %v1407 = vpack.c.bf16 %v1397, %v1397
      %vm1408 = vcmask 519168
      %1409 = vst.msk [vmem:[%s221] sm:$0xf] %vm1408, %v1398
      %1410 = vst.msk [vmem:[%s221 + $0x4] sm:$0xf] %vm1408, %v1399
      %1411 = vst.msk [vmem:[%s221 + $0x8] sm:$0xf] %vm1408, %v1400
      %1412 = vst.msk [vmem:[%s221 + $0xc] sm:$0xf] %vm1408, %v1401
      %1413 = vst.msk [vmem:[%s221 + $0x10] sm:$0xf] %vm1408, %v1402
      %1414 = vst.msk [vmem:[%s221 + $0x14] sm:$0xf] %vm1408, %v1403
      %1415 = vst.msk [vmem:[%s221 + $0x18] sm:$0xf] %vm1408, %v1404
      %1416 = vst.msk [vmem:[%s221 + $0x1c] sm:$0xf] %vm1408, %v1405
      %1417 = vst.msk [vmem:[%s221 + $0x20] sm:$0xf] %vm1408, %v1406
      %1418 = vst.msk [vmem:[%s221 + $0x24] sm:$0xf] %vm1408, %v1407
      %p1419 = scmp.lt.s32.totalorder %s18, 1
      %s1420 = scalar_select %p1419, %s18, 1
      %p1421 = scmp.lt.s32.totalorder %s19, 0
      %s1422 = scalar_select %p1421, %s19, 0
      %s1423 = smul.addr %s1420, 10
      %s1424 = sadd.s32 %s1422, %s1423
      %s1425 = smul.addr %s1424, 4
      %s1426 = scalar_lea.vmem %s3, %s1425
      // Predicated region
      $region33: #{forward.11} parent=31 // pred_check
        %p1427 = pneg %p124
      $region34: #{forward.11} parent=31 // pred_check_branch
        %1429 = sbr.rel (%p1427) target = $region36
      $region35: #{forward.11} parent=31 // pred_region
        _
      $region36: #{forward.11} parent=31 // pred_fallthru
        _
    $region32: #{forward.11} parent=5 // pred_fallthru
      _
    %p1430 = scmp.le.s32.totalorder 2, %s9
    // Predicated region
    $region37: #{forward.11} parent=5 // pred_check
      %p1431 = pneg %p1430
    $region38: #{forward.11} parent=5 // pred_check_branch
      %1433 = sbr.rel (%p1431) target = $region40
    $region39: #{forward.11} parent=5 // pred_region
      %s1434 = ssub.s32 %s9, 2
      // Predicated region
      $region41: #{forward.11} parent=39 // pred_check
        %p1435 = pneg %p130
      $region42: #{forward.11} parent=39 // pred_check_branch
        %1437 = sbr.rel (%p1435) target = $region44
      $region43: #{forward.11} parent=39 // pred_region
        %p1438 = scmp.lt.s32.totalorder %s20, 1
        %s1439 = scalar_select %p1438, %s20, 1
        %p1440 = scmp.lt.s32.totalorder %s21, 0
        %s1441 = scalar_select %p1440, %s21, 0
        %s1442 = smul.addr %s1439, 10
        %s1443 = sadd.s32 %s1441, %s1442
        %s1444 = smul.addr %s1443, 4
        %s1445 = scalar_lea.vmem %s3, %s1444
      $region44: #{forward.11} parent=39 // pred_fallthru
        _
    $region40: #{forward.11} parent=5 // pred_fallthru
      _
  $region6: #{forward.11} parent=0 // loop_footer
    %s13 = sadd.s32 1, %s9
  $region7: #{forward.11} parent=0 // loop_footer_branch
    %8 = sbr.rel target = $region3
  $region8: #{forward.11} parent=0 // loop_exit
    _

</llo_original>
